<compile_context>
chip_gen: v5e
topology: v5e:2x2
jax: 0.10.0
libtpu: 0.0.40
codegen_flags: <defaults>
</compile_context>

<pallas_src>
import numpy as np
import jax
import jax.numpy as jnp
from jax.experimental import pallas as pl
from jax.experimental.pallas import tpu as pltpu


# ----------------------------- in-kernel math ------------------------------ #

def _gelu_tanh(x):
    # tanh-form GELU: tanh lowers to the EUP (its own VLIW slot), relieving VALU.
    c = 0.7978845608028654  # sqrt(2/pi)
    return 0.5 * x * (1.0 + jnp.tanh(c * (x + 0.044715 * x * x * x)))


# ------------------------------- the kernel -------------------------------- #

def _galerkin_kernel(x_ref, wqkv_ref, bqkv_ref,
                     klw_ref, klb_ref, vlw_ref, vlb_ref,
                     w1_ref, b1_ref, w2_ref, b2_ref,
                     avg_ref, kvmask_ref, o_ref):
    # x block: (nb, C, N) — nb batch slabs, channels on sublanes, tokens on lanes.
    nb, C, n_tok = x_ref.shape
    nb_tok = nb * n_tok
    mm_dt = wqkv_ref.dtype                     # bf16 (or f32) MXU operand dtype

    # Lane-concatenate the batch slabs into one wide (C, nb*N) token slab.
    if nb == 1:
        x = x_ref[0]
    else:
        x = jnp.concatenate([x_ref[b] for b in range(nb)], axis=1)
    x = x.astype(jnp.float32)
    xm = x.astype(mm_dt)

    # Fused Q|K|V projection: one (3C, C) @ (C, nb*N) matmul, then static
    # sublane row slices (rows were de-interleaved to Q|K|V in the wrapper).
    qkv = jnp.dot(wqkv_ref[...], xm, preferred_element_type=jnp.float32) + bqkv_ref[...]
    q = qkv[0:C]
    k = qkv[C:2 * C]
    v = qkv[2 * C:3 * C]

    # Per-head LayerNorm over head channels via a block-diagonal averaging
    # matrix (segmented reduction on the MXU, bf16 operands, f32 accumulate).
    # k and v are lane-concatenated so mean + var cost 2 matmuls total.
    avg = avg_ref[...]                                   # (C, C) bf16, 1/headc in blocks
    kv_cat = jnp.concatenate([k, v], axis=1)             # (C, 2*nb*N)
    mu = jnp.dot(avg, kv_cat.astype(mm_dt), preferred_element_type=jnp.float32)
    cen = kv_cat - mu
    var = jnp.dot(avg, (cen * cen).astype(mm_dt), preferred_element_type=jnp.float32)
    nrm = cen * jax.lax.rsqrt(var + 1e-5)
    kn = (nrm[:, :nb_tok] * klw_ref[...] + klb_ref[...]).astype(mm_dt)
    vn = (nrm[:, nb_tok:] * vlw_ref[...] + vlb_ref[...]).astype(mm_dt)
    qm = q.astype(mm_dt)

    # Fused-head Galerkin attention, per batch (lane slices are 128-aligned):
    #   kvT[d,c]  = sum_n vn[d,n] * kn[c,n]       (kv transposed; mask symmetric)
    #   kvm       = kvT * block_diag / N           (kills cross-head terms)
    #   attn[d,n] = sum_c kvm[d,c] * q[c,n]        (plain (C,C)@(C,N) matmul)
    kvmask = kvmask_ref[...]                              # f32, 1/N folded in
    parts = []
    for b in range(nb):
        lo, hi = b * n_tok, (b + 1) * n_tok
        kvT = jax.lax.dot_general(vn[:, lo:hi], kn[:, lo:hi],
                                  (((1,), (1,)), ((), ())),
                                  preferred_element_type=jnp.float32)   # (C, C)
        kvm = (kvT * kvmask).astype(mm_dt)
        parts.append(jnp.dot(kvm, qm[:, lo:hi],
                             preferred_element_type=jnp.float32))       # (C, N)
    attn = parts[0] if nb == 1 else jnp.concatenate(parts, axis=1)

    # Residual + MLP (o_proj1 -> GELU -> o_proj2) + residual.
    ret = attn + x
    h1 = jnp.dot(w1_ref[...], ret.astype(mm_dt),
                 preferred_element_type=jnp.float32) + b1_ref[...]
    a = _gelu_tanh(h1)
    y = jnp.dot(w2_ref[...], a.astype(mm_dt),
                preferred_element_type=jnp.float32) + b2_ref[...] + x

    if nb == 1:
        o_ref[0] = y.astype(o_ref.dtype)
    else:
        for b in range(nb):
            o_ref[b] = y[:, b * n_tok:(b + 1) * n_tok].astype(o_ref.dtype)


# ------------------------------ python wrapper ------------------------------ #

def _wants_batch_grid():
    """True on chips with >1 TensorCore per device (v7x): keep a parallel batch
    grid so both cores work. Single-TC chips (v5e/v6e) prefer one wide
    invocation with batch folded onto the lane axis. Misdetection only costs
    performance, never correctness."""
    try:
        kind = jax.devices()[0].device_kind.lower()
    except Exception:
        return False
    return "v7" in kind


def galerkin_simple_attention(x_nchw, params, heads, *, matmul_dtype=jnp.bfloat16):
    B, C, H, W = x_nchw.shape
    assert C % heads == 0
    headc = C // heads
    N = H * W

    # Channels-first token slab: NCHW -> (B, C, N). Free reshape, no transpose.
    x_cn = x_nchw.reshape(B, C, N)

    # ---- layout plumbing (done once, outside the kernel) ----
    # De-interleave qkv columns from [h0q h0k h0v h1q ...] into Q|K|V row blocks
    # of a single fused (3C, C) weight.
    hh = np.arange(heads)[:, None]
    jj = np.arange(headc)[None, :]
    q_cols = (hh * 3 * headc + jj).reshape(-1)
    k_cols = q_cols + headc
    v_cols = q_cols + 2 * headc
    order = np.concatenate([q_cols, k_cols, v_cols])          # Q|K|V row order

    wqkv = jnp.asarray(params["wqkv"])                         # (C_in, 3C_out)
    bqkv = jnp.asarray(params["bqkv"]).reshape(-1)             # (3C,)
    w_qkv = jnp.asarray(wqkv[:, order].T, matmul_dtype)        # (3C, C)
    b_qkv = bqkv[order].reshape(3 * C, 1).astype(jnp.float32)

    klw = params["kln_w"].reshape(C, 1).astype(jnp.float32)
    klb = params["kln_b"].reshape(C, 1).astype(jnp.float32)
    vlw = params["vln_w"].reshape(C, 1).astype(jnp.float32)
    vlb = params["vln_b"].reshape(C, 1).astype(jnp.float32)

    w1 = jnp.asarray(params["w1"].T, matmul_dtype)             # (C_out, C_in)
    b1 = params["b1"].reshape(C, 1).astype(jnp.float32)
    w2 = jnp.asarray(params["w2"].T, matmul_dtype)
    b2 = params["b2"].reshape(C, 1).astype(jnp.float32)

    # Constant block-diagonal operators: per-head averaging (1/headc is exact
    # in bf16) and the cross-head kv mask with the 1/N Galerkin scale folded in.
    head_id = np.arange(C) // headc
    block = (head_id[:, None] == head_id[None, :]).astype(np.float32)
    avg_mat = jnp.asarray(block / float(headc), matmul_dtype)
    kv_mask = jnp.asarray(block / float(N), jnp.float32)

    consts = (w_qkv, b_qkv, klw, klb, vlw, vlb, w1, b1, w2, b2, avg_mat, kv_mask)

    # Chip-adaptive grid: parallel batch axis on multi-TC chips, single wide
    # invocation (batch folded onto lanes) on single-TC chips.
    use_grid = _wants_batch_grid() and B > 1
    if use_grid:
        grid, bpb, semantics = (B,), 1, ("parallel",)
    else:
        grid, bpb, semantics = (1,), B, ("arbitrary",)

    x_spec = pl.BlockSpec((bpb, C, N), lambda b: (b, 0, 0))

    itemsize = jnp.dtype(matmul_dtype).itemsize
    flops = 22 * B * N * C * C                         # matmul flops (qkv/LN/kv/attn/MLP)
    transcendentals = B * N * C                        # one tanh per MLP hidden element
    bytes_accessed = (2 * B * C * N * 4                # x in + y out (f32)
                      + 6 * C * C * itemsize           # wqkv(3C*C) + w1 + w2 + avg
                      + C * C * 4                      # kv_mask (f32)
                      + (3 * C + 6 * C) * 4)           # biases + LN affine
    cost = pl.CostEstimate(flops=flops, transcendentals=transcendentals,
                           bytes_accessed=bytes_accessed)

    def build(pipeline_mode=None):
        def rep(a):
            nd = a.ndim
            kw = {} if pipeline_mode is None else {"pipeline_mode": pipeline_mode}
            return pl.BlockSpec(a.shape, lambda b, _n=nd: (0,) * _n, **kw)
        return pl.pallas_call(
            _galerkin_kernel,
            out_shape=jax.ShapeDtypeStruct((B, C, N), x_cn.dtype),
            grid=grid,
            in_specs=[x_spec] + [rep(a) for a in consts],
            out_specs=x_spec,
            compiler_params=pltpu.CompilerParams(dimension_semantics=semantics),
            cost_estimate=cost,
        )

    try:
        # Constants never change across grid steps -> single-buffer their VMEM.
        out = build(pl.Buffered(1))(x_cn, *consts)
    except Exception:
        # Fallback if this JAX build rejects pipeline_mode / Buffered(1).
        out = build(None)(x_cn, *consts)

    return out.reshape(B, C, H, W)


# ------------------------------ pure-JAX ref -------------------------------- #

def _reference(x_nchw, params, heads):
    B, C, H, W = x_nchw.shape
    headc = C // heads
    N = H * W
    x = jnp.transpose(x_nchw, (0, 2, 3, 1)).reshape(B, N, C)
    qkv = x @ params["wqkv"] + params["bqkv"]
    qkv = qkv.reshape(B, N, heads, 3 * headc).transpose(0, 2, 1, 3)
    q, k, v = jnp.split(qkv, 3, axis=-1)

    def ln(t, w, b, eps=1e-5):
        mu = t.mean(-1, keepdims=True)
        var = ((t - mu) ** 2).mean(-1, keepdims=True)
        return (t - mu) / jnp.sqrt(var + eps) * w[None, :, None, :] + b[None, :, None, :]

    k = ln(k, params["kln_w"], params["kln_b"])
    v = ln(v, params["vln_w"], params["vln_b"])
    kv = jnp.einsum("bhnc,bhnd->bhcd", k, v) / N
    attn = jnp.einsum("bhnc,bhcd->bhnd", q, kv).transpose(0, 2, 1, 3).reshape(B, N, C)
    ret = attn + x
    h1 = jax.nn.gelu(ret @ params["w1"] + params["b1"], approximate=False)
    y = h1 @ params["w2"] + params["b2"] + x
    return jnp.transpose(y.reshape(B, H, W, C), (0, 3, 1, 2))


# ---------------------------------- main ------------------------------------ #

if __name__ == "__main__":
    B, C, H, W = 2, 32, 16, 16          # mid_channels=32
    heads = 4
    headc = C // heads

    key = jax.random.PRNGKey(0)
    ks = jax.random.split(key, 11)
    s = 0.1
    params = {
        "wqkv":  jax.random.normal(ks[0], (C, 3 * C), jnp.float32) * s,
        "bqkv":  jax.random.normal(ks[1], (1, 3 * C), jnp.float32) * s,
        "kln_w": 1.0 + 0.1 * jax.random.normal(ks[2], (heads, headc), jnp.float32),
        "kln_b": 0.1 * jax.random.normal(ks[3], (heads, headc), jnp.float32),
        "vln_w": 1.0 + 0.1 * jax.random.normal(ks[4], (heads, headc), jnp.float32),
        "vln_b": 0.1 * jax.random.normal(ks[5], (heads, headc), jnp.float32),
        "w1":    jax.random.normal(ks[6], (C, C), jnp.float32) * s,
        "b1":    jax.random.normal(ks[7], (1, C), jnp.float32) * s,
        "w2":    jax.random.normal(ks[8], (C, C), jnp.float32) * s,
        "b2":    jax.random.normal(ks[9], (1, C), jnp.float32) * s,
    }
    x = jax.random.normal(ks[10], (B, C, H, W), jnp.float32)

    y = jax.block_until_ready(galerkin_simple_attention(x, params, heads))
    y_ref = jax.block_until_ready(_reference(x, params, heads))

    assert y.shape == (B, C, H, W)
    max_err = float(jnp.max(jnp.abs(y - y_ref)))
    if max_err > 5e-2:
        raise AssertionError(f"kernel/reference mismatch, max abs err = {max_err}")

    print("KERNEL_OK")
</pallas_src>

<mosaic_0001>
module attributes {stable_mosaic.version = 11 : i64} {
  func.func @_galerkin_kernel(%arg0: i32, %arg1: memref<2x32x256xf32, #tpu.memory_space<vmem>>, %arg2: memref<96x32xbf16, #tpu.memory_space<vmem>>, %arg3: memref<96x1xf32, #tpu.memory_space<vmem>>, %arg4: memref<32x1xf32, #tpu.memory_space<vmem>>, %arg5: memref<32x1xf32, #tpu.memory_space<vmem>>, %arg6: memref<32x1xf32, #tpu.memory_space<vmem>>, %arg7: memref<32x1xf32, #tpu.memory_space<vmem>>, %arg8: memref<32x32xbf16, #tpu.memory_space<vmem>>, %arg9: memref<32x1xf32, #tpu.memory_space<vmem>>, %arg10: memref<32x32xbf16, #tpu.memory_space<vmem>>, %arg11: memref<32x1xf32, #tpu.memory_space<vmem>>, %arg12: memref<32x32xbf16, #tpu.memory_space<vmem>>, %arg13: memref<32x32xf32, #tpu.memory_space<vmem>>, %arg14: memref<2x32x256xf32, #tpu.memory_space<vmem>>) attributes {dimension_semantics = [#tpu.dimension_semantics<arbitrary>], iteration_bounds = array<i64: 1>, scalar_prefetch = 0 : i64, scratch_operands = 0 : i64, tpu.core_type = #tpu.core_type<tc>, window_params = [{transform_indices = @transform_0, window_bounds = array<i64: 2, 32, 256>}, {pipeline_mode = #tpu.pipeline_mode<synchronous>, transform_indices = @transform_1, window_bounds = array<i64: 96, 32>}, {pipeline_mode = #tpu.pipeline_mode<synchronous>, transform_indices = @transform_2, window_bounds = array<i64: 96, 1>}, {pipeline_mode = #tpu.pipeline_mode<synchronous>, transform_indices = @transform_3, window_bounds = array<i64: 32, 1>}, {pipeline_mode = #tpu.pipeline_mode<synchronous>, transform_indices = @transform_4, window_bounds = array<i64: 32, 1>}, {pipeline_mode = #tpu.pipeline_mode<synchronous>, transform_indices = @transform_5, window_bounds = array<i64: 32, 1>}, {pipeline_mode = #tpu.pipeline_mode<synchronous>, transform_indices = @transform_6, window_bounds = array<i64: 32, 1>}, {pipeline_mode = #tpu.pipeline_mode<synchronous>, transform_indices = @transform_7, window_bounds = array<i64: 32, 32>}, {pipeline_mode = #tpu.pipeline_mode<synchronous>, transform_indices = @transform_8, window_bounds = array<i64: 32, 1>}, {pipeline_mode = #tpu.pipeline_mode<synchronous>, transform_indices = @transform_9, window_bounds = array<i64: 32, 32>}, {pipeline_mode = #tpu.pipeline_mode<synchronous>, transform_indices = @transform_10, window_bounds = array<i64: 32, 1>}, {pipeline_mode = #tpu.pipeline_mode<synchronous>, transform_indices = @transform_11, window_bounds = array<i64: 32, 32>}, {pipeline_mode = #tpu.pipeline_mode<synchronous>, transform_indices = @transform_12, window_bounds = array<i64: 32, 32>}, {transform_indices = @transform_13, window_bounds = array<i64: 2, 32, 256>}]} {
    %c0 = arith.constant 0 : index
    %c0_0 = arith.constant 0 : index
    %c0_1 = arith.constant 0 : index
    %0 = vector.load %arg1[%c0, %c0_0, %c0_1] : memref<2x32x256xf32, #tpu.memory_space<vmem>>, vector<1x32x256xf32>
    %1 = vector.shape_cast %0 : vector<1x32x256xf32> to vector<32x256xf32>
    %c1 = arith.constant 1 : index
    %c0_2 = arith.constant 0 : index
    %c0_3 = arith.constant 0 : index
    %2 = vector.load %arg1[%c1, %c0_2, %c0_3] : memref<2x32x256xf32, #tpu.memory_space<vmem>>, vector<1x32x256xf32>
    %3 = vector.shape_cast %2 : vector<1x32x256xf32> to vector<32x256xf32>
    %4 = tpu.concatenate %1, %3 in 1 : vector<32x256xf32>, vector<32x256xf32> -> vector<32x512xf32>
    %5 = arith.truncf %4 : vector<32x512xf32> to vector<32x512xbf16>
    %c0_4 = arith.constant 0 : index
    %c0_5 = arith.constant 0 : index
    %6 = vector.load %arg2[%c0_4, %c0_5] : memref<96x32xbf16, #tpu.memory_space<vmem>>, vector<96x32xbf16>
    %cst = arith.constant dense<0.000000e+00> : vector<96x512xf32>
    %7 = tpu.matmul %6, %5, %cst {dimension_numbers = #tpu.dot_dimension_numbers<[1], [0], [0], [1], [0, 0, 1, 1], [], []>} : vector<96x32xbf16>, vector<32x512xbf16>, vector<96x512xf32> -> vector<96x512xf32>
    %c0_6 = arith.constant 0 : index
    %c0_7 = arith.constant 0 : index
    %8 = vector.load %arg3[%c0_6, %c0_7] : memref<96x1xf32, #tpu.memory_space<vmem>>, vector<96x1xf32>
    %9 = vector.broadcast %8 : vector<96x1xf32> to vector<96x512xf32>
    %10 = arith.addf %7, %9 : vector<96x512xf32>
    %11 = vector.extract_strided_slice %10 {offsets = [0, 0], sizes = [32, 512], strides = [1, 1]} : vector<96x512xf32> to vector<32x512xf32>
    %12 = vector.extract_strided_slice %10 {offsets = [32, 0], sizes = [32, 512], strides = [1, 1]} : vector<96x512xf32> to vector<32x512xf32>
    %13 = vector.extract_strided_slice %10 {offsets = [64, 0], sizes = [32, 512], strides = [1, 1]} : vector<96x512xf32> to vector<32x512xf32>
    %c0_8 = arith.constant 0 : index
    %c0_9 = arith.constant 0 : index
    %14 = vector.load %arg12[%c0_8, %c0_9] : memref<32x32xbf16, #tpu.memory_space<vmem>>, vector<32x32xbf16>
    %15 = tpu.concatenate %12, %13 in 1 : vector<32x512xf32>, vector<32x512xf32> -> vector<32x1024xf32>
    %16 = arith.truncf %15 : vector<32x1024xf32> to vector<32x1024xbf16>
    %cst_10 = arith.constant dense<0.000000e+00> : vector<32x1024xf32>
    %17 = tpu.matmul %14, %16, %cst_10 {dimension_numbers = #tpu.dot_dimension_numbers<[1], [0], [0], [1], [0, 0, 1, 1], [], []>} : vector<32x32xbf16>, vector<32x1024xbf16>, vector<32x1024xf32> -> vector<32x1024xf32>
    %18 = arith.subf %15, %17 : vector<32x1024xf32>
    %19 = arith.mulf %18, %18 : vector<32x1024xf32>
    %20 = arith.truncf %19 : vector<32x1024xf32> to vector<32x1024xbf16>
    %cst_11 = arith.constant dense<0.000000e+00> : vector<32x1024xf32>
    %21 = tpu.matmul %14, %20, %cst_11 {dimension_numbers = #tpu.dot_dimension_numbers<[1], [0], [0], [1], [0, 0, 1, 1], [], []>} : vector<32x32xbf16>, vector<32x1024xbf16>, vector<32x1024xf32> -> vector<32x1024xf32>
    %cst_12 = arith.constant 9.99999974E-6 : f32
    %22 = vector.broadcast %cst_12 : f32 to vector<32x1024xf32>
    %23 = arith.addf %21, %22 : vector<32x1024xf32>
    %24 = math.rsqrt %23 : vector<32x1024xf32>
    %25 = arith.mulf %18, %24 : vector<32x1024xf32>
    %26 = vector.extract_strided_slice %25 {offsets = [0, 0], sizes = [32, 512], strides = [1, 1]} : vector<32x1024xf32> to vector<32x512xf32>
    %c0_13 = arith.constant 0 : index
    %c0_14 = arith.constant 0 : index
    %27 = vector.load %arg4[%c0_13, %c0_14] : memref<32x1xf32, #tpu.memory_space<vmem>>, vector<32x1xf32>
    %28 = vector.broadcast %27 : vector<32x1xf32> to vector<32x512xf32>
    %29 = arith.mulf %26, %28 : vector<32x512xf32>
    %c0_15 = arith.constant 0 : index
    %c0_16 = arith.constant 0 : index
    %30 = vector.load %arg5[%c0_15, %c0_16] : memref<32x1xf32, #tpu.memory_space<vmem>>, vector<32x1xf32>
    %31 = vector.broadcast %30 : vector<32x1xf32> to vector<32x512xf32>
    %32 = arith.addf %29, %31 : vector<32x512xf32>
    %33 = arith.truncf %32 : vector<32x512xf32> to vector<32x512xbf16>
    %34 = vector.extract_strided_slice %25 {offsets = [0, 512], sizes = [32, 512], strides = [1, 1]} : vector<32x1024xf32> to vector<32x512xf32>
    %c0_17 = arith.constant 0 : index
    %c0_18 = arith.constant 0 : index
    %35 = vector.load %arg6[%c0_17, %c0_18] : memref<32x1xf32, #tpu.memory_space<vmem>>, vector<32x1xf32>
    %36 = vector.broadcast %35 : vector<32x1xf32> to vector<32x512xf32>
    %37 = arith.mulf %34, %36 : vector<32x512xf32>
    %c0_19 = arith.constant 0 : index
    %c0_20 = arith.constant 0 : index
    %38 = vector.load %arg7[%c0_19, %c0_20] : memref<32x1xf32, #tpu.memory_space<vmem>>, vector<32x1xf32>
    %39 = vector.broadcast %38 : vector<32x1xf32> to vector<32x512xf32>
    %40 = arith.addf %37, %39 : vector<32x512xf32>
    %41 = arith.truncf %40 : vector<32x512xf32> to vector<32x512xbf16>
    %42 = arith.truncf %11 : vector<32x512xf32> to vector<32x512xbf16>
    %c0_21 = arith.constant 0 : index
    %c0_22 = arith.constant 0 : index
    %43 = vector.load %arg13[%c0_21, %c0_22] : memref<32x32xf32, #tpu.memory_space<vmem>>, vector<32x32xf32>
    %44 = vector.extract_strided_slice %41 {offsets = [0, 0], sizes = [32, 256], strides = [1, 1]} : vector<32x512xbf16> to vector<32x256xbf16>
    %45 = vector.extract_strided_slice %33 {offsets = [0, 0], sizes = [32, 256], strides = [1, 1]} : vector<32x512xbf16> to vector<32x256xbf16>
    %cst_23 = arith.constant dense<0.000000e+00> : vector<32x32xf32>
    %46 = tpu.matmul %44, %45, %cst_23 {dimension_numbers = #tpu.dot_dimension_numbers<[1], [1], [0], [0], [0, 0, 1, 0], [], []>} : vector<32x256xbf16>, vector<32x256xbf16>, vector<32x32xf32> -> vector<32x32xf32>
    %47 = arith.mulf %46, %43 : vector<32x32xf32>
    %48 = arith.truncf %47 : vector<32x32xf32> to vector<32x32xbf16>
    %49 = vector.extract_strided_slice %42 {offsets = [0, 0], sizes = [32, 256], strides = [1, 1]} : vector<32x512xbf16> to vector<32x256xbf16>
    %cst_24 = arith.constant dense<0.000000e+00> : vector<32x256xf32>
    %50 = tpu.matmul %48, %49, %cst_24 {dimension_numbers = #tpu.dot_dimension_numbers<[1], [0], [0], [1], [0, 0, 1, 1], [], []>} : vector<32x32xbf16>, vector<32x256xbf16>, vector<32x256xf32> -> vector<32x256xf32>
    %51 = vector.extract_strided_slice %41 {offsets = [0, 256], sizes = [32, 256], strides = [1, 1]} : vector<32x512xbf16> to vector<32x256xbf16>
    %52 = vector.extract_strided_slice %33 {offsets = [0, 256], sizes = [32, 256], strides = [1, 1]} : vector<32x512xbf16> to vector<32x256xbf16>
    %cst_25 = arith.constant dense<0.000000e+00> : vector<32x32xf32>
    %53 = tpu.matmul %51, %52, %cst_25 {dimension_numbers = #tpu.dot_dimension_numbers<[1], [1], [0], [0], [0, 0, 1, 0], [], []>} : vector<32x256xbf16>, vector<32x256xbf16>, vector<32x32xf32> -> vector<32x32xf32>
    %54 = arith.mulf %53, %43 : vector<32x32xf32>
    %55 = arith.truncf %54 : vector<32x32xf32> to vector<32x32xbf16>
    %56 = vector.extract_strided_slice %42 {offsets = [0, 256], sizes = [32, 256], strides = [1, 1]} : vector<32x512xbf16> to vector<32x256xbf16>
    %cst_26 = arith.constant dense<0.000000e+00> : vector<32x256xf32>
    %57 = tpu.matmul %55, %56, %cst_26 {dimension_numbers = #tpu.dot_dimension_numbers<[1], [0], [0], [1], [0, 0, 1, 1], [], []>} : vector<32x32xbf16>, vector<32x256xbf16>, vector<32x256xf32> -> vector<32x256xf32>
    %58 = tpu.concatenate %50, %57 in 1 : vector<32x256xf32>, vector<32x256xf32> -> vector<32x512xf32>
    %59 = arith.addf %58, %4 : vector<32x512xf32>
    %c0_27 = arith.constant 0 : index
    %c0_28 = arith.constant 0 : index
    %60 = vector.load %arg8[%c0_27, %c0_28] : memref<32x32xbf16, #tpu.memory_space<vmem>>, vector<32x32xbf16>
    %61 = arith.truncf %59 : vector<32x512xf32> to vector<32x512xbf16>
    %cst_29 = arith.constant dense<0.000000e+00> : vector<32x512xf32>
    %62 = tpu.matmul %60, %61, %cst_29 {dimension_numbers = #tpu.dot_dimension_numbers<[1], [0], [0], [1], [0, 0, 1, 1], [], []>} : vector<32x32xbf16>, vector<32x512xbf16>, vector<32x512xf32> -> vector<32x512xf32>
    %c0_30 = arith.constant 0 : index
    %c0_31 = arith.constant 0 : index
    %63 = vector.load %arg9[%c0_30, %c0_31] : memref<32x1xf32, #tpu.memory_space<vmem>>, vector<32x1xf32>
    %64 = vector.broadcast %63 : vector<32x1xf32> to vector<32x512xf32>
    %65 = arith.addf %62, %64 : vector<32x512xf32>
    %cst_32 = arith.constant 5.000000e-01 : f32
    %66 = vector.broadcast %cst_32 : f32 to vector<32x512xf32>
    %67 = arith.mulf %66, %65 : vector<32x512xf32>
    %cst_33 = arith.constant 4.471500e-02 : f32
    %68 = vector.broadcast %cst_33 : f32 to vector<32x512xf32>
    %69 = arith.mulf %68, %65 : vector<32x512xf32>
    %70 = arith.mulf %69, %65 : vector<32x512xf32>
    %71 = arith.mulf %70, %65 : vector<32x512xf32>
    %72 = arith.addf %65, %71 : vector<32x512xf32>
    %cst_34 = arith.constant 0.797884583 : f32
    %73 = vector.broadcast %cst_34 : f32 to vector<32x512xf32>
    %74 = arith.mulf %73, %72 : vector<32x512xf32>
    %75 = math.tanh %74 : vector<32x512xf32>
    %cst_35 = arith.constant 1.000000e+00 : f32
    %76 = vector.broadcast %cst_35 : f32 to vector<32x512xf32>
    %77 = arith.addf %76, %75 : vector<32x512xf32>
    %78 = arith.mulf %67, %77 : vector<32x512xf32>
    %c0_36 = arith.constant 0 : index
    %c0_37 = arith.constant 0 : index
    %79 = vector.load %arg10[%c0_36, %c0_37] : memref<32x32xbf16, #tpu.memory_space<vmem>>, vector<32x32xbf16>
    %80 = arith.truncf %78 : vector<32x512xf32> to vector<32x512xbf16>
    %cst_38 = arith.constant dense<0.000000e+00> : vector<32x512xf32>
    %81 = tpu.matmul %79, %80, %cst_38 {dimension_numbers = #tpu.dot_dimension_numbers<[1], [0], [0], [1], [0, 0, 1, 1], [], []>} : vector<32x32xbf16>, vector<32x512xbf16>, vector<32x512xf32> -> vector<32x512xf32>
    %c0_39 = arith.constant 0 : index
    %c0_40 = arith.constant 0 : index
    %82 = vector.load %arg11[%c0_39, %c0_40] : memref<32x1xf32, #tpu.memory_space<vmem>>, vector<32x1xf32>
    %83 = vector.broadcast %82 : vector<32x1xf32> to vector<32x512xf32>
    %84 = arith.addf %81, %83 : vector<32x512xf32>
    %85 = arith.addf %84, %4 : vector<32x512xf32>
    %86 = vector.extract_strided_slice %85 {offsets = [0, 0], sizes = [32, 256], strides = [1, 1]} : vector<32x512xf32> to vector<32x256xf32>
    %c0_41 = arith.constant 0 : index
    %c0_42 = arith.constant 0 : index
    %c0_43 = arith.constant 0 : index
    %87 = vector.load %arg14[%c0_41, %c0_42, %c0_43] : memref<2x32x256xf32, #tpu.memory_space<vmem>>, vector<1x32x256xf32>
    %88 = vector.shape_cast %87 : vector<1x32x256xf32> to vector<32x256xf32>
    %89 = vector.shape_cast %86 : vector<32x256xf32> to vector<1x32x256xf32>
    tpu.vector_store %arg14[%c0_41, %c0_42, %c0_43], %89 {strides = array<i32>} : memref<2x32x256xf32, #tpu.memory_space<vmem>>, vector<1x32x256xf32>,
    %90 = vector.extract_strided_slice %85 {offsets = [0, 256], sizes = [32, 256], strides = [1, 1]} : vector<32x512xf32> to vector<32x256xf32>
    %c1_44 = arith.constant 1 : index
    %c0_45 = arith.constant 0 : index
    %c0_46 = arith.constant 0 : index
    %91 = vector.load %arg14[%c1_44, %c0_45, %c0_46] : memref<2x32x256xf32, #tpu.memory_space<vmem>>, vector<1x32x256xf32>
    %92 = vector.shape_cast %91 : vector<1x32x256xf32> to vector<32x256xf32>
    %93 = vector.shape_cast %90 : vector<32x256xf32> to vector<1x32x256xf32>
    tpu.vector_store %arg14[%c1_44, %c0_45, %c0_46], %93 {strides = array<i32>} : memref<2x32x256xf32, #tpu.memory_space<vmem>>, vector<1x32x256xf32>,
    return
  }
  func.func @transform_0(%arg0: i32) -> (i32, i32, i32) {
    %c0_i32 = arith.constant 0 : i32
    %c0_i32_0 = arith.constant 0 : i32
    %c0_i32_1 = arith.constant 0 : i32
    return %arg0, %c0_i32, %c0_i32_0 : i32, i32, i32
  }
  func.func @transform_1(%arg0: i32) -> (i32, i32) {
    %c0_i32 = arith.constant 0 : i32
    %c0_i32_0 = arith.constant 0 : i32
    %c0_i32_1 = arith.constant 0 : i32
    return %c0_i32, %c0_i32_0 : i32, i32
  }
  func.func @transform_2(%arg0: i32) -> (i32, i32) {
    %c0_i32 = arith.constant 0 : i32
    %c0_i32_0 = arith.constant 0 : i32
    %c0_i32_1 = arith.constant 0 : i32
    return %c0_i32, %c0_i32_0 : i32, i32
  }
  func.func @transform_3(%arg0: i32) -> (i32, i32) {
    %c0_i32 = arith.constant 0 : i32
    %c0_i32_0 = arith.constant 0 : i32
    %c0_i32_1 = arith.constant 0 : i32
    return %c0_i32, %c0_i32_0 : i32, i32
  }
  func.func @transform_4(%arg0: i32) -> (i32, i32) {
    %c0_i32 = arith.constant 0 : i32
    %c0_i32_0 = arith.constant 0 : i32
    %c0_i32_1 = arith.constant 0 : i32
    return %c0_i32, %c0_i32_0 : i32, i32
  }
  func.func @transform_5(%arg0: i32) -> (i32, i32) {
    %c0_i32 = arith.constant 0 : i32
    %c0_i32_0 = arith.constant 0 : i32
    %c0_i32_1 = arith.constant 0 : i32
    return %c0_i32, %c0_i32_0 : i32, i32
  }
  func.func @transform_6(%arg0: i32) -> (i32, i32) {
    %c0_i32 = arith.constant 0 : i32
    %c0_i32_0 = arith.constant 0 : i32
    %c0_i32_1 = arith.constant 0 : i32
    return %c0_i32, %c0_i32_0 : i32, i32
  }
  func.func @transform_7(%arg0: i32) -> (i32, i32) {
    %c0_i32 = arith.constant 0 : i32
    %c0_i32_0 = arith.constant 0 : i32
    %c0_i32_1 = arith.constant 0 : i32
    return %c0_i32, %c0_i32_0 : i32, i32
  }
  func.func @transform_8(%arg0: i32) -> (i32, i32) {
    %c0_i32 = arith.constant 0 : i32
    %c0_i32_0 = arith.constant 0 : i32
    %c0_i32_1 = arith.constant 0 : i32
    return %c0_i32, %c0_i32_0 : i32, i32
  }
  func.func @transform_9(%arg0: i32) -> (i32, i32) {
    %c0_i32 = arith.constant 0 : i32
    %c0_i32_0 = arith.constant 0 : i32
    %c0_i32_1 = arith.constant 0 : i32
    return %c0_i32, %c0_i32_0 : i32, i32
  }
  func.func @transform_10(%arg0: i32) -> (i32, i32) {
    %c0_i32 = arith.constant 0 : i32
    %c0_i32_0 = arith.constant 0 : i32
    %c0_i32_1 = arith.constant 0 : i32
    return %c0_i32, %c0_i32_0 : i32, i32
  }
  func.func @transform_11(%arg0: i32) -> (i32, i32) {
    %c0_i32 = arith.constant 0 : i32
    %c0_i32_0 = arith.constant 0 : i32
    %c0_i32_1 = arith.constant 0 : i32
    return %c0_i32, %c0_i32_0 : i32, i32
  }
  func.func @transform_12(%arg0: i32) -> (i32, i32) {
    %c0_i32 = arith.constant 0 : i32
    %c0_i32_0 = arith.constant 0 : i32
    %c0_i32_1 = arith.constant 0 : i32
    return %c0_i32, %c0_i32_0 : i32, i32
  }
  func.func @transform_13(%arg0: i32) -> (i32, i32, i32) {
    %c0_i32 = arith.constant 0 : i32
    %c0_i32_0 = arith.constant 0 : i32
    %c0_i32_1 = arith.constant 0 : i32
    return %arg0, %c0_i32, %c0_i32_0 : i32, i32, i32
  }
}

module attributes {stable_mosaic.version = 11 : i64} {
  func.func @_galerkin_kernel(%arg0: i32, %arg1: memref<2x32x256xf32, #tpu.memory_space<vmem>>, %arg2: memref<96x32xbf16, #tpu.memory_space<vmem>>, %arg3: memref<96x1xf32, #tpu.memory_space<vmem>>, %arg4: memref<32x1xf32, #tpu.memory_space<vmem>>, %arg5: memref<32x1xf32, #tpu.memory_space<vmem>>, %arg6: memref<32x1xf32, #tpu.memory_space<vmem>>, %arg7: memref<32x1xf32, #tpu.memory_space<vmem>>, %arg8: memref<32x32xbf16, #tpu.memory_space<vmem>>, %arg9: memref<32x1xf32, #tpu.memory_space<vmem>>, %arg10: memref<32x32xbf16, #tpu.memory_space<vmem>>, %arg11: memref<32x1xf32, #tpu.memory_space<vmem>>, %arg12: memref<32x32xbf16, #tpu.memory_space<vmem>>, %arg13: memref<32x32xf32, #tpu.memory_space<vmem>>, %arg14: memref<2x32x256xf32, #tpu.memory_space<vmem>>) attributes {dimension_semantics = [#tpu.dimension_semantics<arbitrary>], iteration_bounds = array<i64: 1>, scalar_prefetch = 0 : i64, scratch_operands = 0 : i64, tpu.core_type = #tpu.core_type<tc>, window_params = [{transform_indices = @transform_0, window_bounds = array<i64: 2, 32, 256>}, {pipeline_mode = #tpu.pipeline_mode<synchronous>, transform_indices = @transform_1, window_bounds = array<i64: 96, 32>}, {pipeline_mode = #tpu.pipeline_mode<synchronous>, transform_indices = @transform_2, window_bounds = array<i64: 96, 1>}, {pipeline_mode = #tpu.pipeline_mode<synchronous>, transform_indices = @transform_3, window_bounds = array<i64: 32, 1>}, {pipeline_mode = #tpu.pipeline_mode<synchronous>, transform_indices = @transform_4, window_bounds = array<i64: 32, 1>}, {pipeline_mode = #tpu.pipeline_mode<synchronous>, transform_indices = @transform_5, window_bounds = array<i64: 32, 1>}, {pipeline_mode = #tpu.pipeline_mode<synchronous>, transform_indices = @transform_6, window_bounds = array<i64: 32, 1>}, {pipeline_mode = #tpu.pipeline_mode<synchronous>, transform_indices = @transform_7, window_bounds = array<i64: 32, 32>}, {pipeline_mode = #tpu.pipeline_mode<synchronous>, transform_indices = @transform_8, window_bounds = array<i64: 32, 1>}, {pipeline_mode = #tpu.pipeline_mode<synchronous>, transform_indices = @transform_9, window_bounds = array<i64: 32, 32>}, {pipeline_mode = #tpu.pipeline_mode<synchronous>, transform_indices = @transform_10, window_bounds = array<i64: 32, 1>}, {pipeline_mode = #tpu.pipeline_mode<synchronous>, transform_indices = @transform_11, window_bounds = array<i64: 32, 32>}, {pipeline_mode = #tpu.pipeline_mode<synchronous>, transform_indices = @transform_12, window_bounds = array<i64: 32, 32>}, {transform_indices = @transform_13, window_bounds = array<i64: 2, 32, 256>}]} {
    %c0 = arith.constant 0 : index
    %c0_0 = arith.constant 0 : index
    %c0_1 = arith.constant 0 : index
    %0 = vector.load %arg1[%c0, %c0_0, %c0_1] : memref<2x32x256xf32, #tpu.memory_space<vmem>>, vector<1x32x256xf32>
    %1 = vector.shape_cast %0 : vector<1x32x256xf32> to vector<32x256xf32>
    %c1 = arith.constant 1 : index
    %c0_2 = arith.constant 0 : index
    %c0_3 = arith.constant 0 : index
    %2 = vector.load %arg1[%c1, %c0_2, %c0_3] : memref<2x32x256xf32, #tpu.memory_space<vmem>>, vector<1x32x256xf32>
    %3 = vector.shape_cast %2 : vector<1x32x256xf32> to vector<32x256xf32>
    %4 = tpu.concatenate %1, %3 in 1 : vector<32x256xf32>, vector<32x256xf32> -> vector<32x512xf32>
    %5 = arith.truncf %4 : vector<32x512xf32> to vector<32x512xbf16>
    %c0_4 = arith.constant 0 : index
    %c0_5 = arith.constant 0 : index
    %6 = vector.load %arg2[%c0_4, %c0_5] : memref<96x32xbf16, #tpu.memory_space<vmem>>, vector<96x32xbf16>
    %cst = arith.constant dense<0.000000e+00> : vector<96x512xf32>
    %7 = tpu.matmul %6, %5, %cst {dimension_numbers = #tpu.dot_dimension_numbers<[1], [0], [0], [1], [0, 0, 1, 1], [], []>} : vector<96x32xbf16>, vector<32x512xbf16>, vector<96x512xf32> -> vector<96x512xf32>
    %c0_6 = arith.constant 0 : index
    %c0_7 = arith.constant 0 : index
    %8 = vector.load %arg3[%c0_6, %c0_7] : memref<96x1xf32, #tpu.memory_space<vmem>>, vector<96x1xf32>
    %9 = vector.broadcast %8 : vector<96x1xf32> to vector<96x512xf32>
    %10 = arith.addf %7, %9 : vector<96x512xf32>
    %11 = vector.extract_strided_slice %10 {offsets = [0, 0], sizes = [32, 512], strides = [1, 1]} : vector<96x512xf32> to vector<32x512xf32>
    %12 = vector.extract_strided_slice %10 {offsets = [32, 0], sizes = [32, 512], strides = [1, 1]} : vector<96x512xf32> to vector<32x512xf32>
    %13 = vector.extract_strided_slice %10 {offsets = [64, 0], sizes = [32, 512], strides = [1, 1]} : vector<96x512xf32> to vector<32x512xf32>
    %c0_8 = arith.constant 0 : index
    %c0_9 = arith.constant 0 : index
    %14 = vector.load %arg12[%c0_8, %c0_9] : memref<32x32xbf16, #tpu.memory_space<vmem>>, vector<32x32xbf16>
    %15 = tpu.concatenate %12, %13 in 1 : vector<32x512xf32>, vector<32x512xf32> -> vector<32x1024xf32>
    %16 = arith.truncf %15 : vector<32x1024xf32> to vector<32x1024xbf16>
    %cst_10 = arith.constant dense<0.000000e+00> : vector<32x1024xf32>
    %17 = tpu.matmul %14, %16, %cst_10 {dimension_numbers = #tpu.dot_dimension_numbers<[1], [0], [0], [1], [0, 0, 1, 1], [], []>} : vector<32x32xbf16>, vector<32x1024xbf16>, vector<32x1024xf32> -> vector<32x1024xf32>
    %18 = arith.subf %15, %17 : vector<32x1024xf32>
    %19 = arith.mulf %18, %18 : vector<32x1024xf32>
    %20 = arith.truncf %19 : vector<32x1024xf32> to vector<32x1024xbf16>
    %cst_11 = arith.constant dense<0.000000e+00> : vector<32x1024xf32>
    %21 = tpu.matmul %14, %20, %cst_11 {dimension_numbers = #tpu.dot_dimension_numbers<[1], [0], [0], [1], [0, 0, 1, 1], [], []>} : vector<32x32xbf16>, vector<32x1024xbf16>, vector<32x1024xf32> -> vector<32x1024xf32>
    %cst_12 = arith.constant 9.99999974E-6 : f32
    %22 = vector.broadcast %cst_12 : f32 to vector<32x1024xf32>
    %23 = arith.addf %21, %22 : vector<32x1024xf32>
    %24 = math.rsqrt %23 : vector<32x1024xf32>
    %25 = arith.mulf %18, %24 : vector<32x1024xf32>
    %26 = vector.extract_strided_slice %25 {offsets = [0, 0], sizes = [32, 512], strides = [1, 1]} : vector<32x1024xf32> to vector<32x512xf32>
    %c0_13 = arith.constant 0 : index
    %c0_14 = arith.constant 0 : index
    %27 = vector.load %arg4[%c0_13, %c0_14] : memref<32x1xf32, #tpu.memory_space<vmem>>, vector<32x1xf32>
    %28 = vector.broadcast %27 : vector<32x1xf32> to vector<32x512xf32>
    %29 = arith.mulf %26, %28 : vector<32x512xf32>
    %c0_15 = arith.constant 0 : index
    %c0_16 = arith.constant 0 : index
    %30 = vector.load %arg5[%c0_15, %c0_16] : memref<32x1xf32, #tpu.memory_space<vmem>>, vector<32x1xf32>
    %31 = vector.broadcast %30 : vector<32x1xf32> to vector<32x512xf32>
    %32 = arith.addf %29, %31 : vector<32x512xf32>
    %33 = arith.truncf %32 : vector<32x512xf32> to vector<32x512xbf16>
    %34 = vector.extract_strided_slice %25 {offsets = [0, 512], sizes = [32, 512], strides = [1, 1]} : vector<32x1024xf32> to vector<32x512xf32>
    %c0_17 = arith.constant 0 : index
    %c0_18 = arith.constant 0 : index
    %35 = vector.load %arg6[%c0_17, %c0_18] : memref<32x1xf32, #tpu.memory_space<vmem>>, vector<32x1xf32>
    %36 = vector.broadcast %35 : vector<32x1xf32> to vector<32x512xf32>
    %37 = arith.mulf %34, %36 : vector<32x512xf32>
    %c0_19 = arith.constant 0 : index
    %c0_20 = arith.constant 0 : index
    %38 = vector.load %arg7[%c0_19, %c0_20] : memref<32x1xf32, #tpu.memory_space<vmem>>, vector<32x1xf32>
    %39 = vector.broadcast %38 : vector<32x1xf32> to vector<32x512xf32>
    %40 = arith.addf %37, %39 : vector<32x512xf32>
    %41 = arith.truncf %40 : vector<32x512xf32> to vector<32x512xbf16>
    %42 = arith.truncf %11 : vector<32x512xf32> to vector<32x512xbf16>
    %c0_21 = arith.constant 0 : index
    %c0_22 = arith.constant 0 : index
    %43 = vector.load %arg13[%c0_21, %c0_22] : memref<32x32xf32, #tpu.memory_space<vmem>>, vector<32x32xf32>
    %44 = vector.extract_strided_slice %41 {offsets = [0, 0], sizes = [32, 256], strides = [1, 1]} : vector<32x512xbf16> to vector<32x256xbf16>
    %45 = vector.extract_strided_slice %33 {offsets = [0, 0], sizes = [32, 256], strides = [1, 1]} : vector<32x512xbf16> to vector<32x256xbf16>
    %cst_23 = arith.constant dense<0.000000e+00> : vector<32x32xf32>
    %46 = tpu.matmul %44, %45, %cst_23 {dimension_numbers = #tpu.dot_dimension_numbers<[1], [1], [0], [0], [0, 0, 1, 0], [], []>} : vector<32x256xbf16>, vector<32x256xbf16>, vector<32x32xf32> -> vector<32x32xf32>
    %47 = arith.mulf %46, %43 : vector<32x32xf32>
    %48 = arith.truncf %47 : vector<32x32xf32> to vector<32x32xbf16>
    %49 = vector.extract_strided_slice %42 {offsets = [0, 0], sizes = [32, 256], strides = [1, 1]} : vector<32x512xbf16> to vector<32x256xbf16>
    %cst_24 = arith.constant dense<0.000000e+00> : vector<32x256xf32>
    %50 = tpu.matmul %48, %49, %cst_24 {dimension_numbers = #tpu.dot_dimension_numbers<[1], [0], [0], [1], [0, 0, 1, 1], [], []>} : vector<32x32xbf16>, vector<32x256xbf16>, vector<32x256xf32> -> vector<32x256xf32>
    %51 = vector.extract_strided_slice %41 {offsets = [0, 256], sizes = [32, 256], strides = [1, 1]} : vector<32x512xbf16> to vector<32x256xbf16>
    %52 = vector.extract_strided_slice %33 {offsets = [0, 256], sizes = [32, 256], strides = [1, 1]} : vector<32x512xbf16> to vector<32x256xbf16>
    %cst_25 = arith.constant dense<0.000000e+00> : vector<32x32xf32>
    %53 = tpu.matmul %51, %52, %cst_25 {dimension_numbers = #tpu.dot_dimension_numbers<[1], [1], [0], [0], [0, 0, 1, 0], [], []>} : vector<32x256xbf16>, vector<32x256xbf16>, vector<32x32xf32> -> vector<32x32xf32>
    %54 = arith.mulf %53, %43 : vector<32x32xf32>
    %55 = arith.truncf %54 : vector<32x32xf32> to vector<32x32xbf16>
    %56 = vector.extract_strided_slice %42 {offsets = [0, 256], sizes = [32, 256], strides = [1, 1]} : vector<32x512xbf16> to vector<32x256xbf16>
    %cst_26 = arith.constant dense<0.000000e+00> : vector<32x256xf32>
    %57 = tpu.matmul %55, %56, %cst_26 {dimension_numbers = #tpu.dot_dimension_numbers<[1], [0], [0], [1], [0, 0, 1, 1], [], []>} : vector<32x32xbf16>, vector<32x256xbf16>, vector<32x256xf32> -> vector<32x256xf32>
    %58 = tpu.concatenate %50, %57 in 1 : vector<32x256xf32>, vector<32x256xf32> -> vector<32x512xf32>
    %59 = arith.addf %58, %4 : vector<32x512xf32>
    %c0_27 = arith.constant 0 : index
    %c0_28 = arith.constant 0 : index
    %60 = vector.load %arg8[%c0_27, %c0_28] : memref<32x32xbf16, #tpu.memory_space<vmem>>, vector<32x32xbf16>
    %61 = arith.truncf %59 : vector<32x512xf32> to vector<32x512xbf16>
    %cst_29 = arith.constant dense<0.000000e+00> : vector<32x512xf32>
    %62 = tpu.matmul %60, %61, %cst_29 {dimension_numbers = #tpu.dot_dimension_numbers<[1], [0], [0], [1], [0, 0, 1, 1], [], []>} : vector<32x32xbf16>, vector<32x512xbf16>, vector<32x512xf32> -> vector<32x512xf32>
    %c0_30 = arith.constant 0 : index
    %c0_31 = arith.constant 0 : index
    %63 = vector.load %arg9[%c0_30, %c0_31] : memref<32x1xf32, #tpu.memory_space<vmem>>, vector<32x1xf32>
    %64 = vector.broadcast %63 : vector<32x1xf32> to vector<32x512xf32>
    %65 = arith.addf %62, %64 : vector<32x512xf32>
    %cst_32 = arith.constant 5.000000e-01 : f32
    %66 = vector.broadcast %cst_32 : f32 to vector<32x512xf32>
    %67 = arith.mulf %66, %65 : vector<32x512xf32>
    %cst_33 = arith.constant 4.471500e-02 : f32
    %68 = vector.broadcast %cst_33 : f32 to vector<32x512xf32>
    %69 = arith.mulf %68, %65 : vector<32x512xf32>
    %70 = arith.mulf %69, %65 : vector<32x512xf32>
    %71 = arith.mulf %70, %65 : vector<32x512xf32>
    %72 = arith.addf %65, %71 : vector<32x512xf32>
    %cst_34 = arith.constant 0.797884583 : f32
    %73 = vector.broadcast %cst_34 : f32 to vector<32x512xf32>
    %74 = arith.mulf %73, %72 : vector<32x512xf32>
    %75 = math.tanh %74 : vector<32x512xf32>
    %cst_35 = arith.constant 1.000000e+00 : f32
    %76 = vector.broadcast %cst_35 : f32 to vector<32x512xf32>
    %77 = arith.addf %76, %75 : vector<32x512xf32>
    %78 = arith.mulf %67, %77 : vector<32x512xf32>
    %c0_36 = arith.constant 0 : index
    %c0_37 = arith.constant 0 : index
    %79 = vector.load %arg10[%c0_36, %c0_37] : memref<32x32xbf16, #tpu.memory_space<vmem>>, vector<32x32xbf16>
    %80 = arith.truncf %78 : vector<32x512xf32> to vector<32x512xbf16>
    %cst_38 = arith.constant dense<0.000000e+00> : vector<32x512xf32>
    %81 = tpu.matmul %79, %80, %cst_38 {dimension_numbers = #tpu.dot_dimension_numbers<[1], [0], [0], [1], [0, 0, 1, 1], [], []>} : vector<32x32xbf16>, vector<32x512xbf16>, vector<32x512xf32> -> vector<32x512xf32>
    %c0_39 = arith.constant 0 : index
    %c0_40 = arith.constant 0 : index
    %82 = vector.load %arg11[%c0_39, %c0_40] : memref<32x1xf32, #tpu.memory_space<vmem>>, vector<32x1xf32>
    %83 = vector.broadcast %82 : vector<32x1xf32> to vector<32x512xf32>
    %84 = arith.addf %81, %83 : vector<32x512xf32>
    %85 = arith.addf %84, %4 : vector<32x512xf32>
    %86 = vector.extract_strided_slice %85 {offsets = [0, 0], sizes = [32, 256], strides = [1, 1]} : vector<32x512xf32> to vector<32x256xf32>
    %c0_41 = arith.constant 0 : index
    %c0_42 = arith.constant 0 : index
    %c0_43 = arith.constant 0 : index
    %87 = vector.load %arg14[%c0_41, %c0_42, %c0_43] : memref<2x32x256xf32, #tpu.memory_space<vmem>>, vector<1x32x256xf32>
    %88 = vector.shape_cast %87 : vector<1x32x256xf32> to vector<32x256xf32>
    %89 = vector.shape_cast %86 : vector<32x256xf32> to vector<1x32x256xf32>
    tpu.vector_store %arg14[%c0_41, %c0_42, %c0_43], %89 {strides = array<i32>} : memref<2x32x256xf32, #tpu.memory_space<vmem>>, vector<1x32x256xf32>,
    %90 = vector.extract_strided_slice %85 {offsets = [0, 256], sizes = [32, 256], strides = [1, 1]} : vector<32x512xf32> to vector<32x256xf32>
    %c1_44 = arith.constant 1 : index
    %c0_45 = arith.constant 0 : index
    %c0_46 = arith.constant 0 : index
    %91 = vector.load %arg14[%c1_44, %c0_45, %c0_46] : memref<2x32x256xf32, #tpu.memory_space<vmem>>, vector<1x32x256xf32>
    %92 = vector.shape_cast %91 : vector<1x32x256xf32> to vector<32x256xf32>
    %93 = vector.shape_cast %90 : vector<32x256xf32> to vector<1x32x256xf32>
    tpu.vector_store %arg14[%c1_44, %c0_45, %c0_46], %93 {strides = array<i32>} : memref<2x32x256xf32, #tpu.memory_space<vmem>>, vector<1x32x256xf32>,
    return
  }
  func.func @transform_0(%arg0: i32) -> (i32, i32, i32) {
    %c0_i32 = arith.constant 0 : i32
    %c0_i32_0 = arith.constant 0 : i32
    %c0_i32_1 = arith.constant 0 : i32
    return %arg0, %c0_i32, %c0_i32_0 : i32, i32, i32
  }
  func.func @transform_1(%arg0: i32) -> (i32, i32) {
    %c0_i32 = arith.constant 0 : i32
    %c0_i32_0 = arith.constant 0 : i32
    %c0_i32_1 = arith.constant 0 : i32
    return %c0_i32, %c0_i32_0 : i32, i32
  }
  func.func @transform_2(%arg0: i32) -> (i32, i32) {
    %c0_i32 = arith.constant 0 : i32
    %c0_i32_0 = arith.constant 0 : i32
    %c0_i32_1 = arith.constant 0 : i32
    return %c0_i32, %c0_i32_0 : i32, i32
  }
  func.func @transform_3(%arg0: i32) -> (i32, i32) {
    %c0_i32 = arith.constant 0 : i32
    %c0_i32_0 = arith.constant 0 : i32
    %c0_i32_1 = arith.constant 0 : i32
    return %c0_i32, %c0_i32_0 : i32, i32
  }
  func.func @transform_4(%arg0: i32) -> (i32, i32) {
    %c0_i32 = arith.constant 0 : i32
    %c0_i32_0 = arith.constant 0 : i32
    %c0_i32_1 = arith.constant 0 : i32
    return %c0_i32, %c0_i32_0 : i32, i32
  }
  func.func @transform_5(%arg0: i32) -> (i32, i32) {
    %c0_i32 = arith.constant 0 : i32
    %c0_i32_0 = arith.constant 0 : i32
    %c0_i32_1 = arith.constant 0 : i32
    return %c0_i32, %c0_i32_0 : i32, i32
  }
  func.func @transform_6(%arg0: i32) -> (i32, i32) {
    %c0_i32 = arith.constant 0 : i32
    %c0_i32_0 = arith.constant 0 : i32
    %c0_i32_1 = arith.constant 0 : i32
    return %c0_i32, %c0_i32_0 : i32, i32
  }
  func.func @transform_7(%arg0: i32) -> (i32, i32) {
    %c0_i32 = arith.constant 0 : i32
    %c0_i32_0 = arith.constant 0 : i32
    %c0_i32_1 = arith.constant 0 : i32
    return %c0_i32, %c0_i32_0 : i32, i32
  }
  func.func @transform_8(%arg0: i32) -> (i32, i32) {
    %c0_i32 = arith.constant 0 : i32
    %c0_i32_0 = arith.constant 0 : i32
    %c0_i32_1 = arith.constant 0 : i32
    return %c0_i32, %c0_i32_0 : i32, i32
  }
  func.func @transform_9(%arg0: i32) -> (i32, i32) {
    %c0_i32 = arith.constant 0 : i32
    %c0_i32_0 = arith.constant 0 : i32
    %c0_i32_1 = arith.constant 0 : i32
    return %c0_i32, %c0_i32_0 : i32, i32
  }
  func.func @transform_10(%arg0: i32) -> (i32, i32) {
    %c0_i32 = arith.constant 0 : i32
    %c0_i32_0 = arith.constant 0 : i32
    %c0_i32_1 = arith.constant 0 : i32
    return %c0_i32, %c0_i32_0 : i32, i32
  }
  func.func @transform_11(%arg0: i32) -> (i32, i32) {
    %c0_i32 = arith.constant 0 : i32
    %c0_i32_0 = arith.constant 0 : i32
    %c0_i32_1 = arith.constant 0 : i32
    return %c0_i32, %c0_i32_0 : i32, i32
  }
  func.func @transform_12(%arg0: i32) -> (i32, i32) {
    %c0_i32 = arith.constant 0 : i32
    %c0_i32_0 = arith.constant 0 : i32
    %c0_i32_1 = arith.constant 0 : i32
    return %c0_i32, %c0_i32_0 : i32, i32
  }
  func.func @transform_13(%arg0: i32) -> (i32, i32, i32) {
    %c0_i32 = arith.constant 0 : i32
    %c0_i32_0 = arith.constant 0 : i32
    %c0_i32_1 = arith.constant 0 : i32
    return %arg0, %c0_i32, %c0_i32_0 : i32, i32, i32
  }
}

</mosaic_0001>

<llo_original>
// kernel: tpu_custom_call.1
$region0: #{tpu_custom_call.1}
  #allocation0 [shape = 'u32[]', space=smem, size = 0x4, offset = 0x4, fixed_abs, tag = 'smem constant byte address 0x4 - core index']
  #allocation1 [shape = 'u32[72,128]{1,0:T(1,128)}', space=vmem, size = 0x9000, scoped, tag = 'internal scratch']
  %s0 = inlined_call_operand.vmem [shape: f32[2,32,256], index: 0, kind: input, shape index: {}]
  %s1 = inlined_call_operand.vmem [shape: bf16[96,32], index: 1, kind: input, shape index: {}]
  %s2 = inlined_call_operand.vmem [shape: f32[96,1], index: 2, kind: input, shape index: {}]
  %s3 = inlined_call_operand.vmem [shape: f32[32,1], index: 3, kind: input, shape index: {}]
  %s4 = inlined_call_operand.vmem [shape: f32[32,1], index: 4, kind: input, shape index: {}]
  %s5 = inlined_call_operand.vmem [shape: f32[32,1], index: 5, kind: input, shape index: {}]
  %s6 = inlined_call_operand.vmem [shape: f32[32,1], index: 6, kind: input, shape index: {}]
  %s7 = inlined_call_operand.vmem [shape: bf16[32,32], index: 7, kind: input, shape index: {}]
  %s8 = inlined_call_operand.vmem [shape: f32[32,1], index: 8, kind: input, shape index: {}]
  %s9 = inlined_call_operand.vmem [shape: bf16[32,32], index: 9, kind: input, shape index: {}]
  %s10 = inlined_call_operand.vmem [shape: f32[32,1], index: 10, kind: input, shape index: {}]
  %s11 = inlined_call_operand.vmem [shape: bf16[32,32], index: 11, kind: input, shape index: {}]
  %s12 = inlined_call_operand.vmem [shape: f32[32,32], index: 12, kind: input, shape index: {}]
  %s13 = inlined_call_operand.hbm [shape: f32[2,32,256], index: 13, kind: output, shape index: {}]
  %s14 = sld [smem:[#allocation0]]
  $region62: #{tpu_custom_call.1} parent=0
    _
  %s16 = ssub.s32 1, %s14
  %s17 = scalar_select 0, %s16, %s14
  $region1: #{tpu_custom_call.1} parent=0
    #allocation2 [shape = 'u8[65536]{0}', space=vmem, size = 0x10000, scoped, tag = 'output window, operand 0, single buffered']
    #allocation3 [shape = 's32[1]{0}', space=sflag, size = 0x4, scoped, tag = 'scoped memory for tpu_custom_call.1']
    %18 = vsyncpa [#allocation3], 0
    // Predicated region
    $region2: #{tpu_custom_call.1} parent=1 // pred_check
      _
    $region3: #{tpu_custom_call.1} parent=1 // pred_check_branch
      %20 = sbr.rel (0) target = $region5
    $region4: #{tpu_custom_call.1} parent=1 // pred_region
      _
    $region5: #{tpu_custom_call.1} parent=1 // pred_fallthru
      _
    // Predicated region
    $region6: #{tpu_custom_call.1} parent=1 // pred_check
      _
    $region7: #{tpu_custom_call.1} parent=1 // pred_check_branch
      %22 = sbr.rel (0) target = $region9
    $region8: #{tpu_custom_call.1} parent=1 // pred_region
      _
    $region9: #{tpu_custom_call.1} parent=1 // pred_fallthru
      _
    // Predicated region
    $region10: #{tpu_custom_call.1} parent=1 // pred_check
      _
    $region11: #{tpu_custom_call.1} parent=1 // pred_check_branch
      %24 = sbr.rel (0) target = $region13
    $region12: #{tpu_custom_call.1} parent=1 // pred_region
      _
    $region13: #{tpu_custom_call.1} parent=1 // pred_fallthru
      _
    // Predicated region
    $region14: #{tpu_custom_call.1} parent=1 // pred_check
      _
    $region15: #{tpu_custom_call.1} parent=1 // pred_check_branch
      %26 = sbr.rel (0) target = $region17
    $region16: #{tpu_custom_call.1} parent=1 // pred_region
      _
    $region17: #{tpu_custom_call.1} parent=1 // pred_fallthru
      _
    // Predicated region
    $region18: #{tpu_custom_call.1} parent=1 // pred_check
      _
    $region19: #{tpu_custom_call.1} parent=1 // pred_check_branch
      %28 = sbr.rel (0) target = $region21
    $region20: #{tpu_custom_call.1} parent=1 // pred_region
      _
    $region21: #{tpu_custom_call.1} parent=1 // pred_fallthru
      _
    // Predicated region
    $region22: #{tpu_custom_call.1} parent=1 // pred_check
      _
    $region23: #{tpu_custom_call.1} parent=1 // pred_check_branch
      %30 = sbr.rel (0) target = $region25
    $region24: #{tpu_custom_call.1} parent=1 // pred_region
      _
    $region25: #{tpu_custom_call.1} parent=1 // pred_fallthru
      _
    // Predicated region
    $region26: #{tpu_custom_call.1} parent=1 // pred_check
      _
    $region27: #{tpu_custom_call.1} parent=1 // pred_check_branch
      %32 = sbr.rel (0) target = $region29
    $region28: #{tpu_custom_call.1} parent=1 // pred_region
      _
    $region29: #{tpu_custom_call.1} parent=1 // pred_fallthru
      _
    // Predicated region
    $region30: #{tpu_custom_call.1} parent=1 // pred_check
      _
    $region31: #{tpu_custom_call.1} parent=1 // pred_check_branch
      %34 = sbr.rel (0) target = $region33
    $region32: #{tpu_custom_call.1} parent=1 // pred_region
      _
    $region33: #{tpu_custom_call.1} parent=1 // pred_fallthru
      _
    // Predicated region
    $region34: #{tpu_custom_call.1} parent=1 // pred_check
      _
    $region35: #{tpu_custom_call.1} parent=1 // pred_check_branch
      %36 = sbr.rel (0) target = $region37
    $region36: #{tpu_custom_call.1} parent=1 // pred_region
      _
    $region37: #{tpu_custom_call.1} parent=1 // pred_fallthru
      _
    // Predicated region
    $region38: #{tpu_custom_call.1} parent=1 // pred_check
      _
    $region39: #{tpu_custom_call.1} parent=1 // pred_check_branch
      %38 = sbr.rel (0) target = $region41
    $region40: #{tpu_custom_call.1} parent=1 // pred_region
      _
    $region41: #{tpu_custom_call.1} parent=1 // pred_fallthru
      _
    // Predicated region
    $region42: #{tpu_custom_call.1} parent=1 // pred_check
      _
    $region43: #{tpu_custom_call.1} parent=1 // pred_check_branch
      %40 = sbr.rel (0) target = $region45
    $region44: #{tpu_custom_call.1} parent=1 // pred_region
      _
    $region45: #{tpu_custom_call.1} parent=1 // pred_fallthru
      _
    // Predicated region
    $region46: #{tpu_custom_call.1} parent=1 // pred_check
      _
    $region47: #{tpu_custom_call.1} parent=1 // pred_check_branch
      %42 = sbr.rel (0) target = $region49
    $region48: #{tpu_custom_call.1} parent=1 // pred_region
      _
    $region49: #{tpu_custom_call.1} parent=1 // pred_fallthru
      _
    // Predicated region
    $region50: #{tpu_custom_call.1} parent=1 // pred_check
      _
    $region51: #{tpu_custom_call.1} parent=1 // pred_check_branch
      %44 = sbr.rel (0) target = $region53
    $region52: #{tpu_custom_call.1} parent=1 // pred_region
      _
    $region53: #{tpu_custom_call.1} parent=1 // pred_fallthru
      _
    %v46 = vld [vmem:[%s0] sm:$0xff]
    %v47 = vld [vmem:[%s0 + $0x8] sm:$0xff]
    %v48 = vld [vmem:[%s0 + $0x10] sm:$0xff]
    %v49 = vld [vmem:[%s0 + $0x18] sm:$0xff]
    %v50 = vld [vmem:[%s0 + $0x20] sm:$0xff]
    %v51 = vld [vmem:[%s0 + $0x28] sm:$0xff]
    %v52 = vld [vmem:[%s0 + $0x30] sm:$0xff]
    %v53 = vld [vmem:[%s0 + $0x38] sm:$0xff]
    %s54 = scalar_lea.vmem %s0, 64
    %v55 = vld [vmem:[%s54] sm:$0xff]
    %v56 = vld [vmem:[%s54 + $0x8] sm:$0xff]
    %v57 = vld [vmem:[%s54 + $0x10] sm:$0xff]
    %v58 = vld [vmem:[%s54 + $0x18] sm:$0xff]
    %v59 = vld [vmem:[%s54 + $0x20] sm:$0xff]
    %v60 = vld [vmem:[%s54 + $0x28] sm:$0xff]
    %v61 = vld [vmem:[%s54 + $0x30] sm:$0xff]
    %v62 = vld [vmem:[%s54 + $0x38] sm:$0xff]
    %v63 = vpack.c.bf16 %v48, %v46
    %v64 = vpack.c.bf16 %v49, %v47
    %v65 = vpack.c.bf16 %v57, %v55
    %v66 = vpack.c.bf16 %v58, %v56
    %v67 = vpack.c.bf16 %v52, %v50
    %v68 = vpack.c.bf16 %v53, %v51
    %v69 = vpack.c.bf16 %v61, %v59
    %v70 = vpack.c.bf16 %v62, %v60
    %v71 = vld [vmem:[%s1] sm:$0xf]
    %v72 = vld [vmem:[%s1 + $0x4] sm:$0xf]
    %v73 = vld [vmem:[%s1 + $0x8] sm:$0xf]
    %v74 = vld [vmem:[%s1 + $0xc] sm:$0xf]
    %v75 = vld [vmem:[%s1 + $0x10] sm:$0xf]
    %v76 = vld [vmem:[%s1 + $0x14] sm:$0xf]
    %v77 = vld [vmem:[%s1 + $0x18] sm:$0xf]
    %v78 = vld [vmem:[%s1 + $0x1c] sm:$0xf]
    %v79 = vld [vmem:[%s1 + $0x20] sm:$0xf]
    %v80 = vld [vmem:[%s1 + $0x24] sm:$0xf]
    %v81 = vld [vmem:[%s1 + $0x28] sm:$0xf]
    %v82 = vld [vmem:[%s1 + $0x2c] sm:$0xf]
    %v83 = vld [vmem:[%s2] sm:$0xff]
    %v84 = vld [vmem:[%s2 + $0x8] sm:$0xff]
    %v85 = vld [vmem:[%s2 + $0x10] sm:$0xff]
    %v86 = vld [vmem:[%s2 + $0x18] sm:$0xff]
    %v87 = vld [vmem:[%s2 + $0x20] sm:$0xff]
    %v88 = vld [vmem:[%s2 + $0x28] sm:$0xff]
    %v89 = vld [vmem:[%s2 + $0x30] sm:$0xff]
    %v90 = vld [vmem:[%s2 + $0x38] sm:$0xff]
    %v91 = vld [vmem:[%s2 + $0x40] sm:$0xff]
    %v92 = vld [vmem:[%s2 + $0x48] sm:$0xff]
    %v93 = vld [vmem:[%s2 + $0x50] sm:$0xff]
    %v94 = vld [vmem:[%s2 + $0x58] sm:$0xff]
    %96 = vset.pattern.permute.xlu0 0
    %97 = vperm.xlu0 %96, %v83
    %v98 = vpop.permute.xlu0 %97
    %101 = vset.pattern.permute.xlu0 0
    %102 = vperm.xlu0 %101, %v84
    %v103 = vpop.permute.xlu0 %102
    %106 = vset.pattern.permute.xlu0 0
    %107 = vperm.xlu0 %106, %v85
    %v108 = vpop.permute.xlu0 %107
    %111 = vset.pattern.permute.xlu0 0
    %112 = vperm.xlu0 %111, %v86
    %v113 = vpop.permute.xlu0 %112
    %116 = vset.pattern.permute.xlu0 0
    %117 = vperm.xlu0 %116, %v87
    %v118 = vpop.permute.xlu0 %117
    %121 = vset.pattern.permute.xlu0 0
    %122 = vperm.xlu0 %121, %v88
    %v123 = vpop.permute.xlu0 %122
    %126 = vset.pattern.permute.xlu0 0
    %127 = vperm.xlu0 %126, %v89
    %v128 = vpop.permute.xlu0 %127
    %131 = vset.pattern.permute.xlu0 0
    %132 = vperm.xlu0 %131, %v90
    %v133 = vpop.permute.xlu0 %132
    %136 = vset.pattern.permute.xlu0 0
    %137 = vperm.xlu0 %136, %v91
    %v138 = vpop.permute.xlu0 %137
    %141 = vset.pattern.permute.xlu0 0
    %142 = vperm.xlu0 %141, %v92
    %v143 = vpop.permute.xlu0 %142
    %146 = vset.pattern.permute.xlu0 0
    %147 = vperm.xlu0 %146, %v93
    %v148 = vpop.permute.xlu0 %147
    %151 = vset.pattern.permute.xlu0 0
    %152 = vperm.xlu0 %151, %v94
    %v153 = vpop.permute.xlu0 %152
    %v167 = vunpack.c.l.b16 %v71
    %v168 = vunpack.c.l.b16 %v72
    %v169 = vunpack.c.l.b16 %v73
    %v170 = vunpack.c.l.b16 %v74
    %v171 = vunpack.c.l.b16 %v75
    %v172 = vunpack.c.l.b16 %v76
    %v173 = vunpack.c.l.b16 %v77
    %v174 = vunpack.c.l.b16 %v78
    %v175 = vunpack.c.l.b16 %v79
    %v176 = vunpack.c.l.b16 %v80
    %v177 = vunpack.c.l.b16 %v81
    %v178 = vunpack.c.l.b16 %v82
    %v179 = vpack.c.b16 %v168, %v167
    %v180 = vpack.c.b16 %v170, %v169
    %v181 = vpack.c.b16 %v172, %v171
    %v182 = vpack.c.b16 %v174, %v173
    %v183 = vpack.c.b16 %v176, %v175
    %v184 = vpack.c.b16 %v178, %v177
    %vm185 = vcmask 261120
    %v187 = vsel %vm185, %v179, 0
    %v190 = vsel %vm185, %v180, 0
    %v193 = vsel %vm185, %v181, 0
    %v196 = vsel %vm185, %v182, 0
    %v199 = vsel %vm185, %v183, 0
    %v202 = vsel %vm185, %v184, 0
    %204 = vmatpush.bf16.msra.mxu0 0
    %205 = vmatpush.bf16.msra.mxu0 0
    %206 = vmatpush.bf16.msra.mxu0 0
    %207 = vmatpush.bf16.msra.mxu0 0
    %208 = vmatpush.bf16.msra.mxu0 0
    %209 = vmatpush.bf16.msra.mxu0 0
    %210 = vmatpush.bf16.msra.mxu0 %v67
    %211 = vmatpush.bf16.msra.mxu0 %v63
    %212 = vmatmul.bf16.gmra.mxu0 %v187
    %v213 = vpop.f32.mrf.mxu0
    %v214 = vadd.f32 %v98, %v213
    %v215 = vpop.f32.mrf.mxu0
    %v216 = vadd.f32 %v103, %v215
    %217 = vmatmul.bf16.gmra.mxu0 %v190
    %v218 = vpop.f32.mrf.mxu0
    %v219 = vadd.f32 %v108, %v218
    %v220 = vpop.f32.mrf.mxu0
    %v221 = vadd.f32 %v113, %v220
    %222 = vmatmul.bf16.gmra.mxu0 %v193
    %v223 = vpop.f32.mrf.mxu0
    %v224 = vadd.f32 %v118, %v223
    %v225 = vpop.f32.mrf.mxu0
    %v226 = vadd.f32 %v123, %v225
    %227 = vmatmul.bf16.gmra.mxu0 %v196
    %v228 = vpop.f32.mrf.mxu0
    %v229 = vadd.f32 %v128, %v228
    %v230 = vpop.f32.mrf.mxu0
    %v231 = vadd.f32 %v133, %v230
    %232 = vmatmul.bf16.gmra.mxu0 %v199
    %v233 = vpop.f32.mrf.mxu0
    %v234 = vadd.f32 %v138, %v233
    %v235 = vpop.f32.mrf.mxu0
    %v236 = vadd.f32 %v143, %v235
    %237 = vmatmul.bf16.gmra.mxu0 %v202
    %v238 = vpop.f32.mrf.mxu0
    %v239 = vadd.f32 %v148, %v238
    %v240 = vpop.f32.mrf.mxu0
    %v241 = vadd.f32 %v153, %v240
    %242 = vdwg.mxu0
    %243 = vmatpush.bf16.msra.mxu0 0
    %244 = vmatpush.bf16.msra.mxu0 0
    %245 = vmatpush.bf16.msra.mxu0 0
    %246 = vmatpush.bf16.msra.mxu0 0
    %247 = vmatpush.bf16.msra.mxu0 0
    %248 = vmatpush.bf16.msra.mxu0 0
    %249 = vmatpush.bf16.msra.mxu0 %v68
    %250 = vmatpush.bf16.msra.mxu0 %v64
    %251 = vmatmul.bf16.gmra.mxu0 %v187
    %v252 = vpop.f32.mrf.mxu0
    %v253 = vadd.f32 %v98, %v252
    %v254 = vpop.f32.mrf.mxu0
    %v255 = vadd.f32 %v103, %v254
    %256 = vmatmul.bf16.gmra.mxu0 %v190
    %v257 = vpop.f32.mrf.mxu0
    %v258 = vadd.f32 %v108, %v257
    %v259 = vpop.f32.mrf.mxu0
    %v260 = vadd.f32 %v113, %v259
    %261 = vmatmul.bf16.gmra.mxu0 %v193
    %v262 = vpop.f32.mrf.mxu0
    %v263 = vadd.f32 %v118, %v262
    %v264 = vpop.f32.mrf.mxu0
    %v265 = vadd.f32 %v123, %v264
    %266 = vmatmul.bf16.gmra.mxu0 %v196
    %v267 = vpop.f32.mrf.mxu0
    %v268 = vadd.f32 %v128, %v267
    %v269 = vpop.f32.mrf.mxu0
    %v270 = vadd.f32 %v133, %v269
    %271 = vmatmul.bf16.gmra.mxu0 %v199
    %v272 = vpop.f32.mrf.mxu0
    %v273 = vadd.f32 %v138, %v272
    %v274 = vpop.f32.mrf.mxu0
    %v275 = vadd.f32 %v143, %v274
    %276 = vmatmul.bf16.gmra.mxu0 %v202
    %v277 = vpop.f32.mrf.mxu0
    %v278 = vadd.f32 %v148, %v277
    %v279 = vpop.f32.mrf.mxu0
    %v280 = vadd.f32 %v153, %v279
    %281 = vdwg.mxu0
    %282 = vmatpush.bf16.msra.mxu0 0
    %283 = vmatpush.bf16.msra.mxu0 0
    %284 = vmatpush.bf16.msra.mxu0 0
    %285 = vmatpush.bf16.msra.mxu0 0
    %286 = vmatpush.bf16.msra.mxu0 0
    %287 = vmatpush.bf16.msra.mxu0 0
    %288 = vmatpush.bf16.msra.mxu0 %v69
    %289 = vmatpush.bf16.msra.mxu0 %v65
    %290 = vmatmul.bf16.gmra.mxu0 %v187
    %v291 = vpop.f32.mrf.mxu0
    %v292 = vadd.f32 %v98, %v291
    %v293 = vpop.f32.mrf.mxu0
    %v294 = vadd.f32 %v103, %v293
    %295 = vmatmul.bf16.gmra.mxu0 %v190
    %v296 = vpop.f32.mrf.mxu0
    %v297 = vadd.f32 %v108, %v296
    %v298 = vpop.f32.mrf.mxu0
    %v299 = vadd.f32 %v113, %v298
    %300 = vmatmul.bf16.gmra.mxu0 %v193
    %v301 = vpop.f32.mrf.mxu0
    %v302 = vadd.f32 %v118, %v301
    %v303 = vpop.f32.mrf.mxu0
    %v304 = vadd.f32 %v123, %v303
    %305 = vmatmul.bf16.gmra.mxu0 %v196
    %v306 = vpop.f32.mrf.mxu0
    %v307 = vadd.f32 %v128, %v306
    %v308 = vpop.f32.mrf.mxu0
    %v309 = vadd.f32 %v133, %v308
    %310 = vmatmul.bf16.gmra.mxu0 %v199
    %v311 = vpop.f32.mrf.mxu0
    %v312 = vadd.f32 %v138, %v311
    %v313 = vpop.f32.mrf.mxu0
    %v314 = vadd.f32 %v143, %v313
    %315 = vmatmul.bf16.gmra.mxu0 %v202
    %v316 = vpop.f32.mrf.mxu0
    %v317 = vadd.f32 %v148, %v316
    %v318 = vpop.f32.mrf.mxu0
    %v319 = vadd.f32 %v153, %v318
    %320 = vdwg.mxu0
    %321 = vmatpush.bf16.msra.mxu0 0
    %322 = vmatpush.bf16.msra.mxu0 0
    %323 = vmatpush.bf16.msra.mxu0 0
    %324 = vmatpush.bf16.msra.mxu0 0
    %325 = vmatpush.bf16.msra.mxu0 0
    %326 = vmatpush.bf16.msra.mxu0 0
    %327 = vmatpush.bf16.msra.mxu0 %v70
    %328 = vmatpush.bf16.msra.mxu0 %v66
    %329 = vmatmul.bf16.gmra.mxu0 %v187
    %v330 = vpop.f32.mrf.mxu0
    %v331 = vadd.f32 %v98, %v330
    %v332 = vpop.f32.mrf.mxu0
    %v333 = vadd.f32 %v103, %v332
    %334 = vmatmul.bf16.gmra.mxu0 %v190
    %v335 = vpop.f32.mrf.mxu0
    %v336 = vadd.f32 %v108, %v335
    %v337 = vpop.f32.mrf.mxu0
    %v338 = vadd.f32 %v113, %v337
    %339 = vmatmul.bf16.gmra.mxu0 %v193
    %v340 = vpop.f32.mrf.mxu0
    %v341 = vadd.f32 %v118, %v340
    %v342 = vpop.f32.mrf.mxu0
    %v343 = vadd.f32 %v123, %v342
    %344 = vmatmul.bf16.gmra.mxu0 %v196
    %v345 = vpop.f32.mrf.mxu0
    %v346 = vadd.f32 %v128, %v345
    %v347 = vpop.f32.mrf.mxu0
    %v348 = vadd.f32 %v133, %v347
    %349 = vmatmul.bf16.gmra.mxu0 %v199
    %v350 = vpop.f32.mrf.mxu0
    %v351 = vadd.f32 %v138, %v350
    %v352 = vpop.f32.mrf.mxu0
    %v353 = vadd.f32 %v143, %v352
    %354 = vmatmul.bf16.gmra.mxu0 %v202
    %v355 = vpop.f32.mrf.mxu0
    %v356 = vadd.f32 %v148, %v355
    %v357 = vpop.f32.mrf.mxu0
    %v358 = vadd.f32 %v153, %v357
    %359 = vdwg.mxu0
    %v360 = vld [vmem:[%s11] sm:$0xf]
    %v361 = vld [vmem:[%s11 + $0x4] sm:$0xf]
    %v362 = vld [vmem:[%s11 + $0x8] sm:$0xf]
    %v363 = vld [vmem:[%s11 + $0xc] sm:$0xf]
    %v364 = vpack.c.bf16 %v226, %v224
    %v365 = vpack.c.bf16 %v265, %v263
    %v366 = vpack.c.bf16 %v304, %v302
    %v367 = vpack.c.bf16 %v343, %v341
    %v368 = vpack.c.bf16 %v236, %v234
    %v369 = vpack.c.bf16 %v275, %v273
    %v370 = vpack.c.bf16 %v314, %v312
    %v371 = vpack.c.bf16 %v353, %v351
    %v372 = vpack.c.bf16 %v231, %v229
    %v373 = vpack.c.bf16 %v270, %v268
    %v374 = vpack.c.bf16 %v309, %v307
    %v375 = vpack.c.bf16 %v348, %v346
    %v376 = vpack.c.bf16 %v241, %v239
    %v377 = vpack.c.bf16 %v280, %v278
    %v378 = vpack.c.bf16 %v319, %v317
    %v379 = vpack.c.bf16 %v358, %v356
    %v384 = vunpack.c.l.b16 %v360
    %v385 = vunpack.c.l.b16 %v361
    %v386 = vunpack.c.l.b16 %v362
    %v387 = vunpack.c.l.b16 %v363
    %v388 = vpack.c.b16 %v385, %v384
    %v389 = vpack.c.b16 %v387, %v386
    %v391 = vsel %vm185, %v388, 0
    %v394 = vsel %vm185, %v389, 0
    %396 = vmatpush.bf16.msra.mxu0 0
    %397 = vmatpush.bf16.msra.mxu0 0
    %398 = vmatpush.bf16.msra.mxu0 0
    %399 = vmatpush.bf16.msra.mxu0 0
    %400 = vmatpush.bf16.msra.mxu0 0
    %401 = vmatpush.bf16.msra.mxu0 0
    %402 = vmatpush.bf16.msra.mxu0 %v372
    %403 = vmatpush.bf16.msra.mxu0 %v364
    %404 = vmatmul.bf16.gmra.mxu0 %v391
    %v405 = vpop.f32.mrf.mxu0
    %v406 = vadd.f32 0.0, %v405
    %v407 = vpop.f32.mrf.mxu0
    %v408 = vadd.f32 0.0, %v407
    %409 = vmatmul.bf16.gmra.mxu0 %v394
    %v410 = vpop.f32.mrf.mxu0
    %v411 = vadd.f32 0.0, %v410
    %v412 = vpop.f32.mrf.mxu0
    %v413 = vadd.f32 0.0, %v412
    %414 = vdwg.mxu0
    %415 = vmatpush.bf16.msra.mxu0 0
    %416 = vmatpush.bf16.msra.mxu0 0
    %417 = vmatpush.bf16.msra.mxu0 0
    %418 = vmatpush.bf16.msra.mxu0 0
    %419 = vmatpush.bf16.msra.mxu0 0
    %420 = vmatpush.bf16.msra.mxu0 0
    %421 = vmatpush.bf16.msra.mxu0 %v373
    %422 = vmatpush.bf16.msra.mxu0 %v365
    %423 = vmatmul.bf16.gmra.mxu0 %v391
    %v424 = vpop.f32.mrf.mxu0
    %v425 = vadd.f32 0.0, %v424
    %v426 = vpop.f32.mrf.mxu0
    %v427 = vadd.f32 0.0, %v426
    %428 = vmatmul.bf16.gmra.mxu0 %v394
    %v429 = vpop.f32.mrf.mxu0
    %v430 = vadd.f32 0.0, %v429
    %v431 = vpop.f32.mrf.mxu0
    %v432 = vadd.f32 0.0, %v431
    %433 = vdwg.mxu0
    %434 = vmatpush.bf16.msra.mxu0 0
    %435 = vmatpush.bf16.msra.mxu0 0
    %436 = vmatpush.bf16.msra.mxu0 0
    %437 = vmatpush.bf16.msra.mxu0 0
    %438 = vmatpush.bf16.msra.mxu0 0
    %439 = vmatpush.bf16.msra.mxu0 0
    %440 = vmatpush.bf16.msra.mxu0 %v374
    %441 = vmatpush.bf16.msra.mxu0 %v366
    %442 = vmatmul.bf16.gmra.mxu0 %v391
    %v443 = vpop.f32.mrf.mxu0
    %v444 = vadd.f32 0.0, %v443
    %v445 = vpop.f32.mrf.mxu0
    %v446 = vadd.f32 0.0, %v445
    %447 = vmatmul.bf16.gmra.mxu0 %v394
    %v448 = vpop.f32.mrf.mxu0
    %v449 = vadd.f32 0.0, %v448
    %v450 = vpop.f32.mrf.mxu0
    %v451 = vadd.f32 0.0, %v450
    %452 = vdwg.mxu0
    %453 = vmatpush.bf16.msra.mxu0 0
    %454 = vmatpush.bf16.msra.mxu0 0
    %455 = vmatpush.bf16.msra.mxu0 0
    %456 = vmatpush.bf16.msra.mxu0 0
    %457 = vmatpush.bf16.msra.mxu0 0
    %458 = vmatpush.bf16.msra.mxu0 0
    %459 = vmatpush.bf16.msra.mxu0 %v375
    %460 = vmatpush.bf16.msra.mxu0 %v367
    %461 = vmatmul.bf16.gmra.mxu0 %v391
    %v462 = vpop.f32.mrf.mxu0
    %v463 = vadd.f32 0.0, %v462
    %v464 = vpop.f32.mrf.mxu0
    %v465 = vadd.f32 0.0, %v464
    %466 = vmatmul.bf16.gmra.mxu0 %v394
    %v467 = vpop.f32.mrf.mxu0
    %v468 = vadd.f32 0.0, %v467
    %v469 = vpop.f32.mrf.mxu0
    %v470 = vadd.f32 0.0, %v469
    %471 = vdwg.mxu0
    %472 = vmatpush.bf16.msra.mxu0 0
    %473 = vmatpush.bf16.msra.mxu0 0
    %474 = vmatpush.bf16.msra.mxu0 0
    %475 = vmatpush.bf16.msra.mxu0 0
    %476 = vmatpush.bf16.msra.mxu0 0
    %477 = vmatpush.bf16.msra.mxu0 0
    %478 = vmatpush.bf16.msra.mxu0 %v376
    %479 = vmatpush.bf16.msra.mxu0 %v368
    %480 = vmatmul.bf16.gmra.mxu0 %v391
    %v481 = vpop.f32.mrf.mxu0
    %v482 = vadd.f32 0.0, %v481
    %v483 = vpop.f32.mrf.mxu0
    %v484 = vadd.f32 0.0, %v483
    %485 = vmatmul.bf16.gmra.mxu0 %v394
    %v486 = vpop.f32.mrf.mxu0
    %v487 = vadd.f32 0.0, %v486
    %v488 = vpop.f32.mrf.mxu0
    %v489 = vadd.f32 0.0, %v488
    %490 = vdwg.mxu0
    %491 = vmatpush.bf16.msra.mxu0 0
    %492 = vmatpush.bf16.msra.mxu0 0
    %493 = vmatpush.bf16.msra.mxu0 0
    %494 = vmatpush.bf16.msra.mxu0 0
    %495 = vmatpush.bf16.msra.mxu0 0
    %496 = vmatpush.bf16.msra.mxu0 0
    %497 = vmatpush.bf16.msra.mxu0 %v377
    %498 = vmatpush.bf16.msra.mxu0 %v369
    %499 = vmatmul.bf16.gmra.mxu0 %v391
    %v500 = vpop.f32.mrf.mxu0
    %v501 = vadd.f32 0.0, %v500
    %v502 = vpop.f32.mrf.mxu0
    %v503 = vadd.f32 0.0, %v502
    %504 = vmatmul.bf16.gmra.mxu0 %v394
    %v505 = vpop.f32.mrf.mxu0
    %v506 = vadd.f32 0.0, %v505
    %v507 = vpop.f32.mrf.mxu0
    %v508 = vadd.f32 0.0, %v507
    %509 = vdwg.mxu0
    %510 = vmatpush.bf16.msra.mxu0 0
    %511 = vmatpush.bf16.msra.mxu0 0
    %512 = vmatpush.bf16.msra.mxu0 0
    %513 = vmatpush.bf16.msra.mxu0 0
    %514 = vmatpush.bf16.msra.mxu0 0
    %515 = vmatpush.bf16.msra.mxu0 0
    %516 = vmatpush.bf16.msra.mxu0 %v378
    %517 = vmatpush.bf16.msra.mxu0 %v370
    %518 = vmatmul.bf16.gmra.mxu0 %v391
    %v519 = vpop.f32.mrf.mxu0
    %v520 = vadd.f32 0.0, %v519
    %v521 = vpop.f32.mrf.mxu0
    %v522 = vadd.f32 0.0, %v521
    %523 = vmatmul.bf16.gmra.mxu0 %v394
    %v524 = vpop.f32.mrf.mxu0
    %v525 = vadd.f32 0.0, %v524
    %v526 = vpop.f32.mrf.mxu0
    %v527 = vadd.f32 0.0, %v526
    %528 = vdwg.mxu0
    %529 = vmatpush.bf16.msra.mxu0 0
    %530 = vmatpush.bf16.msra.mxu0 0
    %531 = vmatpush.bf16.msra.mxu0 0
    %532 = vmatpush.bf16.msra.mxu0 0
    %533 = vmatpush.bf16.msra.mxu0 0
    %534 = vmatpush.bf16.msra.mxu0 0
    %535 = vmatpush.bf16.msra.mxu0 %v379
    %536 = vmatpush.bf16.msra.mxu0 %v371
    %537 = vmatmul.bf16.gmra.mxu0 %v391
    %v538 = vpop.f32.mrf.mxu0
    %v539 = vadd.f32 0.0, %v538
    %v540 = vpop.f32.mrf.mxu0
    %v541 = vadd.f32 0.0, %v540
    %542 = vmatmul.bf16.gmra.mxu0 %v394
    %v543 = vpop.f32.mrf.mxu0
    %v544 = vadd.f32 0.0, %v543
    %v545 = vpop.f32.mrf.mxu0
    %v546 = vadd.f32 0.0, %v545
    %547 = vdwg.mxu0
    %v548 = vsub.f32 %v224, %v406
    %v549 = vsub.f32 %v263, %v425
    %v550 = vsub.f32 %v302, %v444
    %v551 = vsub.f32 %v341, %v463
    %v552 = vsub.f32 %v234, %v482
    %v553 = vsub.f32 %v273, %v501
    %v554 = vsub.f32 %v312, %v520
    %v555 = vsub.f32 %v351, %v539
    %v556 = vsub.f32 %v226, %v408
    %v557 = vsub.f32 %v265, %v427
    %v558 = vsub.f32 %v304, %v446
    %v559 = vsub.f32 %v343, %v465
    %v560 = vsub.f32 %v236, %v484
    %v561 = vsub.f32 %v275, %v503
    %v562 = vsub.f32 %v314, %v522
    %v563 = vsub.f32 %v353, %v541
    %v564 = vsub.f32 %v229, %v411
    %v565 = vsub.f32 %v268, %v430
    %v566 = vsub.f32 %v307, %v449
    %v567 = vsub.f32 %v346, %v468
    %v568 = vsub.f32 %v239, %v487
    %v569 = vsub.f32 %v278, %v506
    %v570 = vsub.f32 %v317, %v525
    %v571 = vsub.f32 %v356, %v544
    %v572 = vsub.f32 %v231, %v413
    %v573 = vsub.f32 %v270, %v432
    %v574 = vsub.f32 %v309, %v451
    %v575 = vsub.f32 %v348, %v470
    %v576 = vsub.f32 %v241, %v489
    %v577 = vsub.f32 %v280, %v508
    %v578 = vsub.f32 %v319, %v527
    %v579 = vsub.f32 %v358, %v546
    %v580 = vmul.f32 %v548, %v548
    %v581 = vmul.f32 %v549, %v549
    %v582 = vmul.f32 %v550, %v550
    %v583 = vmul.f32 %v551, %v551
    %v584 = vmul.f32 %v552, %v552
    %v585 = vmul.f32 %v553, %v553
    %v586 = vmul.f32 %v554, %v554
    %v587 = vmul.f32 %v555, %v555
    %v588 = vmul.f32 %v556, %v556
    %v589 = vmul.f32 %v557, %v557
    %v590 = vmul.f32 %v558, %v558
    %v591 = vmul.f32 %v559, %v559
    %v592 = vmul.f32 %v560, %v560
    %v593 = vmul.f32 %v561, %v561
    %v594 = vmul.f32 %v562, %v562
    %v595 = vmul.f32 %v563, %v563
    %v596 = vmul.f32 %v564, %v564
    %v597 = vmul.f32 %v565, %v565
    %v598 = vmul.f32 %v566, %v566
    %v599 = vmul.f32 %v567, %v567
    %v600 = vmul.f32 %v568, %v568
    %v601 = vmul.f32 %v569, %v569
    %v602 = vmul.f32 %v570, %v570
    %v603 = vmul.f32 %v571, %v571
    %v604 = vmul.f32 %v572, %v572
    %v605 = vmul.f32 %v573, %v573
    %v606 = vmul.f32 %v574, %v574
    %v607 = vmul.f32 %v575, %v575
    %v608 = vmul.f32 %v576, %v576
    %v609 = vmul.f32 %v577, %v577
    %v610 = vmul.f32 %v578, %v578
    %v611 = vmul.f32 %v579, %v579
    %v612 = vpack.c.bf16 %v588, %v580
    %v613 = vpack.c.bf16 %v589, %v581
    %v614 = vpack.c.bf16 %v590, %v582
    %v615 = vpack.c.bf16 %v591, %v583
    %v616 = vpack.c.bf16 %v592, %v584
    %v617 = vpack.c.bf16 %v593, %v585
    %v618 = vpack.c.bf16 %v594, %v586
    %v619 = vpack.c.bf16 %v595, %v587
    %v620 = vpack.c.bf16 %v604, %v596
    %v621 = vpack.c.bf16 %v605, %v597
    %v622 = vpack.c.bf16 %v606, %v598
    %v623 = vpack.c.bf16 %v607, %v599
    %v624 = vpack.c.bf16 %v608, %v600
    %v625 = vpack.c.bf16 %v609, %v601
    %v626 = vpack.c.bf16 %v610, %v602
    %v627 = vpack.c.bf16 %v611, %v603
    %628 = vmatpush.bf16.msra.mxu0 0
    %629 = vmatpush.bf16.msra.mxu0 0
    %630 = vmatpush.bf16.msra.mxu0 0
    %631 = vmatpush.bf16.msra.mxu0 0
    %632 = vmatpush.bf16.msra.mxu0 0
    %633 = vmatpush.bf16.msra.mxu0 0
    %634 = vmatpush.bf16.msra.mxu0 %v620
    %635 = vmatpush.bf16.msra.mxu0 %v612
    %636 = vmatmul.bf16.gmra.mxu0 %v391
    %v637 = vpop.f32.mrf.mxu0
    %v638 = vadd.f32 1e-05, %v637
    %v639 = vpop.f32.mrf.mxu0
    %v640 = vadd.f32 1e-05, %v639
    %641 = vmatmul.bf16.gmra.mxu0 %v394
    %v642 = vpop.f32.mrf.mxu0
    %v643 = vadd.f32 1e-05, %v642
    %v644 = vpop.f32.mrf.mxu0
    %v645 = vadd.f32 1e-05, %v644
    %646 = vdwg.mxu0
    %647 = vmatpush.bf16.msra.mxu0 0
    %648 = vmatpush.bf16.msra.mxu0 0
    %649 = vmatpush.bf16.msra.mxu0 0
    %650 = vmatpush.bf16.msra.mxu0 0
    %651 = vmatpush.bf16.msra.mxu0 0
    %652 = vmatpush.bf16.msra.mxu0 0
    %653 = vmatpush.bf16.msra.mxu0 %v621
    %654 = vmatpush.bf16.msra.mxu0 %v613
    %655 = vmatmul.bf16.gmra.mxu0 %v391
    %v656 = vpop.f32.mrf.mxu0
    %v657 = vadd.f32 1e-05, %v656
    %v658 = vpop.f32.mrf.mxu0
    %v659 = vadd.f32 1e-05, %v658
    %660 = vmatmul.bf16.gmra.mxu0 %v394
    %v661 = vpop.f32.mrf.mxu0
    %v662 = vadd.f32 1e-05, %v661
    %v663 = vpop.f32.mrf.mxu0
    %v664 = vadd.f32 1e-05, %v663
    %665 = vdwg.mxu0
    %666 = vmatpush.bf16.msra.mxu0 0
    %667 = vmatpush.bf16.msra.mxu0 0
    %668 = vmatpush.bf16.msra.mxu0 0
    %669 = vmatpush.bf16.msra.mxu0 0
    %670 = vmatpush.bf16.msra.mxu0 0
    %671 = vmatpush.bf16.msra.mxu0 0
    %672 = vmatpush.bf16.msra.mxu0 %v622
    %673 = vmatpush.bf16.msra.mxu0 %v614
    %674 = vmatmul.bf16.gmra.mxu0 %v391
    %v675 = vpop.f32.mrf.mxu0
    %v676 = vadd.f32 1e-05, %v675
    %v677 = vpop.f32.mrf.mxu0
    %v678 = vadd.f32 1e-05, %v677
    %679 = vmatmul.bf16.gmra.mxu0 %v394
    %v680 = vpop.f32.mrf.mxu0
    %v681 = vadd.f32 1e-05, %v680
    %v682 = vpop.f32.mrf.mxu0
    %v683 = vadd.f32 1e-05, %v682
    %684 = vdwg.mxu0
    %685 = vmatpush.bf16.msra.mxu0 0
    %686 = vmatpush.bf16.msra.mxu0 0
    %687 = vmatpush.bf16.msra.mxu0 0
    %688 = vmatpush.bf16.msra.mxu0 0
    %689 = vmatpush.bf16.msra.mxu0 0
    %690 = vmatpush.bf16.msra.mxu0 0
    %691 = vmatpush.bf16.msra.mxu0 %v623
    %692 = vmatpush.bf16.msra.mxu0 %v615
    %693 = vmatmul.bf16.gmra.mxu0 %v391
    %v694 = vpop.f32.mrf.mxu0
    %v695 = vadd.f32 1e-05, %v694
    %v696 = vpop.f32.mrf.mxu0
    %v697 = vadd.f32 1e-05, %v696
    %698 = vmatmul.bf16.gmra.mxu0 %v394
    %v699 = vpop.f32.mrf.mxu0
    %v700 = vadd.f32 1e-05, %v699
    %v701 = vpop.f32.mrf.mxu0
    %v702 = vadd.f32 1e-05, %v701
    %703 = vdwg.mxu0
    %704 = vmatpush.bf16.msra.mxu0 0
    %705 = vmatpush.bf16.msra.mxu0 0
    %706 = vmatpush.bf16.msra.mxu0 0
    %707 = vmatpush.bf16.msra.mxu0 0
    %708 = vmatpush.bf16.msra.mxu0 0
    %709 = vmatpush.bf16.msra.mxu0 0
    %710 = vmatpush.bf16.msra.mxu0 %v624
    %711 = vmatpush.bf16.msra.mxu0 %v616
    %712 = vmatmul.bf16.gmra.mxu0 %v391
    %v713 = vpop.f32.mrf.mxu0
    %v714 = vadd.f32 1e-05, %v713
    %v715 = vpop.f32.mrf.mxu0
    %v716 = vadd.f32 1e-05, %v715
    %717 = vmatmul.bf16.gmra.mxu0 %v394
    %v718 = vpop.f32.mrf.mxu0
    %v719 = vadd.f32 1e-05, %v718
    %v720 = vpop.f32.mrf.mxu0
    %v721 = vadd.f32 1e-05, %v720
    %722 = vdwg.mxu0
    %723 = vmatpush.bf16.msra.mxu0 0
    %724 = vmatpush.bf16.msra.mxu0 0
    %725 = vmatpush.bf16.msra.mxu0 0
    %726 = vmatpush.bf16.msra.mxu0 0
    %727 = vmatpush.bf16.msra.mxu0 0
    %728 = vmatpush.bf16.msra.mxu0 0
    %729 = vmatpush.bf16.msra.mxu0 %v625
    %730 = vmatpush.bf16.msra.mxu0 %v617
    %731 = vmatmul.bf16.gmra.mxu0 %v391
    %v732 = vpop.f32.mrf.mxu0
    %v733 = vadd.f32 1e-05, %v732
    %v734 = vpop.f32.mrf.mxu0
    %v735 = vadd.f32 1e-05, %v734
    %736 = vmatmul.bf16.gmra.mxu0 %v394
    %v737 = vpop.f32.mrf.mxu0
    %v738 = vadd.f32 1e-05, %v737
    %v739 = vpop.f32.mrf.mxu0
    %v740 = vadd.f32 1e-05, %v739
    %741 = vdwg.mxu0
    %742 = vmatpush.bf16.msra.mxu0 0
    %743 = vmatpush.bf16.msra.mxu0 0
    %744 = vmatpush.bf16.msra.mxu0 0
    %745 = vmatpush.bf16.msra.mxu0 0
    %746 = vmatpush.bf16.msra.mxu0 0
    %747 = vmatpush.bf16.msra.mxu0 0
    %748 = vmatpush.bf16.msra.mxu0 %v626
    %749 = vmatpush.bf16.msra.mxu0 %v618
    %750 = vmatmul.bf16.gmra.mxu0 %v391
    %v751 = vpop.f32.mrf.mxu0
    %v752 = vadd.f32 1e-05, %v751
    %v753 = vpop.f32.mrf.mxu0
    %v754 = vadd.f32 1e-05, %v753
    %755 = vmatmul.bf16.gmra.mxu0 %v394
    %v756 = vpop.f32.mrf.mxu0
    %v757 = vadd.f32 1e-05, %v756
    %v758 = vpop.f32.mrf.mxu0
    %v759 = vadd.f32 1e-05, %v758
    %760 = vdwg.mxu0
    %761 = vmatpush.bf16.msra.mxu0 0
    %762 = vmatpush.bf16.msra.mxu0 0
    %763 = vmatpush.bf16.msra.mxu0 0
    %764 = vmatpush.bf16.msra.mxu0 0
    %765 = vmatpush.bf16.msra.mxu0 0
    %766 = vmatpush.bf16.msra.mxu0 0
    %767 = vmatpush.bf16.msra.mxu0 %v627
    %768 = vmatpush.bf16.msra.mxu0 %v619
    %769 = vmatmul.bf16.gmra.mxu0 %v391
    %v770 = vpop.f32.mrf.mxu0
    %v771 = vadd.f32 1e-05, %v770
    %v772 = vpop.f32.mrf.mxu0
    %v773 = vadd.f32 1e-05, %v772
    %774 = vmatmul.bf16.gmra.mxu0 %v394
    %v775 = vpop.f32.mrf.mxu0
    %v776 = vadd.f32 1e-05, %v775
    %v777 = vpop.f32.mrf.mxu0
    %v778 = vadd.f32 1e-05, %v777
    %779 = vdwg.mxu0
    %v780 = vrsqrt.pop %v638
    %v781 = vmul.f32 %v780, %v638
    %v782 = vmul.f32 %v781, %v780
    %v783 = vmul.f32 0.5, %v782
    %v784 = vsub.f32 1.5, %v783
    %v785 = vmul.f32 %v780, %v784
    %vm786 = vweird.f32 %v638
    %vm787 = vweird.f32 %v780
    %vm788 = vmor %vm786, %vm787
    %v789 = vsel %vm788, %v780, %v785
    %v790 = vrsqrt.pop %v657
    %v791 = vmul.f32 %v790, %v657
    %v792 = vmul.f32 %v791, %v790
    %v793 = vmul.f32 0.5, %v792
    %v794 = vsub.f32 1.5, %v793
    %v795 = vmul.f32 %v790, %v794
    %vm796 = vweird.f32 %v657
    %vm797 = vweird.f32 %v790
    %vm798 = vmor %vm796, %vm797
    %v799 = vsel %vm798, %v790, %v795
    %v800 = vrsqrt.pop %v676
    %v801 = vmul.f32 %v800, %v676
    %v802 = vmul.f32 %v801, %v800
    %v803 = vmul.f32 0.5, %v802
    %v804 = vsub.f32 1.5, %v803
    %v805 = vmul.f32 %v800, %v804
    %vm806 = vweird.f32 %v676
    %vm807 = vweird.f32 %v800
    %vm808 = vmor %vm806, %vm807
    %v809 = vsel %vm808, %v800, %v805
    %v810 = vrsqrt.pop %v695
    %v811 = vmul.f32 %v810, %v695
    %v812 = vmul.f32 %v811, %v810
    %v813 = vmul.f32 0.5, %v812
    %v814 = vsub.f32 1.5, %v813
    %v815 = vmul.f32 %v810, %v814
    %vm816 = vweird.f32 %v695
    %vm817 = vweird.f32 %v810
    %vm818 = vmor %vm816, %vm817
    %v819 = vsel %vm818, %v810, %v815
    %v820 = vrsqrt.pop %v714
    %v821 = vmul.f32 %v820, %v714
    %v822 = vmul.f32 %v821, %v820
    %v823 = vmul.f32 0.5, %v822
    %v824 = vsub.f32 1.5, %v823
    %v825 = vmul.f32 %v820, %v824
    %vm826 = vweird.f32 %v714
    %vm827 = vweird.f32 %v820
    %vm828 = vmor %vm826, %vm827
    %v829 = vsel %vm828, %v820, %v825
    %v830 = vrsqrt.pop %v733
    %v831 = vmul.f32 %v830, %v733
    %v832 = vmul.f32 %v831, %v830
    %v833 = vmul.f32 0.5, %v832
    %v834 = vsub.f32 1.5, %v833
    %v835 = vmul.f32 %v830, %v834
    %vm836 = vweird.f32 %v733
    %vm837 = vweird.f32 %v830
    %vm838 = vmor %vm836, %vm837
    %v839 = vsel %vm838, %v830, %v835
    %v840 = vrsqrt.pop %v752
    %v841 = vmul.f32 %v840, %v752
    %v842 = vmul.f32 %v841, %v840
    %v843 = vmul.f32 0.5, %v842
    %v844 = vsub.f32 1.5, %v843
    %v845 = vmul.f32 %v840, %v844
    %vm846 = vweird.f32 %v752
    %vm847 = vweird.f32 %v840
    %vm848 = vmor %vm846, %vm847
    %v849 = vsel %vm848, %v840, %v845
    %v850 = vrsqrt.pop %v771
    %v851 = vmul.f32 %v850, %v771
    %v852 = vmul.f32 %v851, %v850
    %v853 = vmul.f32 0.5, %v852
    %v854 = vsub.f32 1.5, %v853
    %v855 = vmul.f32 %v850, %v854
    %vm856 = vweird.f32 %v771
    %vm857 = vweird.f32 %v850
    %vm858 = vmor %vm856, %vm857
    %v859 = vsel %vm858, %v850, %v855
    %v860 = vrsqrt.pop %v640
    %v861 = vmul.f32 %v860, %v640
    %v862 = vmul.f32 %v861, %v860
    %v863 = vmul.f32 0.5, %v862
    %v864 = vsub.f32 1.5, %v863
    %v865 = vmul.f32 %v860, %v864
    %vm866 = vweird.f32 %v640
    %vm867 = vweird.f32 %v860
    %vm868 = vmor %vm866, %vm867
    %v869 = vsel %vm868, %v860, %v865
    %v870 = vrsqrt.pop %v659
    %v871 = vmul.f32 %v870, %v659
    %v872 = vmul.f32 %v871, %v870
    %v873 = vmul.f32 0.5, %v872
    %v874 = vsub.f32 1.5, %v873
    %v875 = vmul.f32 %v870, %v874
    %vm876 = vweird.f32 %v659
    %vm877 = vweird.f32 %v870
    %vm878 = vmor %vm876, %vm877
    %v879 = vsel %vm878, %v870, %v875
    %v880 = vrsqrt.pop %v678
    %v881 = vmul.f32 %v880, %v678
    %v882 = vmul.f32 %v881, %v880
    %v883 = vmul.f32 0.5, %v882
    %v884 = vsub.f32 1.5, %v883
    %v885 = vmul.f32 %v880, %v884
    %vm886 = vweird.f32 %v678
    %vm887 = vweird.f32 %v880
    %vm888 = vmor %vm886, %vm887
    %v889 = vsel %vm888, %v880, %v885
    %v890 = vrsqrt.pop %v697
    %v891 = vmul.f32 %v890, %v697
    %v892 = vmul.f32 %v891, %v890
    %v893 = vmul.f32 0.5, %v892
    %v894 = vsub.f32 1.5, %v893
    %v895 = vmul.f32 %v890, %v894
    %vm896 = vweird.f32 %v697
    %vm897 = vweird.f32 %v890
    %vm898 = vmor %vm896, %vm897
    %v899 = vsel %vm898, %v890, %v895
    %v900 = vrsqrt.pop %v716
    %v901 = vmul.f32 %v900, %v716
    %v902 = vmul.f32 %v901, %v900
    %v903 = vmul.f32 0.5, %v902
    %v904 = vsub.f32 1.5, %v903
    %v905 = vmul.f32 %v900, %v904
    %vm906 = vweird.f32 %v716
    %vm907 = vweird.f32 %v900
    %vm908 = vmor %vm906, %vm907
    %v909 = vsel %vm908, %v900, %v905
    %v910 = vrsqrt.pop %v735
    %v911 = vmul.f32 %v910, %v735
    %v912 = vmul.f32 %v911, %v910
    %v913 = vmul.f32 0.5, %v912
    %v914 = vsub.f32 1.5, %v913
    %v915 = vmul.f32 %v910, %v914
    %vm916 = vweird.f32 %v735
    %vm917 = vweird.f32 %v910
    %vm918 = vmor %vm916, %vm917
    %v919 = vsel %vm918, %v910, %v915
    %v920 = vrsqrt.pop %v754
    %v921 = vmul.f32 %v920, %v754
    %v922 = vmul.f32 %v921, %v920
    %v923 = vmul.f32 0.5, %v922
    %v924 = vsub.f32 1.5, %v923
    %v925 = vmul.f32 %v920, %v924
    %vm926 = vweird.f32 %v754
    %vm927 = vweird.f32 %v920
    %vm928 = vmor %vm926, %vm927
    %v929 = vsel %vm928, %v920, %v925
    %v930 = vrsqrt.pop %v773
    %v931 = vmul.f32 %v930, %v773
    %v932 = vmul.f32 %v931, %v930
    %v933 = vmul.f32 0.5, %v932
    %v934 = vsub.f32 1.5, %v933
    %v935 = vmul.f32 %v930, %v934
    %vm936 = vweird.f32 %v773
    %vm937 = vweird.f32 %v930
    %vm938 = vmor %vm936, %vm937
    %v939 = vsel %vm938, %v930, %v935
    %v940 = vrsqrt.pop %v643
    %v941 = vmul.f32 %v940, %v643
    %v942 = vmul.f32 %v941, %v940
    %v943 = vmul.f32 0.5, %v942
    %v944 = vsub.f32 1.5, %v943
    %v945 = vmul.f32 %v940, %v944
    %vm946 = vweird.f32 %v643
    %vm947 = vweird.f32 %v940
    %vm948 = vmor %vm946, %vm947
    %v949 = vsel %vm948, %v940, %v945
    %v950 = vrsqrt.pop %v662
    %v951 = vmul.f32 %v950, %v662
    %v952 = vmul.f32 %v951, %v950
    %v953 = vmul.f32 0.5, %v952
    %v954 = vsub.f32 1.5, %v953
    %v955 = vmul.f32 %v950, %v954
    %vm956 = vweird.f32 %v662
    %vm957 = vweird.f32 %v950
    %vm958 = vmor %vm956, %vm957
    %v959 = vsel %vm958, %v950, %v955
    %v960 = vrsqrt.pop %v681
    %v961 = vmul.f32 %v960, %v681
    %v962 = vmul.f32 %v961, %v960
    %v963 = vmul.f32 0.5, %v962
    %v964 = vsub.f32 1.5, %v963
    %v965 = vmul.f32 %v960, %v964
    %vm966 = vweird.f32 %v681
    %vm967 = vweird.f32 %v960
    %vm968 = vmor %vm966, %vm967
    %v969 = vsel %vm968, %v960, %v965
    %v970 = vrsqrt.pop %v700
    %v971 = vmul.f32 %v970, %v700
    %v972 = vmul.f32 %v971, %v970
    %v973 = vmul.f32 0.5, %v972
    %v974 = vsub.f32 1.5, %v973
    %v975 = vmul.f32 %v970, %v974
    %vm976 = vweird.f32 %v700
    %vm977 = vweird.f32 %v970
    %vm978 = vmor %vm976, %vm977
    %v979 = vsel %vm978, %v970, %v975
    %v980 = vrsqrt.pop %v719
    %v981 = vmul.f32 %v980, %v719
    %v982 = vmul.f32 %v981, %v980
    %v983 = vmul.f32 0.5, %v982
    %v984 = vsub.f32 1.5, %v983
    %v985 = vmul.f32 %v980, %v984
    %vm986 = vweird.f32 %v719
    %vm987 = vweird.f32 %v980
    %vm988 = vmor %vm986, %vm987
    %v989 = vsel %vm988, %v980, %v985
    %v990 = vrsqrt.pop %v738
    %v991 = vmul.f32 %v990, %v738
    %v992 = vmul.f32 %v991, %v990
    %v993 = vmul.f32 0.5, %v992
    %v994 = vsub.f32 1.5, %v993
    %v995 = vmul.f32 %v990, %v994
    %vm996 = vweird.f32 %v738
    %vm997 = vweird.f32 %v990
    %vm998 = vmor %vm996, %vm997
    %v999 = vsel %vm998, %v990, %v995
    %v1000 = vrsqrt.pop %v757
    %v1001 = vmul.f32 %v1000, %v757
    %v1002 = vmul.f32 %v1001, %v1000
    %v1003 = vmul.f32 0.5, %v1002
    %v1004 = vsub.f32 1.5, %v1003
    %v1005 = vmul.f32 %v1000, %v1004
    %vm1006 = vweird.f32 %v757
    %vm1007 = vweird.f32 %v1000
    %vm1008 = vmor %vm1006, %vm1007
    %v1009 = vsel %vm1008, %v1000, %v1005
    %v1010 = vrsqrt.pop %v776
    %v1011 = vmul.f32 %v1010, %v776
    %v1012 = vmul.f32 %v1011, %v1010
    %v1013 = vmul.f32 0.5, %v1012
    %v1014 = vsub.f32 1.5, %v1013
    %v1015 = vmul.f32 %v1010, %v1014
    %vm1016 = vweird.f32 %v776
    %vm1017 = vweird.f32 %v1010
    %vm1018 = vmor %vm1016, %vm1017
    %v1019 = vsel %vm1018, %v1010, %v1015
    %v1020 = vrsqrt.pop %v645
    %v1021 = vmul.f32 %v1020, %v645
    %v1022 = vmul.f32 %v1021, %v1020
    %v1023 = vmul.f32 0.5, %v1022
    %v1024 = vsub.f32 1.5, %v1023
    %v1025 = vmul.f32 %v1020, %v1024
    %vm1026 = vweird.f32 %v645
    %vm1027 = vweird.f32 %v1020
    %vm1028 = vmor %vm1026, %vm1027
    %v1029 = vsel %vm1028, %v1020, %v1025
    %v1030 = vrsqrt.pop %v664
    %v1031 = vmul.f32 %v1030, %v664
    %v1032 = vmul.f32 %v1031, %v1030
    %v1033 = vmul.f32 0.5, %v1032
    %v1034 = vsub.f32 1.5, %v1033
    %v1035 = vmul.f32 %v1030, %v1034
    %vm1036 = vweird.f32 %v664
    %vm1037 = vweird.f32 %v1030
    %vm1038 = vmor %vm1036, %vm1037
    %v1039 = vsel %vm1038, %v1030, %v1035
    %v1040 = vrsqrt.pop %v683
    %v1041 = vmul.f32 %v1040, %v683
    %v1042 = vmul.f32 %v1041, %v1040
    %v1043 = vmul.f32 0.5, %v1042
    %v1044 = vsub.f32 1.5, %v1043
    %v1045 = vmul.f32 %v1040, %v1044
    %vm1046 = vweird.f32 %v683
    %vm1047 = vweird.f32 %v1040
    %vm1048 = vmor %vm1046, %vm1047
    %v1049 = vsel %vm1048, %v1040, %v1045
    %v1050 = vrsqrt.pop %v702
    %v1051 = vmul.f32 %v1050, %v702
    %v1052 = vmul.f32 %v1051, %v1050
    %v1053 = vmul.f32 0.5, %v1052
    %v1054 = vsub.f32 1.5, %v1053
    %v1055 = vmul.f32 %v1050, %v1054
    %vm1056 = vweird.f32 %v702
    %vm1057 = vweird.f32 %v1050
    %vm1058 = vmor %vm1056, %vm1057
    %v1059 = vsel %vm1058, %v1050, %v1055
    %v1060 = vrsqrt.pop %v721
    %v1061 = vmul.f32 %v1060, %v721
    %v1062 = vmul.f32 %v1061, %v1060
    %v1063 = vmul.f32 0.5, %v1062
    %v1064 = vsub.f32 1.5, %v1063
    %v1065 = vmul.f32 %v1060, %v1064
    %vm1066 = vweird.f32 %v721
    %vm1067 = vweird.f32 %v1060
    %vm1068 = vmor %vm1066, %vm1067
    %v1069 = vsel %vm1068, %v1060, %v1065
    %v1070 = vrsqrt.pop %v740
    %v1071 = vmul.f32 %v1070, %v740
    %v1072 = vmul.f32 %v1071, %v1070
    %v1073 = vmul.f32 0.5, %v1072
    %v1074 = vsub.f32 1.5, %v1073
    %v1075 = vmul.f32 %v1070, %v1074
    %vm1076 = vweird.f32 %v740
    %vm1077 = vweird.f32 %v1070
    %vm1078 = vmor %vm1076, %vm1077
    %v1079 = vsel %vm1078, %v1070, %v1075
    %v1080 = vrsqrt.pop %v759
    %v1081 = vmul.f32 %v1080, %v759
    %v1082 = vmul.f32 %v1081, %v1080
    %v1083 = vmul.f32 0.5, %v1082
    %v1084 = vsub.f32 1.5, %v1083
    %v1085 = vmul.f32 %v1080, %v1084
    %vm1086 = vweird.f32 %v759
    %vm1087 = vweird.f32 %v1080
    %vm1088 = vmor %vm1086, %vm1087
    %v1089 = vsel %vm1088, %v1080, %v1085
    %v1090 = vrsqrt.pop %v778
    %v1091 = vmul.f32 %v1090, %v778
    %v1092 = vmul.f32 %v1091, %v1090
    %v1093 = vmul.f32 0.5, %v1092
    %v1094 = vsub.f32 1.5, %v1093
    %v1095 = vmul.f32 %v1090, %v1094
    %vm1096 = vweird.f32 %v778
    %vm1097 = vweird.f32 %v1090
    %vm1098 = vmor %vm1096, %vm1097
    %v1099 = vsel %vm1098, %v1090, %v1095
    %v1100 = vmul.f32 %v548, %v789
    %v1101 = vmul.f32 %v549, %v799
    %v1102 = vmul.f32 %v550, %v809
    %v1103 = vmul.f32 %v551, %v819
    %v1104 = vmul.f32 %v552, %v829
    %v1105 = vmul.f32 %v553, %v839
    %v1106 = vmul.f32 %v554, %v849
    %v1107 = vmul.f32 %v555, %v859
    %v1108 = vmul.f32 %v556, %v869
    %v1109 = vmul.f32 %v557, %v879
    %v1110 = vmul.f32 %v558, %v889
    %v1111 = vmul.f32 %v559, %v899
    %v1112 = vmul.f32 %v560, %v909
    %v1113 = vmul.f32 %v561, %v919
    %v1114 = vmul.f32 %v562, %v929
    %v1115 = vmul.f32 %v563, %v939
    %v1116 = vmul.f32 %v564, %v949
    %v1117 = vmul.f32 %v565, %v959
    %v1118 = vmul.f32 %v566, %v969
    %v1119 = vmul.f32 %v567, %v979
    %v1120 = vmul.f32 %v568, %v989
    %v1121 = vmul.f32 %v569, %v999
    %v1122 = vmul.f32 %v570, %v1009
    %v1123 = vmul.f32 %v571, %v1019
    %v1124 = vmul.f32 %v572, %v1029
    %v1125 = vmul.f32 %v573, %v1039
    %v1126 = vmul.f32 %v574, %v1049
    %v1127 = vmul.f32 %v575, %v1059
    %v1128 = vmul.f32 %v576, %v1069
    %v1129 = vmul.f32 %v577, %v1079
    %v1130 = vmul.f32 %v578, %v1089
    %v1131 = vmul.f32 %v579, %v1099
    %v1132 = vld [vmem:[%s3] sm:$0xff]
    %v1133 = vld [vmem:[%s3 + $0x8] sm:$0xff]
    %v1134 = vld [vmem:[%s3 + $0x10] sm:$0xff]
    %v1135 = vld [vmem:[%s3 + $0x18] sm:$0xff]
    %1137 = vset.pattern.permute.xlu0 0
    %1138 = vperm.xlu0 %1137, %v1132
    %v1139 = vpop.permute.xlu0 %1138
    %1142 = vset.pattern.permute.xlu0 0
    %1143 = vperm.xlu0 %1142, %v1133
    %v1144 = vpop.permute.xlu0 %1143
    %1147 = vset.pattern.permute.xlu0 0
    %1148 = vperm.xlu0 %1147, %v1134
    %v1149 = vpop.permute.xlu0 %1148
    %1152 = vset.pattern.permute.xlu0 0
    %1153 = vperm.xlu0 %1152, %v1135
    %v1154 = vpop.permute.xlu0 %1153
    %v1156 = vmul.f32 %v1100, %v1139
    %v1157 = vmul.f32 %v1101, %v1139
    %v1158 = vmul.f32 %v1102, %v1139
    %v1159 = vmul.f32 %v1103, %v1139
    %v1160 = vmul.f32 %v1108, %v1144
    %v1161 = vmul.f32 %v1109, %v1144
    %v1162 = vmul.f32 %v1110, %v1144
    %v1163 = vmul.f32 %v1111, %v1144
    %v1164 = vmul.f32 %v1116, %v1149
    %v1165 = vmul.f32 %v1117, %v1149
    %v1166 = vmul.f32 %v1118, %v1149
    %v1167 = vmul.f32 %v1119, %v1149
    %v1168 = vmul.f32 %v1124, %v1154
    %v1169 = vmul.f32 %v1125, %v1154
    %v1170 = vmul.f32 %v1126, %v1154
    %v1171 = vmul.f32 %v1127, %v1154
    %v1172 = vld [vmem:[%s4] sm:$0xff]
    %v1173 = vld [vmem:[%s4 + $0x8] sm:$0xff]
    %v1174 = vld [vmem:[%s4 + $0x10] sm:$0xff]
    %v1175 = vld [vmem:[%s4 + $0x18] sm:$0xff]
    %1177 = vset.pattern.permute.xlu0 0
    %1178 = vperm.xlu0 %1177, %v1172
    %v1179 = vpop.permute.xlu0 %1178
    %1182 = vset.pattern.permute.xlu0 0
    %1183 = vperm.xlu0 %1182, %v1173
    %v1184 = vpop.permute.xlu0 %1183
    %1187 = vset.pattern.permute.xlu0 0
    %1188 = vperm.xlu0 %1187, %v1174
    %v1189 = vpop.permute.xlu0 %1188
    %1192 = vset.pattern.permute.xlu0 0
    %1193 = vperm.xlu0 %1192, %v1175
    %v1194 = vpop.permute.xlu0 %1193
    %v1196 = vadd.f32 %v1156, %v1179
    %v1197 = vadd.f32 %v1157, %v1179
    %v1198 = vadd.f32 %v1158, %v1179
    %v1199 = vadd.f32 %v1159, %v1179
    %v1200 = vadd.f32 %v1160, %v1184
    %v1201 = vadd.f32 %v1161, %v1184
    %v1202 = vadd.f32 %v1162, %v1184
    %v1203 = vadd.f32 %v1163, %v1184
    %v1204 = vadd.f32 %v1164, %v1189
    %v1205 = vadd.f32 %v1165, %v1189
    %v1206 = vadd.f32 %v1166, %v1189
    %v1207 = vadd.f32 %v1167, %v1189
    %v1208 = vadd.f32 %v1168, %v1194
    %v1209 = vadd.f32 %v1169, %v1194
    %v1210 = vadd.f32 %v1170, %v1194
    %v1211 = vadd.f32 %v1171, %v1194
    %v1212 = vpack.c.bf16 %v1197, %v1196
    %v1213 = vpack.c.bf16 %v1199, %v1198
    %v1214 = vpack.c.bf16 %v1201, %v1200
    %v1215 = vpack.c.bf16 %v1203, %v1202
    %v1216 = vpack.c.bf16 %v1205, %v1204
    %v1217 = vpack.c.bf16 %v1207, %v1206
    %v1218 = vpack.c.bf16 %v1209, %v1208
    %v1219 = vpack.c.bf16 %v1211, %v1210
    %v1220 = vld [vmem:[%s5] sm:$0xff]
    %v1221 = vld [vmem:[%s5 + $0x8] sm:$0xff]
    %v1222 = vld [vmem:[%s5 + $0x10] sm:$0xff]
    %v1223 = vld [vmem:[%s5 + $0x18] sm:$0xff]
    %1225 = vset.pattern.permute.xlu0 0
    %1226 = vperm.xlu0 %1225, %v1220
    %v1227 = vpop.permute.xlu0 %1226
    %1230 = vset.pattern.permute.xlu0 0
    %1231 = vperm.xlu0 %1230, %v1221
    %v1232 = vpop.permute.xlu0 %1231
    %1235 = vset.pattern.permute.xlu0 0
    %1236 = vperm.xlu0 %1235, %v1222
    %v1237 = vpop.permute.xlu0 %1236
    %1240 = vset.pattern.permute.xlu0 0
    %1241 = vperm.xlu0 %1240, %v1223
    %v1242 = vpop.permute.xlu0 %1241
    %v1244 = vmul.f32 %v1104, %v1227
    %v1245 = vmul.f32 %v1105, %v1227
    %v1246 = vmul.f32 %v1106, %v1227
    %v1247 = vmul.f32 %v1107, %v1227
    %v1248 = vmul.f32 %v1112, %v1232
    %v1249 = vmul.f32 %v1113, %v1232
    %v1250 = vmul.f32 %v1114, %v1232
    %v1251 = vmul.f32 %v1115, %v1232
    %v1252 = vmul.f32 %v1120, %v1237
    %v1253 = vmul.f32 %v1121, %v1237
    %v1254 = vmul.f32 %v1122, %v1237
    %v1255 = vmul.f32 %v1123, %v1237
    %v1256 = vmul.f32 %v1128, %v1242
    %v1257 = vmul.f32 %v1129, %v1242
    %v1258 = vmul.f32 %v1130, %v1242
    %v1259 = vmul.f32 %v1131, %v1242
    %v1260 = vld [vmem:[%s6] sm:$0xff]
    %v1261 = vld [vmem:[%s6 + $0x8] sm:$0xff]
    %v1262 = vld [vmem:[%s6 + $0x10] sm:$0xff]
    %v1263 = vld [vmem:[%s6 + $0x18] sm:$0xff]
    %1265 = vset.pattern.permute.xlu0 0
    %1266 = vperm.xlu0 %1265, %v1260
    %v1267 = vpop.permute.xlu0 %1266
    %1270 = vset.pattern.permute.xlu0 0
    %1271 = vperm.xlu0 %1270, %v1261
    %v1272 = vpop.permute.xlu0 %1271
    %1275 = vset.pattern.permute.xlu0 0
    %1276 = vperm.xlu0 %1275, %v1262
    %v1277 = vpop.permute.xlu0 %1276
    %1280 = vset.pattern.permute.xlu0 0
    %1281 = vperm.xlu0 %1280, %v1263
    %v1282 = vpop.permute.xlu0 %1281
    %v1284 = vadd.f32 %v1244, %v1267
    %v1285 = vadd.f32 %v1245, %v1267
    %v1286 = vadd.f32 %v1246, %v1267
    %v1287 = vadd.f32 %v1247, %v1267
    %v1288 = vadd.f32 %v1248, %v1272
    %v1289 = vadd.f32 %v1249, %v1272
    %v1290 = vadd.f32 %v1250, %v1272
    %v1291 = vadd.f32 %v1251, %v1272
    %v1292 = vadd.f32 %v1252, %v1277
    %v1293 = vadd.f32 %v1253, %v1277
    %v1294 = vadd.f32 %v1254, %v1277
    %v1295 = vadd.f32 %v1255, %v1277
    %v1296 = vadd.f32 %v1256, %v1282
    %v1297 = vadd.f32 %v1257, %v1282
    %v1298 = vadd.f32 %v1258, %v1282
    %v1299 = vadd.f32 %v1259, %v1282
    %v1300 = vpack.c.bf16 %v1285, %v1284
    %v1301 = vpack.c.bf16 %v1287, %v1286
    %v1302 = vpack.c.bf16 %v1289, %v1288
    %v1303 = vpack.c.bf16 %v1291, %v1290
    %v1304 = vpack.c.bf16 %v1293, %v1292
    %v1305 = vpack.c.bf16 %v1295, %v1294
    %v1306 = vpack.c.bf16 %v1297, %v1296
    %v1307 = vpack.c.bf16 %v1299, %v1298
    %v1308 = vpack.c.bf16 %v253, %v214
    %v1309 = vpack.c.bf16 %v331, %v292
    %v1310 = vpack.c.bf16 %v255, %v216
    %v1311 = vpack.c.bf16 %v333, %v294
    %v1312 = vpack.c.bf16 %v258, %v219
    %v1313 = vpack.c.bf16 %v336, %v297
    %v1314 = vpack.c.bf16 %v260, %v221
    %v1315 = vpack.c.bf16 %v338, %v299
    %v1316 = vld [vmem:[%s12] sm:$0xff]
    %v1317 = vld [vmem:[%s12 + $0x8] sm:$0xff]
    %v1318 = vld [vmem:[%s12 + $0x10] sm:$0xff]
    %v1319 = vld [vmem:[%s12 + $0x18] sm:$0xff]
    %v1324 = vunpack.c.l.b16 %v1300
    %v1325 = vunpack.c.h.b16 %v1300
    %v1326 = vunpack.c.l.b16 %v1302
    %v1327 = vunpack.c.h.b16 %v1302
    %v1328 = vunpack.c.l.b16 %v1304
    %v1329 = vunpack.c.h.b16 %v1304
    %v1330 = vunpack.c.l.b16 %v1306
    %v1331 = vunpack.c.h.b16 %v1306
    %v1332 = vpack.c.b16 %v1326, %v1324
    %v1333 = vpack.c.b16 %v1327, %v1325
    %v1334 = vpack.c.b16 %v1330, %v1328
    %v1335 = vpack.c.b16 %v1331, %v1329
    %v1344 = vunpack.c.l.b16 %v1212
    %v1345 = vunpack.c.h.b16 %v1212
    %v1346 = vunpack.c.l.b16 %v1214
    %v1347 = vunpack.c.h.b16 %v1214
    %v1348 = vunpack.c.l.b16 %v1216
    %v1349 = vunpack.c.h.b16 %v1216
    %v1350 = vunpack.c.l.b16 %v1218
    %v1351 = vunpack.c.h.b16 %v1218
    %v1352 = vpack.c.b16 %v1346, %v1344
    %v1353 = vpack.c.b16 %v1347, %v1345
    %v1354 = vpack.c.b16 %v1350, %v1348
    %v1355 = vpack.c.b16 %v1351, %v1349
    %1360 = vmatpush.bf16.xpose.msra.mxu0 0
    %1361 = vmatpush.bf16.xpose.msra.mxu0 0
    %1362 = vmatpush.bf16.xpose.msra.mxu0 0
    %1363 = vmatpush.bf16.xpose.msra.mxu0 0
    %1364 = vmatpush.bf16.xpose.msra.mxu0 0
    %1365 = vmatpush.bf16.xpose.msra.mxu0 0
    %1366 = vmatpush.bf16.xpose.msra.mxu0 %v1354
    %1367 = vmatpush.bf16.xpose.msra.mxu0 %v1352
    %1368 = vmatmul.bf16.gmra.mxu0 %v1332
    %v1369 = vpop.f32.mrf.mxu0
    %v1370 = vadd.f32 0.0, %v1369
    %v1371 = vpop.f32.mrf.mxu0
    %v1372 = vadd.f32 0.0, %v1371
    %1373 = vmatmul.bf16.gmra.mxu0 %v1334
    %v1374 = vpop.f32.mrf.mxu0
    %v1375 = vadd.f32 0.0, %v1374
    %v1376 = vpop.f32.mrf.mxu0
    %v1377 = vadd.f32 0.0, %v1376
    %1378 = vdwg.mxu0
    %1379 = vmatpush.bf16.xpose.msra.mxu0 0
    %1380 = vmatpush.bf16.xpose.msra.mxu0 0
    %1381 = vmatpush.bf16.xpose.msra.mxu0 0
    %1382 = vmatpush.bf16.xpose.msra.mxu0 0
    %1383 = vmatpush.bf16.xpose.msra.mxu0 0
    %1384 = vmatpush.bf16.xpose.msra.mxu0 0
    %1385 = vmatpush.bf16.xpose.msra.mxu0 %v1355
    %1386 = vmatpush.bf16.xpose.msra.mxu0 %v1353
    %1387 = vmatmul.bf16.gmra.mxu0 %v1333
    %v1388 = vpop.f32.mrf.mxu0
    %v1389 = vadd.f32 %v1370, %v1388
    %v1390 = vpop.f32.mrf.mxu0
    %v1391 = vadd.f32 %v1372, %v1390
    %1392 = vmatmul.bf16.gmra.mxu0 %v1335
    %v1393 = vpop.f32.mrf.mxu0
    %v1394 = vadd.f32 %v1375, %v1393
    %v1395 = vpop.f32.mrf.mxu0
    %v1396 = vadd.f32 %v1377, %v1395
    %1397 = vdwg.mxu0
    %v1398 = vmul.f32 %v1389, %v1316
    %v1399 = vmul.f32 %v1391, %v1317
    %v1400 = vmul.f32 %v1394, %v1318
    %v1401 = vmul.f32 %v1396, %v1319
    %v1402 = vpack.c.bf16 %v1399, %v1398
    %v1403 = vpack.c.bf16 %v1401, %v1400
    %v1408 = vunpack.c.l.b16 %v1308
    %v1409 = vunpack.c.h.b16 %v1308
    %v1410 = vunpack.c.l.b16 %v1310
    %v1411 = vunpack.c.h.b16 %v1310
    %v1412 = vunpack.c.l.b16 %v1312
    %v1413 = vunpack.c.h.b16 %v1312
    %v1414 = vunpack.c.l.b16 %v1314
    %v1415 = vunpack.c.h.b16 %v1314
    %v1416 = vpack.c.b16 %v1410, %v1408
    %v1417 = vpack.c.b16 %v1411, %v1409
    %v1418 = vpack.c.b16 %v1414, %v1412
    %v1419 = vpack.c.b16 %v1415, %v1413
    %v1425 = vsel %vm185, %v1402, 0
    %v1428 = vsel %vm185, %v1403, 0
    %1430 = vmatpush.bf16.msra.mxu0 0
    %1431 = vmatpush.bf16.msra.mxu0 0
    %1432 = vmatpush.bf16.msra.mxu0 0
    %1433 = vmatpush.bf16.msra.mxu0 0
    %1434 = vmatpush.bf16.msra.mxu0 0
    %1435 = vmatpush.bf16.msra.mxu0 0
    %1436 = vmatpush.bf16.msra.mxu0 %v1418
    %1437 = vmatpush.bf16.msra.mxu0 %v1416
    %1438 = vmatmul.bf16.gmra.mxu0 %v1425
    %v1439 = vpop.f32.mrf.mxu0
    %v1440 = vadd.f32 0.0, %v1439
    %v1441 = vpop.f32.mrf.mxu0
    %v1442 = vadd.f32 0.0, %v1441
    %1443 = vmatmul.bf16.gmra.mxu0 %v1428
    %v1444 = vpop.f32.mrf.mxu0
    %v1445 = vadd.f32 0.0, %v1444
    %v1446 = vpop.f32.mrf.mxu0
    %v1447 = vadd.f32 0.0, %v1446
    %1448 = vdwg.mxu0
    %1449 = vmatpush.bf16.msra.mxu0 0
    %1450 = vmatpush.bf16.msra.mxu0 0
    %1451 = vmatpush.bf16.msra.mxu0 0
    %1452 = vmatpush.bf16.msra.mxu0 0
    %1453 = vmatpush.bf16.msra.mxu0 0
    %1454 = vmatpush.bf16.msra.mxu0 0
    %1455 = vmatpush.bf16.msra.mxu0 %v1419
    %1456 = vmatpush.bf16.msra.mxu0 %v1417
    %1457 = vmatmul.bf16.gmra.mxu0 %v1425
    %v1458 = vpop.f32.mrf.mxu0
    %v1459 = vadd.f32 0.0, %v1458
    %v1460 = vpop.f32.mrf.mxu0
    %v1461 = vadd.f32 0.0, %v1460
    %1462 = vmatmul.bf16.gmra.mxu0 %v1428
    %v1463 = vpop.f32.mrf.mxu0
    %v1464 = vadd.f32 0.0, %v1463
    %v1465 = vpop.f32.mrf.mxu0
    %v1466 = vadd.f32 0.0, %v1465
    %1467 = vdwg.mxu0
    %v1472 = vunpack.c.l.b16 %v1301
    %v1473 = vunpack.c.h.b16 %v1301
    %v1474 = vunpack.c.l.b16 %v1303
    %v1475 = vunpack.c.h.b16 %v1303
    %v1476 = vunpack.c.l.b16 %v1305
    %v1477 = vunpack.c.h.b16 %v1305
    %v1478 = vunpack.c.l.b16 %v1307
    %v1479 = vunpack.c.h.b16 %v1307
    %v1480 = vpack.c.b16 %v1474, %v1472
    %v1481 = vpack.c.b16 %v1475, %v1473
    %v1482 = vpack.c.b16 %v1478, %v1476
    %v1483 = vpack.c.b16 %v1479, %v1477
    %v1492 = vunpack.c.l.b16 %v1213
    %v1493 = vunpack.c.h.b16 %v1213
    %v1494 = vunpack.c.l.b16 %v1215
    %v1495 = vunpack.c.h.b16 %v1215
    %v1496 = vunpack.c.l.b16 %v1217
    %v1497 = vunpack.c.h.b16 %v1217
    %v1498 = vunpack.c.l.b16 %v1219
    %v1499 = vunpack.c.h.b16 %v1219
    %v1500 = vpack.c.b16 %v1494, %v1492
    %v1501 = vpack.c.b16 %v1495, %v1493
    %v1502 = vpack.c.b16 %v1498, %v1496
    %v1503 = vpack.c.b16 %v1499, %v1497
    %1508 = vmatpush.bf16.xpose.msra.mxu0 0
    %1509 = vmatpush.bf16.xpose.msra.mxu0 0
    %1510 = vmatpush.bf16.xpose.msra.mxu0 0
    %1511 = vmatpush.bf16.xpose.msra.mxu0 0
    %1512 = vmatpush.bf16.xpose.msra.mxu0 0
    %1513 = vmatpush.bf16.xpose.msra.mxu0 0
    %1514 = vmatpush.bf16.xpose.msra.mxu0 %v1502
    %1515 = vmatpush.bf16.xpose.msra.mxu0 %v1500
    %1516 = vmatmul.bf16.gmra.mxu0 %v1480
    %v1517 = vpop.f32.mrf.mxu0
    %v1518 = vadd.f32 0.0, %v1517
    %v1519 = vpop.f32.mrf.mxu0
    %v1520 = vadd.f32 0.0, %v1519
    %1521 = vmatmul.bf16.gmra.mxu0 %v1482
    %v1522 = vpop.f32.mrf.mxu0
    %v1523 = vadd.f32 0.0, %v1522
    %v1524 = vpop.f32.mrf.mxu0
    %v1525 = vadd.f32 0.0, %v1524
    %1526 = vdwg.mxu0
    %1527 = vmatpush.bf16.xpose.msra.mxu0 0
    %1528 = vmatpush.bf16.xpose.msra.mxu0 0
    %1529 = vmatpush.bf16.xpose.msra.mxu0 0
    %1530 = vmatpush.bf16.xpose.msra.mxu0 0
    %1531 = vmatpush.bf16.xpose.msra.mxu0 0
    %1532 = vmatpush.bf16.xpose.msra.mxu0 0
    %1533 = vmatpush.bf16.xpose.msra.mxu0 %v1503
    %1534 = vmatpush.bf16.xpose.msra.mxu0 %v1501
    %1535 = vmatmul.bf16.gmra.mxu0 %v1481
    %v1536 = vpop.f32.mrf.mxu0
    %v1537 = vadd.f32 %v1518, %v1536
    %v1538 = vpop.f32.mrf.mxu0
    %v1539 = vadd.f32 %v1520, %v1538
    %1540 = vmatmul.bf16.gmra.mxu0 %v1483
    %v1541 = vpop.f32.mrf.mxu0
    %v1542 = vadd.f32 %v1523, %v1541
    %v1543 = vpop.f32.mrf.mxu0
    %v1544 = vadd.f32 %v1525, %v1543
    %1545 = vdwg.mxu0
    %v1546 = vmul.f32 %v1537, %v1316
    %v1547 = vmul.f32 %v1539, %v1317
    %v1548 = vmul.f32 %v1542, %v1318
    %v1549 = vmul.f32 %v1544, %v1319
    %v1550 = vpack.c.bf16 %v1547, %v1546
    %v1551 = vpack.c.bf16 %v1549, %v1548
    %v1556 = vunpack.c.l.b16 %v1309
    %v1557 = vunpack.c.h.b16 %v1309
    %v1558 = vunpack.c.l.b16 %v1311
    %v1559 = vunpack.c.h.b16 %v1311
    %v1560 = vunpack.c.l.b16 %v1313
    %v1561 = vunpack.c.h.b16 %v1313
    %v1562 = vunpack.c.l.b16 %v1315
    %v1563 = vunpack.c.h.b16 %v1315
    %v1564 = vpack.c.b16 %v1558, %v1556
    %v1565 = vpack.c.b16 %v1559, %v1557
    %v1566 = vpack.c.b16 %v1562, %v1560
    %v1567 = vpack.c.b16 %v1563, %v1561
    %v1573 = vsel %vm185, %v1550, 0
    %v1576 = vsel %vm185, %v1551, 0
    %1578 = vmatpush.bf16.msra.mxu0 0
    %1579 = vmatpush.bf16.msra.mxu0 0
    %1580 = vmatpush.bf16.msra.mxu0 0
    %1581 = vmatpush.bf16.msra.mxu0 0
    %1582 = vmatpush.bf16.msra.mxu0 0
    %1583 = vmatpush.bf16.msra.mxu0 0
    %1584 = vmatpush.bf16.msra.mxu0 %v1566
    %1585 = vmatpush.bf16.msra.mxu0 %v1564
    %1586 = vmatmul.bf16.gmra.mxu0 %v1573
    %v1587 = vpop.f32.mrf.mxu0
    %v1588 = vadd.f32 0.0, %v1587
    %v1589 = vpop.f32.mrf.mxu0
    %v1590 = vadd.f32 0.0, %v1589
    %1591 = vmatmul.bf16.gmra.mxu0 %v1576
    %v1592 = vpop.f32.mrf.mxu0
    %v1593 = vadd.f32 0.0, %v1592
    %v1594 = vpop.f32.mrf.mxu0
    %v1595 = vadd.f32 0.0, %v1594
    %1596 = vdwg.mxu0
    %1597 = vmatpush.bf16.msra.mxu0 0
    %1598 = vmatpush.bf16.msra.mxu0 0
    %1599 = vmatpush.bf16.msra.mxu0 0
    %1600 = vmatpush.bf16.msra.mxu0 0
    %1601 = vmatpush.bf16.msra.mxu0 0
    %1602 = vmatpush.bf16.msra.mxu0 0
    %1603 = vmatpush.bf16.msra.mxu0 %v1567
    %1604 = vmatpush.bf16.msra.mxu0 %v1565
    %1605 = vmatmul.bf16.gmra.mxu0 %v1573
    %v1606 = vpop.f32.mrf.mxu0
    %v1607 = vadd.f32 0.0, %v1606
    %v1608 = vpop.f32.mrf.mxu0
    %v1609 = vadd.f32 0.0, %v1608
    %1610 = vmatmul.bf16.gmra.mxu0 %v1576
    %v1611 = vpop.f32.mrf.mxu0
    %v1612 = vadd.f32 0.0, %v1611
    %v1613 = vpop.f32.mrf.mxu0
    %v1614 = vadd.f32 0.0, %v1613
    %1615 = vdwg.mxu0
    %v1616 = vadd.f32 %v1440, %v46
    %v1617 = vadd.f32 %v1459, %v47
    %v1618 = vadd.f32 %v1588, %v55
    %v1619 = vadd.f32 %v1607, %v56
    %v1620 = vadd.f32 %v1442, %v48
    %v1621 = vadd.f32 %v1461, %v49
    %v1622 = vadd.f32 %v1590, %v57
    %v1623 = vadd.f32 %v1609, %v58
    %v1624 = vadd.f32 %v1445, %v50
    %v1625 = vadd.f32 %v1464, %v51
    %v1626 = vadd.f32 %v1593, %v59
    %v1627 = vadd.f32 %v1612, %v60
    %v1628 = vadd.f32 %v1447, %v52
    %v1629 = vadd.f32 %v1466, %v53
    %v1630 = vadd.f32 %v1595, %v61
    %v1631 = vadd.f32 %v1614, %v62
    %v1632 = vld [vmem:[%s7] sm:$0xf]
    %v1633 = vld [vmem:[%s7 + $0x4] sm:$0xf]
    %v1634 = vld [vmem:[%s7 + $0x8] sm:$0xf]
    %v1635 = vld [vmem:[%s7 + $0xc] sm:$0xf]
    %v1636 = vpack.c.bf16 %v1620, %v1616
    %v1637 = vpack.c.bf16 %v1621, %v1617
    %v1638 = vpack.c.bf16 %v1622, %v1618
    %v1639 = vpack.c.bf16 %v1623, %v1619
    %v1640 = vpack.c.bf16 %v1628, %v1624
    %v1641 = vpack.c.bf16 %v1629, %v1625
    %v1642 = vpack.c.bf16 %v1630, %v1626
    %v1643 = vpack.c.bf16 %v1631, %v1627
    %v1644 = vld [vmem:[%s8] sm:$0xff]
    %v1645 = vld [vmem:[%s8 + $0x8] sm:$0xff]
    %v1646 = vld [vmem:[%s8 + $0x10] sm:$0xff]
    %v1647 = vld [vmem:[%s8 + $0x18] sm:$0xff]
    %1649 = vset.pattern.permute.xlu0 0
    %1650 = vperm.xlu0 %1649, %v1644
    %v1651 = vpop.permute.xlu0 %1650
    %1654 = vset.pattern.permute.xlu0 0
    %1655 = vperm.xlu0 %1654, %v1645
    %v1656 = vpop.permute.xlu0 %1655
    %1659 = vset.pattern.permute.xlu0 0
    %1660 = vperm.xlu0 %1659, %v1646
    %v1661 = vpop.permute.xlu0 %1660
    %1664 = vset.pattern.permute.xlu0 0
    %1665 = vperm.xlu0 %1664, %v1647
    %v1666 = vpop.permute.xlu0 %1665
    %v1672 = vunpack.c.l.b16 %v1632
    %v1673 = vunpack.c.l.b16 %v1633
    %v1674 = vunpack.c.l.b16 %v1634
    %v1675 = vunpack.c.l.b16 %v1635
    %v1676 = vpack.c.b16 %v1673, %v1672
    %v1677 = vpack.c.b16 %v1675, %v1674
    %v1679 = vsel %vm185, %v1676, 0
    %v1682 = vsel %vm185, %v1677, 0
    %1684 = vmatpush.bf16.msra.mxu0 0
    %1685 = vmatpush.bf16.msra.mxu0 0
    %1686 = vmatpush.bf16.msra.mxu0 0
    %1687 = vmatpush.bf16.msra.mxu0 0
    %1688 = vmatpush.bf16.msra.mxu0 0
    %1689 = vmatpush.bf16.msra.mxu0 0
    %1690 = vmatpush.bf16.msra.mxu0 %v1640
    %1691 = vmatpush.bf16.msra.mxu0 %v1636
    %1692 = vmatmul.bf16.gmra.mxu0 %v1679
    %v1693 = vpop.f32.mrf.mxu0
    %v1694 = vadd.f32 %v1651, %v1693
    %v1695 = vpop.f32.mrf.mxu0
    %v1696 = vadd.f32 %v1656, %v1695
    %1697 = vmatmul.bf16.gmra.mxu0 %v1682
    %v1698 = vpop.f32.mrf.mxu0
    %v1699 = vadd.f32 %v1661, %v1698
    %v1700 = vpop.f32.mrf.mxu0
    %v1701 = vadd.f32 %v1666, %v1700
    %1702 = vdwg.mxu0
    %1703 = vmatpush.bf16.msra.mxu0 0
    %1704 = vmatpush.bf16.msra.mxu0 0
    %1705 = vmatpush.bf16.msra.mxu0 0
    %1706 = vmatpush.bf16.msra.mxu0 0
    %1707 = vmatpush.bf16.msra.mxu0 0
    %1708 = vmatpush.bf16.msra.mxu0 0
    %1709 = vmatpush.bf16.msra.mxu0 %v1641
    %1710 = vmatpush.bf16.msra.mxu0 %v1637
    %1711 = vmatmul.bf16.gmra.mxu0 %v1679
    %v1712 = vpop.f32.mrf.mxu0
    %v1713 = vadd.f32 %v1651, %v1712
    %v1714 = vpop.f32.mrf.mxu0
    %v1715 = vadd.f32 %v1656, %v1714
    %1716 = vmatmul.bf16.gmra.mxu0 %v1682
    %v1717 = vpop.f32.mrf.mxu0
    %v1718 = vadd.f32 %v1661, %v1717
    %v1719 = vpop.f32.mrf.mxu0
    %v1720 = vadd.f32 %v1666, %v1719
    %1721 = vdwg.mxu0
    %1722 = vmatpush.bf16.msra.mxu0 0
    %1723 = vmatpush.bf16.msra.mxu0 0
    %1724 = vmatpush.bf16.msra.mxu0 0
    %1725 = vmatpush.bf16.msra.mxu0 0
    %1726 = vmatpush.bf16.msra.mxu0 0
    %1727 = vmatpush.bf16.msra.mxu0 0
    %1728 = vmatpush.bf16.msra.mxu0 %v1642
    %1729 = vmatpush.bf16.msra.mxu0 %v1638
    %1730 = vmatmul.bf16.gmra.mxu0 %v1679
    %v1731 = vpop.f32.mrf.mxu0
    %v1732 = vadd.f32 %v1651, %v1731
    %v1733 = vpop.f32.mrf.mxu0
    %v1734 = vadd.f32 %v1656, %v1733
    %1735 = vmatmul.bf16.gmra.mxu0 %v1682
    %v1736 = vpop.f32.mrf.mxu0
    %v1737 = vadd.f32 %v1661, %v1736
    %v1738 = vpop.f32.mrf.mxu0
    %v1739 = vadd.f32 %v1666, %v1738
    %1740 = vdwg.mxu0
    %1741 = vmatpush.bf16.msra.mxu0 0
    %1742 = vmatpush.bf16.msra.mxu0 0
    %1743 = vmatpush.bf16.msra.mxu0 0
    %1744 = vmatpush.bf16.msra.mxu0 0
    %1745 = vmatpush.bf16.msra.mxu0 0
    %1746 = vmatpush.bf16.msra.mxu0 0
    %1747 = vmatpush.bf16.msra.mxu0 %v1643
    %1748 = vmatpush.bf16.msra.mxu0 %v1639
    %1749 = vmatmul.bf16.gmra.mxu0 %v1679
    %v1750 = vpop.f32.mrf.mxu0
    %v1751 = vadd.f32 %v1651, %v1750
    %v1752 = vpop.f32.mrf.mxu0
    %v1753 = vadd.f32 %v1656, %v1752
    %1754 = vmatmul.bf16.gmra.mxu0 %v1682
    %v1755 = vpop.f32.mrf.mxu0
    %v1756 = vadd.f32 %v1661, %v1755
    %v1757 = vpop.f32.mrf.mxu0
    %v1758 = vadd.f32 %v1666, %v1757
    %1759 = vdwg.mxu0
    %v1760 = vmul.f32 %v1694, 0.5
    %v1761 = vmul.f32 %v1713, 0.5
    %v1762 = vmul.f32 %v1732, 0.5
    %v1763 = vmul.f32 %v1751, 0.5
    %v1764 = vmul.f32 %v1696, 0.5
    %v1765 = vmul.f32 %v1715, 0.5
    %v1766 = vmul.f32 %v1734, 0.5
    %v1767 = vmul.f32 %v1753, 0.5
    %v1768 = vmul.f32 %v1699, 0.5
    %v1769 = vmul.f32 %v1718, 0.5
    %v1770 = vmul.f32 %v1737, 0.5
    %v1771 = vmul.f32 %v1756, 0.5
    %v1772 = vmul.f32 %v1701, 0.5
    %v1773 = vmul.f32 %v1720, 0.5
    %v1774 = vmul.f32 %v1739, 0.5
    %v1775 = vmul.f32 %v1758, 0.5
    %v1776 = vmul.f32 %v1694, 0.044715
    %v1777 = vmul.f32 %v1713, 0.044715
    %v1778 = vmul.f32 %v1732, 0.044715
    %v1779 = vmul.f32 %v1751, 0.044715
    %v1780 = vmul.f32 %v1696, 0.044715
    %v1781 = vmul.f32 %v1715, 0.044715
    %v1782 = vmul.f32 %v1734, 0.044715
    %v1783 = vmul.f32 %v1753, 0.044715
    %v1784 = vmul.f32 %v1699, 0.044715
    %v1785 = vmul.f32 %v1718, 0.044715
    %v1786 = vmul.f32 %v1737, 0.044715
    %v1787 = vmul.f32 %v1756, 0.044715
    %v1788 = vmul.f32 %v1701, 0.044715
    %v1789 = vmul.f32 %v1720, 0.044715
    %v1790 = vmul.f32 %v1739, 0.044715
    %v1791 = vmul.f32 %v1758, 0.044715
    %v1792 = vmul.f32 %v1776, %v1694
    %v1793 = vmul.f32 %v1777, %v1713
    %v1794 = vmul.f32 %v1778, %v1732
    %v1795 = vmul.f32 %v1779, %v1751
    %v1796 = vmul.f32 %v1780, %v1696
    %v1797 = vmul.f32 %v1781, %v1715
    %v1798 = vmul.f32 %v1782, %v1734
    %v1799 = vmul.f32 %v1783, %v1753
    %v1800 = vmul.f32 %v1784, %v1699
    %v1801 = vmul.f32 %v1785, %v1718
    %v1802 = vmul.f32 %v1786, %v1737
    %v1803 = vmul.f32 %v1787, %v1756
    %v1804 = vmul.f32 %v1788, %v1701
    %v1805 = vmul.f32 %v1789, %v1720
    %v1806 = vmul.f32 %v1790, %v1739
    %v1807 = vmul.f32 %v1791, %v1758
    %v1808 = vmul.f32 %v1792, %v1694
    %v1809 = vmul.f32 %v1793, %v1713
    %v1810 = vmul.f32 %v1794, %v1732
    %v1811 = vmul.f32 %v1795, %v1751
    %v1812 = vmul.f32 %v1796, %v1696
    %v1813 = vmul.f32 %v1797, %v1715
    %v1814 = vmul.f32 %v1798, %v1734
    %v1815 = vmul.f32 %v1799, %v1753
    %v1816 = vmul.f32 %v1800, %v1699
    %v1817 = vmul.f32 %v1801, %v1718
    %v1818 = vmul.f32 %v1802, %v1737
    %v1819 = vmul.f32 %v1803, %v1756
    %v1820 = vmul.f32 %v1804, %v1701
    %v1821 = vmul.f32 %v1805, %v1720
    %v1822 = vmul.f32 %v1806, %v1739
    %v1823 = vmul.f32 %v1807, %v1758
    %v1824 = vadd.f32 %v1694, %v1808
    %v1825 = vadd.f32 %v1713, %v1809
    %v1826 = vadd.f32 %v1732, %v1810
    %v1827 = vadd.f32 %v1751, %v1811
    %v1828 = vadd.f32 %v1696, %v1812
    %v1829 = vadd.f32 %v1715, %v1813
    %v1830 = vadd.f32 %v1734, %v1814
    %v1831 = vadd.f32 %v1753, %v1815
    %v1832 = vadd.f32 %v1699, %v1816
    %v1833 = vadd.f32 %v1718, %v1817
    %v1834 = vadd.f32 %v1737, %v1818
    %v1835 = vadd.f32 %v1756, %v1819
    %v1836 = vadd.f32 %v1701, %v1820
    %v1837 = vadd.f32 %v1720, %v1821
    %v1838 = vadd.f32 %v1739, %v1822
    %v1839 = vadd.f32 %v1758, %v1823
    %v1840 = vmul.f32 %v1824, 0.7978846
    %v1841 = vmul.f32 %v1825, 0.7978846
    %v1842 = vmul.f32 %v1826, 0.7978846
    %v1843 = vmul.f32 %v1827, 0.7978846
    %v1844 = vmul.f32 %v1828, 0.7978846
    %v1845 = vmul.f32 %v1829, 0.7978846
    %v1846 = vmul.f32 %v1830, 0.7978846
    %v1847 = vmul.f32 %v1831, 0.7978846
    %v1848 = vmul.f32 %v1832, 0.7978846
    %v1849 = vmul.f32 %v1833, 0.7978846
    %v1850 = vmul.f32 %v1834, 0.7978846
    %v1851 = vmul.f32 %v1835, 0.7978846
    %v1852 = vmul.f32 %v1836, 0.7978846
    %v1853 = vmul.f32 %v1837, 0.7978846
    %v1854 = vmul.f32 %v1838, 0.7978846
    %v1855 = vmul.f32 %v1839, 0.7978846
    %v1856 = vtanh.pop %v1840
    %v1857 = vtanh.pop %v1841
    %v1858 = vtanh.pop %v1842
    %v1859 = vtanh.pop %v1843
    %v1860 = vtanh.pop %v1844
    %v1861 = vtanh.pop %v1845
    %v1862 = vtanh.pop %v1846
    %v1863 = vtanh.pop %v1847
    %v1864 = vtanh.pop %v1848
    %v1865 = vtanh.pop %v1849
    %v1866 = vtanh.pop %v1850
    %v1867 = vtanh.pop %v1851
    %v1868 = vtanh.pop %v1852
    %v1869 = vtanh.pop %v1853
    %v1870 = vtanh.pop %v1854
    %v1871 = vtanh.pop %v1855
    %v1872 = vadd.f32 %v1856, 1.0
    %v1873 = vadd.f32 %v1857, 1.0
    %v1874 = vadd.f32 %v1858, 1.0
    %v1875 = vadd.f32 %v1859, 1.0
    %v1876 = vadd.f32 %v1860, 1.0
    %v1877 = vadd.f32 %v1861, 1.0
    %v1878 = vadd.f32 %v1862, 1.0
    %v1879 = vadd.f32 %v1863, 1.0
    %v1880 = vadd.f32 %v1864, 1.0
    %v1881 = vadd.f32 %v1865, 1.0
    %v1882 = vadd.f32 %v1866, 1.0
    %v1883 = vadd.f32 %v1867, 1.0
    %v1884 = vadd.f32 %v1868, 1.0
    %v1885 = vadd.f32 %v1869, 1.0
    %v1886 = vadd.f32 %v1870, 1.0
    %v1887 = vadd.f32 %v1871, 1.0
    %v1888 = vmul.f32 %v1760, %v1872
    %v1889 = vmul.f32 %v1761, %v1873
    %v1890 = vmul.f32 %v1762, %v1874
    %v1891 = vmul.f32 %v1763, %v1875
    %v1892 = vmul.f32 %v1764, %v1876
    %v1893 = vmul.f32 %v1765, %v1877
    %v1894 = vmul.f32 %v1766, %v1878
    %v1895 = vmul.f32 %v1767, %v1879
    %v1896 = vmul.f32 %v1768, %v1880
    %v1897 = vmul.f32 %v1769, %v1881
    %v1898 = vmul.f32 %v1770, %v1882
    %v1899 = vmul.f32 %v1771, %v1883
    %v1900 = vmul.f32 %v1772, %v1884
    %v1901 = vmul.f32 %v1773, %v1885
    %v1902 = vmul.f32 %v1774, %v1886
    %v1903 = vmul.f32 %v1775, %v1887
    %v1904 = vld [vmem:[%s9] sm:$0xf]
    %v1905 = vld [vmem:[%s9 + $0x4] sm:$0xf]
    %v1906 = vld [vmem:[%s9 + $0x8] sm:$0xf]
    %v1907 = vld [vmem:[%s9 + $0xc] sm:$0xf]
    %v1908 = vpack.c.bf16 %v1892, %v1888
    %v1909 = vpack.c.bf16 %v1893, %v1889
    %v1910 = vpack.c.bf16 %v1894, %v1890
    %v1911 = vpack.c.bf16 %v1895, %v1891
    %v1912 = vpack.c.bf16 %v1900, %v1896
    %v1913 = vpack.c.bf16 %v1901, %v1897
    %v1914 = vpack.c.bf16 %v1902, %v1898
    %v1915 = vpack.c.bf16 %v1903, %v1899
    %v1916 = vld [vmem:[%s10] sm:$0xff]
    %v1917 = vld [vmem:[%s10 + $0x8] sm:$0xff]
    %v1918 = vld [vmem:[%s10 + $0x10] sm:$0xff]
    %v1919 = vld [vmem:[%s10 + $0x18] sm:$0xff]
    %1921 = vset.pattern.permute.xlu0 0
    %1922 = vperm.xlu0 %1921, %v1916
    %v1923 = vpop.permute.xlu0 %1922
    %1926 = vset.pattern.permute.xlu0 0
    %1927 = vperm.xlu0 %1926, %v1917
    %v1928 = vpop.permute.xlu0 %1927
    %1931 = vset.pattern.permute.xlu0 0
    %1932 = vperm.xlu0 %1931, %v1918
    %v1933 = vpop.permute.xlu0 %1932
    %1936 = vset.pattern.permute.xlu0 0
    %1937 = vperm.xlu0 %1936, %v1919
    %v1938 = vpop.permute.xlu0 %1937
    %v1944 = vunpack.c.l.b16 %v1904
    %v1945 = vunpack.c.l.b16 %v1905
    %v1946 = vunpack.c.l.b16 %v1906
    %v1947 = vunpack.c.l.b16 %v1907
    %v1948 = vpack.c.b16 %v1945, %v1944
    %v1949 = vpack.c.b16 %v1947, %v1946
    %v1951 = vsel %vm185, %v1948, 0
    %v1954 = vsel %vm185, %v1949, 0
    %1956 = vmatpush.bf16.msra.mxu0 0
    %1957 = vmatpush.bf16.msra.mxu0 0
    %1958 = vmatpush.bf16.msra.mxu0 0
    %1959 = vmatpush.bf16.msra.mxu0 0
    %1960 = vmatpush.bf16.msra.mxu0 0
    %1961 = vmatpush.bf16.msra.mxu0 0
    %1962 = vmatpush.bf16.msra.mxu0 %v1912
    %1963 = vmatpush.bf16.msra.mxu0 %v1908
    %1964 = vmatmul.bf16.gmra.mxu0 %v1951
    %v1965 = vpop.f32.mrf.mxu0
    %v1966 = vadd.f32 %v1923, %v1965
    %v1967 = vpop.f32.mrf.mxu0
    %v1968 = vadd.f32 %v1928, %v1967
    %1969 = vmatmul.bf16.gmra.mxu0 %v1954
    %v1970 = vpop.f32.mrf.mxu0
    %v1971 = vadd.f32 %v1933, %v1970
    %v1972 = vpop.f32.mrf.mxu0
    %v1973 = vadd.f32 %v1938, %v1972
    %1974 = vdwg.mxu0
    %1975 = vmatpush.bf16.msra.mxu0 0
    %1976 = vmatpush.bf16.msra.mxu0 0
    %1977 = vmatpush.bf16.msra.mxu0 0
    %1978 = vmatpush.bf16.msra.mxu0 0
    %1979 = vmatpush.bf16.msra.mxu0 0
    %1980 = vmatpush.bf16.msra.mxu0 0
    %1981 = vmatpush.bf16.msra.mxu0 %v1913
    %1982 = vmatpush.bf16.msra.mxu0 %v1909
    %1983 = vmatmul.bf16.gmra.mxu0 %v1951
    %v1984 = vpop.f32.mrf.mxu0
    %v1985 = vadd.f32 %v1923, %v1984
    %v1986 = vpop.f32.mrf.mxu0
    %v1987 = vadd.f32 %v1928, %v1986
    %1988 = vmatmul.bf16.gmra.mxu0 %v1954
    %v1989 = vpop.f32.mrf.mxu0
    %v1990 = vadd.f32 %v1933, %v1989
    %v1991 = vpop.f32.mrf.mxu0
    %v1992 = vadd.f32 %v1938, %v1991
    %1993 = vdwg.mxu0
    %1994 = vmatpush.bf16.msra.mxu0 0
    %1995 = vmatpush.bf16.msra.mxu0 0
    %1996 = vmatpush.bf16.msra.mxu0 0
    %1997 = vmatpush.bf16.msra.mxu0 0
    %1998 = vmatpush.bf16.msra.mxu0 0
    %1999 = vmatpush.bf16.msra.mxu0 0
    %2000 = vmatpush.bf16.msra.mxu0 %v1914
    %2001 = vmatpush.bf16.msra.mxu0 %v1910
    %2002 = vmatmul.bf16.gmra.mxu0 %v1951
    %v2003 = vpop.f32.mrf.mxu0
    %v2004 = vadd.f32 %v1923, %v2003
    %v2005 = vpop.f32.mrf.mxu0
    %v2006 = vadd.f32 %v1928, %v2005
    %2007 = vmatmul.bf16.gmra.mxu0 %v1954
    %v2008 = vpop.f32.mrf.mxu0
    %v2009 = vadd.f32 %v1933, %v2008
    %v2010 = vpop.f32.mrf.mxu0
    %v2011 = vadd.f32 %v1938, %v2010
    %2012 = vdwg.mxu0
    %2013 = vmatpush.bf16.msra.mxu0 0
    %2014 = vmatpush.bf16.msra.mxu0 0
    %2015 = vmatpush.bf16.msra.mxu0 0
    %2016 = vmatpush.bf16.msra.mxu0 0
    %2017 = vmatpush.bf16.msra.mxu0 0
    %2018 = vmatpush.bf16.msra.mxu0 0
    %2019 = vmatpush.bf16.msra.mxu0 %v1915
    %2020 = vmatpush.bf16.msra.mxu0 %v1911
    %2021 = vmatmul.bf16.gmra.mxu0 %v1951
    %v2022 = vpop.f32.mrf.mxu0
    %v2023 = vadd.f32 %v1923, %v2022
    %v2024 = vpop.f32.mrf.mxu0
    %v2025 = vadd.f32 %v1928, %v2024
    %2026 = vmatmul.bf16.gmra.mxu0 %v1954
    %v2027 = vpop.f32.mrf.mxu0
    %v2028 = vadd.f32 %v1933, %v2027
    %v2029 = vpop.f32.mrf.mxu0
    %v2030 = vadd.f32 %v1938, %v2029
    %2031 = vdwg.mxu0
    %v2032 = vadd.f32 %v1966, %v46
    %v2033 = vadd.f32 %v1985, %v47
    %v2034 = vadd.f32 %v2004, %v55
    %v2035 = vadd.f32 %v2023, %v56
    %v2036 = vadd.f32 %v1968, %v48
    %v2037 = vadd.f32 %v1987, %v49
    %v2038 = vadd.f32 %v2006, %v57
    %v2039 = vadd.f32 %v2025, %v58
    %v2040 = vadd.f32 %v1971, %v50
    %v2041 = vadd.f32 %v1990, %v51
    %v2042 = vadd.f32 %v2009, %v59
    %v2043 = vadd.f32 %v2028, %v60
    %v2044 = vadd.f32 %v1973, %v52
    %v2045 = vadd.f32 %v1992, %v53
    %v2046 = vadd.f32 %v2011, %v61
    %v2047 = vadd.f32 %v2030, %v62
    %2048 = vst [vmem:[#allocation2] sm:$0xff] %v2032
    %2049 = vst [vmem:[#allocation2 + $0x8] sm:$0xff] %v2033
    %2050 = vst [vmem:[#allocation2 + $0x10] sm:$0xff] %v2036
    %2051 = vst [vmem:[#allocation2 + $0x18] sm:$0xff] %v2037
    %2052 = vst [vmem:[#allocation2 + $0x20] sm:$0xff] %v2040
    %2053 = vst [vmem:[#allocation2 + $0x28] sm:$0xff] %v2041
    %2054 = vst [vmem:[#allocation2 + $0x30] sm:$0xff] %v2044
    %2055 = vst [vmem:[#allocation2 + $0x38] sm:$0xff] %v2045
    %s2056 = scalar_lea.vmem [#allocation2], 64
    %2057 = vst [vmem:[%s2056] sm:$0xff] %v2034
    %2058 = vst [vmem:[%s2056 + $0x8] sm:$0xff] %v2035
    %2059 = vst [vmem:[%s2056 + $0x10] sm:$0xff] %v2038
    %2060 = vst [vmem:[%s2056 + $0x18] sm:$0xff] %v2039
    %2061 = vst [vmem:[%s2056 + $0x20] sm:$0xff] %v2042
    %2062 = vst [vmem:[%s2056 + $0x28] sm:$0xff] %v2043
    %2063 = vst [vmem:[%s2056 + $0x30] sm:$0xff] %v2046
    %2064 = vst [vmem:[%s2056 + $0x38] sm:$0xff] %v2047
    // Predicated region
    $region54: #{tpu_custom_call.1} parent=1 // pred_check
      _
    $region55: #{tpu_custom_call.1} parent=1 // pred_check_branch
      %2066 = sbr.rel (0) target = $region57
    $region56: #{tpu_custom_call.1} parent=1 // pred_region
      %2068 = vsyncadd [#allocation3], 0
      %s2069 = sshll.u32 [#allocation2], 4
      %s2070 = int_to_ptr.vmem [resolvable:$true] %s2069
      %s2071 = sshll.u32 %s13, 4
      %s2072 = int_to_ptr.hbm [resolvable:$true] %s2071
      %2077 = dma.vmem_to_hbm [thread:$0]  %s2070, 2048, %s2072, [#allocation3], 256, 256, 16
    $region57: #{tpu_custom_call.1} parent=1 // pred_fallthru
      _
    // Predicated region
    $region58: #{tpu_custom_call.1} parent=1 // pred_check
      _
    $region59: #{tpu_custom_call.1} parent=1 // pred_check_branch
      %2079 = sbr.rel (0) target = $region61
    $region60: #{tpu_custom_call.1} parent=1 // pred_region
      %2081 = dma.done [#allocation3], 2048
    $region61: #{tpu_custom_call.1} parent=1 // pred_fallthru
      _
    %2082 = vsyncpa [#allocation3], 1

// kernel: tpu_custom_call.1
$region0: #{tpu_custom_call.1}
  #allocation0 [shape = 'u32[]', space=smem, size = 0x4, offset = 0x4, fixed_abs, tag = 'smem constant byte address 0x4 - core index']
  #allocation1 [shape = 'u32[72,128]{1,0:T(1,128)}', space=vmem, size = 0x9000, scoped, tag = 'internal scratch']
  %s0 = inlined_call_operand.vmem [shape: f32[2,32,256], index: 0, kind: input, shape index: {}]
  %s1 = inlined_call_operand.vmem [shape: bf16[96,32], index: 1, kind: input, shape index: {}]
  %s2 = inlined_call_operand.vmem [shape: f32[96,1], index: 2, kind: input, shape index: {}]
  %s3 = inlined_call_operand.vmem [shape: f32[32,1], index: 3, kind: input, shape index: {}]
  %s4 = inlined_call_operand.vmem [shape: f32[32,1], index: 4, kind: input, shape index: {}]
  %s5 = inlined_call_operand.vmem [shape: f32[32,1], index: 5, kind: input, shape index: {}]
  %s6 = inlined_call_operand.vmem [shape: f32[32,1], index: 6, kind: input, shape index: {}]
  %s7 = inlined_call_operand.vmem [shape: bf16[32,32], index: 7, kind: input, shape index: {}]
  %s8 = inlined_call_operand.vmem [shape: f32[32,1], index: 8, kind: input, shape index: {}]
  %s9 = inlined_call_operand.vmem [shape: bf16[32,32], index: 9, kind: input, shape index: {}]
  %s10 = inlined_call_operand.vmem [shape: f32[32,1], index: 10, kind: input, shape index: {}]
  %s11 = inlined_call_operand.vmem [shape: bf16[32,32], index: 11, kind: input, shape index: {}]
  %s12 = inlined_call_operand.vmem [shape: f32[32,32], index: 12, kind: input, shape index: {}]
  %s13 = inlined_call_operand.hbm [shape: f32[2,32,256], index: 13, kind: output, shape index: {}]
  %s14 = sld [smem:[#allocation0]]
  $region62: #{tpu_custom_call.1} parent=0
    _
  %s16 = ssub.s32 1, %s14
  %s17 = scalar_select 0, %s16, %s14
  $region1: #{tpu_custom_call.1} parent=0
    #allocation2 [shape = 'u8[65536]{0}', space=vmem, size = 0x10000, scoped, tag = 'output window, operand 0, single buffered']
    #allocation3 [shape = 's32[1]{0}', space=sflag, size = 0x4, scoped, tag = 'scoped memory for tpu_custom_call.1']
    %18 = vsyncpa [#allocation3], 0
    // Predicated region
    $region2: #{tpu_custom_call.1} parent=1 // pred_check
      _
    $region3: #{tpu_custom_call.1} parent=1 // pred_check_branch
      %20 = sbr.rel (0) target = $region5
    $region4: #{tpu_custom_call.1} parent=1 // pred_region
      _
    $region5: #{tpu_custom_call.1} parent=1 // pred_fallthru
      _
    // Predicated region
    $region6: #{tpu_custom_call.1} parent=1 // pred_check
      _
    $region7: #{tpu_custom_call.1} parent=1 // pred_check_branch
      %22 = sbr.rel (0) target = $region9
    $region8: #{tpu_custom_call.1} parent=1 // pred_region
      _
    $region9: #{tpu_custom_call.1} parent=1 // pred_fallthru
      _
    // Predicated region
    $region10: #{tpu_custom_call.1} parent=1 // pred_check
      _
    $region11: #{tpu_custom_call.1} parent=1 // pred_check_branch
      %24 = sbr.rel (0) target = $region13
    $region12: #{tpu_custom_call.1} parent=1 // pred_region
      _
    $region13: #{tpu_custom_call.1} parent=1 // pred_fallthru
      _
    // Predicated region
    $region14: #{tpu_custom_call.1} parent=1 // pred_check
      _
    $region15: #{tpu_custom_call.1} parent=1 // pred_check_branch
      %26 = sbr.rel (0) target = $region17
    $region16: #{tpu_custom_call.1} parent=1 // pred_region
      _
    $region17: #{tpu_custom_call.1} parent=1 // pred_fallthru
      _
    // Predicated region
    $region18: #{tpu_custom_call.1} parent=1 // pred_check
      _
    $region19: #{tpu_custom_call.1} parent=1 // pred_check_branch
      %28 = sbr.rel (0) target = $region21
    $region20: #{tpu_custom_call.1} parent=1 // pred_region
      _
    $region21: #{tpu_custom_call.1} parent=1 // pred_fallthru
      _
    // Predicated region
    $region22: #{tpu_custom_call.1} parent=1 // pred_check
      _
    $region23: #{tpu_custom_call.1} parent=1 // pred_check_branch
      %30 = sbr.rel (0) target = $region25
    $region24: #{tpu_custom_call.1} parent=1 // pred_region
      _
    $region25: #{tpu_custom_call.1} parent=1 // pred_fallthru
      _
    // Predicated region
    $region26: #{tpu_custom_call.1} parent=1 // pred_check
      _
    $region27: #{tpu_custom_call.1} parent=1 // pred_check_branch
      %32 = sbr.rel (0) target = $region29
    $region28: #{tpu_custom_call.1} parent=1 // pred_region
      _
    $region29: #{tpu_custom_call.1} parent=1 // pred_fallthru
      _
    // Predicated region
    $region30: #{tpu_custom_call.1} parent=1 // pred_check
      _
    $region31: #{tpu_custom_call.1} parent=1 // pred_check_branch
      %34 = sbr.rel (0) target = $region33
    $region32: #{tpu_custom_call.1} parent=1 // pred_region
      _
    $region33: #{tpu_custom_call.1} parent=1 // pred_fallthru
      _
    // Predicated region
    $region34: #{tpu_custom_call.1} parent=1 // pred_check
      _
    $region35: #{tpu_custom_call.1} parent=1 // pred_check_branch
      %36 = sbr.rel (0) target = $region37
    $region36: #{tpu_custom_call.1} parent=1 // pred_region
      _
    $region37: #{tpu_custom_call.1} parent=1 // pred_fallthru
      _
    // Predicated region
    $region38: #{tpu_custom_call.1} parent=1 // pred_check
      _
    $region39: #{tpu_custom_call.1} parent=1 // pred_check_branch
      %38 = sbr.rel (0) target = $region41
    $region40: #{tpu_custom_call.1} parent=1 // pred_region
      _
    $region41: #{tpu_custom_call.1} parent=1 // pred_fallthru
      _
    // Predicated region
    $region42: #{tpu_custom_call.1} parent=1 // pred_check
      _
    $region43: #{tpu_custom_call.1} parent=1 // pred_check_branch
      %40 = sbr.rel (0) target = $region45
    $region44: #{tpu_custom_call.1} parent=1 // pred_region
      _
    $region45: #{tpu_custom_call.1} parent=1 // pred_fallthru
      _
    // Predicated region
    $region46: #{tpu_custom_call.1} parent=1 // pred_check
      _
    $region47: #{tpu_custom_call.1} parent=1 // pred_check_branch
      %42 = sbr.rel (0) target = $region49
    $region48: #{tpu_custom_call.1} parent=1 // pred_region
      _
    $region49: #{tpu_custom_call.1} parent=1 // pred_fallthru
      _
    // Predicated region
    $region50: #{tpu_custom_call.1} parent=1 // pred_check
      _
    $region51: #{tpu_custom_call.1} parent=1 // pred_check_branch
      %44 = sbr.rel (0) target = $region53
    $region52: #{tpu_custom_call.1} parent=1 // pred_region
      _
    $region53: #{tpu_custom_call.1} parent=1 // pred_fallthru
      _
    %v46 = vld [vmem:[%s0] sm:$0xff]
    %v47 = vld [vmem:[%s0 + $0x8] sm:$0xff]
    %v48 = vld [vmem:[%s0 + $0x10] sm:$0xff]
    %v49 = vld [vmem:[%s0 + $0x18] sm:$0xff]
    %v50 = vld [vmem:[%s0 + $0x20] sm:$0xff]
    %v51 = vld [vmem:[%s0 + $0x28] sm:$0xff]
    %v52 = vld [vmem:[%s0 + $0x30] sm:$0xff]
    %v53 = vld [vmem:[%s0 + $0x38] sm:$0xff]
    %s54 = scalar_lea.vmem %s0, 64
    %v55 = vld [vmem:[%s54] sm:$0xff]
    %v56 = vld [vmem:[%s54 + $0x8] sm:$0xff]
    %v57 = vld [vmem:[%s54 + $0x10] sm:$0xff]
    %v58 = vld [vmem:[%s54 + $0x18] sm:$0xff]
    %v59 = vld [vmem:[%s54 + $0x20] sm:$0xff]
    %v60 = vld [vmem:[%s54 + $0x28] sm:$0xff]
    %v61 = vld [vmem:[%s54 + $0x30] sm:$0xff]
    %v62 = vld [vmem:[%s54 + $0x38] sm:$0xff]
    %v63 = vpack.c.bf16 %v48, %v46
    %v64 = vpack.c.bf16 %v49, %v47
    %v65 = vpack.c.bf16 %v57, %v55
    %v66 = vpack.c.bf16 %v58, %v56
    %v67 = vpack.c.bf16 %v52, %v50
    %v68 = vpack.c.bf16 %v53, %v51
    %v69 = vpack.c.bf16 %v61, %v59
    %v70 = vpack.c.bf16 %v62, %v60
    %v71 = vld [vmem:[%s1] sm:$0xf]
    %v72 = vld [vmem:[%s1 + $0x4] sm:$0xf]
    %v73 = vld [vmem:[%s1 + $0x8] sm:$0xf]
    %v74 = vld [vmem:[%s1 + $0xc] sm:$0xf]
    %v75 = vld [vmem:[%s1 + $0x10] sm:$0xf]
    %v76 = vld [vmem:[%s1 + $0x14] sm:$0xf]
    %v77 = vld [vmem:[%s1 + $0x18] sm:$0xf]
    %v78 = vld [vmem:[%s1 + $0x1c] sm:$0xf]
    %v79 = vld [vmem:[%s1 + $0x20] sm:$0xf]
    %v80 = vld [vmem:[%s1 + $0x24] sm:$0xf]
    %v81 = vld [vmem:[%s1 + $0x28] sm:$0xf]
    %v82 = vld [vmem:[%s1 + $0x2c] sm:$0xf]
    %v83 = vld [vmem:[%s2] sm:$0xff]
    %v84 = vld [vmem:[%s2 + $0x8] sm:$0xff]
    %v85 = vld [vmem:[%s2 + $0x10] sm:$0xff]
    %v86 = vld [vmem:[%s2 + $0x18] sm:$0xff]
    %v87 = vld [vmem:[%s2 + $0x20] sm:$0xff]
    %v88 = vld [vmem:[%s2 + $0x28] sm:$0xff]
    %v89 = vld [vmem:[%s2 + $0x30] sm:$0xff]
    %v90 = vld [vmem:[%s2 + $0x38] sm:$0xff]
    %v91 = vld [vmem:[%s2 + $0x40] sm:$0xff]
    %v92 = vld [vmem:[%s2 + $0x48] sm:$0xff]
    %v93 = vld [vmem:[%s2 + $0x50] sm:$0xff]
    %v94 = vld [vmem:[%s2 + $0x58] sm:$0xff]
    %96 = vset.pattern.permute.xlu0 0
    %97 = vperm.xlu0 %96, %v83
    %v98 = vpop.permute.xlu0 %97
    %101 = vset.pattern.permute.xlu0 0
    %102 = vperm.xlu0 %101, %v84
    %v103 = vpop.permute.xlu0 %102
    %106 = vset.pattern.permute.xlu0 0
    %107 = vperm.xlu0 %106, %v85
    %v108 = vpop.permute.xlu0 %107
    %111 = vset.pattern.permute.xlu0 0
    %112 = vperm.xlu0 %111, %v86
    %v113 = vpop.permute.xlu0 %112
    %116 = vset.pattern.permute.xlu0 0
    %117 = vperm.xlu0 %116, %v87
    %v118 = vpop.permute.xlu0 %117
    %121 = vset.pattern.permute.xlu0 0
    %122 = vperm.xlu0 %121, %v88
    %v123 = vpop.permute.xlu0 %122
    %126 = vset.pattern.permute.xlu0 0
    %127 = vperm.xlu0 %126, %v89
    %v128 = vpop.permute.xlu0 %127
    %131 = vset.pattern.permute.xlu0 0
    %132 = vperm.xlu0 %131, %v90
    %v133 = vpop.permute.xlu0 %132
    %136 = vset.pattern.permute.xlu0 0
    %137 = vperm.xlu0 %136, %v91
    %v138 = vpop.permute.xlu0 %137
    %141 = vset.pattern.permute.xlu0 0
    %142 = vperm.xlu0 %141, %v92
    %v143 = vpop.permute.xlu0 %142
    %146 = vset.pattern.permute.xlu0 0
    %147 = vperm.xlu0 %146, %v93
    %v148 = vpop.permute.xlu0 %147
    %151 = vset.pattern.permute.xlu0 0
    %152 = vperm.xlu0 %151, %v94
    %v153 = vpop.permute.xlu0 %152
    %v167 = vunpack.c.l.b16 %v71
    %v168 = vunpack.c.l.b16 %v72
    %v169 = vunpack.c.l.b16 %v73
    %v170 = vunpack.c.l.b16 %v74
    %v171 = vunpack.c.l.b16 %v75
    %v172 = vunpack.c.l.b16 %v76
    %v173 = vunpack.c.l.b16 %v77
    %v174 = vunpack.c.l.b16 %v78
    %v175 = vunpack.c.l.b16 %v79
    %v176 = vunpack.c.l.b16 %v80
    %v177 = vunpack.c.l.b16 %v81
    %v178 = vunpack.c.l.b16 %v82
    %v179 = vpack.c.b16 %v168, %v167
    %v180 = vpack.c.b16 %v170, %v169
    %v181 = vpack.c.b16 %v172, %v171
    %v182 = vpack.c.b16 %v174, %v173
    %v183 = vpack.c.b16 %v176, %v175
    %v184 = vpack.c.b16 %v178, %v177
    %vm185 = vcmask 261120
    %v187 = vsel %vm185, %v179, 0
    %v190 = vsel %vm185, %v180, 0
    %v193 = vsel %vm185, %v181, 0
    %v196 = vsel %vm185, %v182, 0
    %v199 = vsel %vm185, %v183, 0
    %v202 = vsel %vm185, %v184, 0
    %204 = vmatpush.bf16.msra.mxu0 0
    %205 = vmatpush.bf16.msra.mxu0 0
    %206 = vmatpush.bf16.msra.mxu0 0
    %207 = vmatpush.bf16.msra.mxu0 0
    %208 = vmatpush.bf16.msra.mxu0 0
    %209 = vmatpush.bf16.msra.mxu0 0
    %210 = vmatpush.bf16.msra.mxu0 %v67
    %211 = vmatpush.bf16.msra.mxu0 %v63
    %212 = vmatmul.bf16.gmra.mxu0 %v187
    %v213 = vpop.f32.mrf.mxu0
    %v214 = vadd.f32 %v98, %v213
    %v215 = vpop.f32.mrf.mxu0
    %v216 = vadd.f32 %v103, %v215
    %217 = vmatmul.bf16.gmra.mxu0 %v190
    %v218 = vpop.f32.mrf.mxu0
    %v219 = vadd.f32 %v108, %v218
    %v220 = vpop.f32.mrf.mxu0
    %v221 = vadd.f32 %v113, %v220
    %222 = vmatmul.bf16.gmra.mxu0 %v193
    %v223 = vpop.f32.mrf.mxu0
    %v224 = vadd.f32 %v118, %v223
    %v225 = vpop.f32.mrf.mxu0
    %v226 = vadd.f32 %v123, %v225
    %227 = vmatmul.bf16.gmra.mxu0 %v196
    %v228 = vpop.f32.mrf.mxu0
    %v229 = vadd.f32 %v128, %v228
    %v230 = vpop.f32.mrf.mxu0
    %v231 = vadd.f32 %v133, %v230
    %232 = vmatmul.bf16.gmra.mxu0 %v199
    %v233 = vpop.f32.mrf.mxu0
    %v234 = vadd.f32 %v138, %v233
    %v235 = vpop.f32.mrf.mxu0
    %v236 = vadd.f32 %v143, %v235
    %237 = vmatmul.bf16.gmra.mxu0 %v202
    %v238 = vpop.f32.mrf.mxu0
    %v239 = vadd.f32 %v148, %v238
    %v240 = vpop.f32.mrf.mxu0
    %v241 = vadd.f32 %v153, %v240
    %242 = vdwg.mxu0
    %243 = vmatpush.bf16.msra.mxu0 0
    %244 = vmatpush.bf16.msra.mxu0 0
    %245 = vmatpush.bf16.msra.mxu0 0
    %246 = vmatpush.bf16.msra.mxu0 0
    %247 = vmatpush.bf16.msra.mxu0 0
    %248 = vmatpush.bf16.msra.mxu0 0
    %249 = vmatpush.bf16.msra.mxu0 %v68
    %250 = vmatpush.bf16.msra.mxu0 %v64
    %251 = vmatmul.bf16.gmra.mxu0 %v187
    %v252 = vpop.f32.mrf.mxu0
    %v253 = vadd.f32 %v98, %v252
    %v254 = vpop.f32.mrf.mxu0
    %v255 = vadd.f32 %v103, %v254
    %256 = vmatmul.bf16.gmra.mxu0 %v190
    %v257 = vpop.f32.mrf.mxu0
    %v258 = vadd.f32 %v108, %v257
    %v259 = vpop.f32.mrf.mxu0
    %v260 = vadd.f32 %v113, %v259
    %261 = vmatmul.bf16.gmra.mxu0 %v193
    %v262 = vpop.f32.mrf.mxu0
    %v263 = vadd.f32 %v118, %v262
    %v264 = vpop.f32.mrf.mxu0
    %v265 = vadd.f32 %v123, %v264
    %266 = vmatmul.bf16.gmra.mxu0 %v196
    %v267 = vpop.f32.mrf.mxu0
    %v268 = vadd.f32 %v128, %v267
    %v269 = vpop.f32.mrf.mxu0
    %v270 = vadd.f32 %v133, %v269
    %271 = vmatmul.bf16.gmra.mxu0 %v199
    %v272 = vpop.f32.mrf.mxu0
    %v273 = vadd.f32 %v138, %v272
    %v274 = vpop.f32.mrf.mxu0
    %v275 = vadd.f32 %v143, %v274
    %276 = vmatmul.bf16.gmra.mxu0 %v202
    %v277 = vpop.f32.mrf.mxu0
    %v278 = vadd.f32 %v148, %v277
    %v279 = vpop.f32.mrf.mxu0
    %v280 = vadd.f32 %v153, %v279
    %281 = vdwg.mxu0
    %282 = vmatpush.bf16.msra.mxu0 0
    %283 = vmatpush.bf16.msra.mxu0 0
    %284 = vmatpush.bf16.msra.mxu0 0
    %285 = vmatpush.bf16.msra.mxu0 0
    %286 = vmatpush.bf16.msra.mxu0 0
    %287 = vmatpush.bf16.msra.mxu0 0
    %288 = vmatpush.bf16.msra.mxu0 %v69
    %289 = vmatpush.bf16.msra.mxu0 %v65
    %290 = vmatmul.bf16.gmra.mxu0 %v187
    %v291 = vpop.f32.mrf.mxu0
    %v292 = vadd.f32 %v98, %v291
    %v293 = vpop.f32.mrf.mxu0
    %v294 = vadd.f32 %v103, %v293
    %295 = vmatmul.bf16.gmra.mxu0 %v190
    %v296 = vpop.f32.mrf.mxu0
    %v297 = vadd.f32 %v108, %v296
    %v298 = vpop.f32.mrf.mxu0
    %v299 = vadd.f32 %v113, %v298
    %300 = vmatmul.bf16.gmra.mxu0 %v193
    %v301 = vpop.f32.mrf.mxu0
    %v302 = vadd.f32 %v118, %v301
    %v303 = vpop.f32.mrf.mxu0
    %v304 = vadd.f32 %v123, %v303
    %305 = vmatmul.bf16.gmra.mxu0 %v196
    %v306 = vpop.f32.mrf.mxu0
    %v307 = vadd.f32 %v128, %v306
    %v308 = vpop.f32.mrf.mxu0
    %v309 = vadd.f32 %v133, %v308
    %310 = vmatmul.bf16.gmra.mxu0 %v199
    %v311 = vpop.f32.mrf.mxu0
    %v312 = vadd.f32 %v138, %v311
    %v313 = vpop.f32.mrf.mxu0
    %v314 = vadd.f32 %v143, %v313
    %315 = vmatmul.bf16.gmra.mxu0 %v202
    %v316 = vpop.f32.mrf.mxu0
    %v317 = vadd.f32 %v148, %v316
    %v318 = vpop.f32.mrf.mxu0
    %v319 = vadd.f32 %v153, %v318
    %320 = vdwg.mxu0
    %321 = vmatpush.bf16.msra.mxu0 0
    %322 = vmatpush.bf16.msra.mxu0 0
    %323 = vmatpush.bf16.msra.mxu0 0
    %324 = vmatpush.bf16.msra.mxu0 0
    %325 = vmatpush.bf16.msra.mxu0 0
    %326 = vmatpush.bf16.msra.mxu0 0
    %327 = vmatpush.bf16.msra.mxu0 %v70
    %328 = vmatpush.bf16.msra.mxu0 %v66
    %329 = vmatmul.bf16.gmra.mxu0 %v187
    %v330 = vpop.f32.mrf.mxu0
    %v331 = vadd.f32 %v98, %v330
    %v332 = vpop.f32.mrf.mxu0
    %v333 = vadd.f32 %v103, %v332
    %334 = vmatmul.bf16.gmra.mxu0 %v190
    %v335 = vpop.f32.mrf.mxu0
    %v336 = vadd.f32 %v108, %v335
    %v337 = vpop.f32.mrf.mxu0
    %v338 = vadd.f32 %v113, %v337
    %339 = vmatmul.bf16.gmra.mxu0 %v193
    %v340 = vpop.f32.mrf.mxu0
    %v341 = vadd.f32 %v118, %v340
    %v342 = vpop.f32.mrf.mxu0
    %v343 = vadd.f32 %v123, %v342
    %344 = vmatmul.bf16.gmra.mxu0 %v196
    %v345 = vpop.f32.mrf.mxu0
    %v346 = vadd.f32 %v128, %v345
    %v347 = vpop.f32.mrf.mxu0
    %v348 = vadd.f32 %v133, %v347
    %349 = vmatmul.bf16.gmra.mxu0 %v199
    %v350 = vpop.f32.mrf.mxu0
    %v351 = vadd.f32 %v138, %v350
    %v352 = vpop.f32.mrf.mxu0
    %v353 = vadd.f32 %v143, %v352
    %354 = vmatmul.bf16.gmra.mxu0 %v202
    %v355 = vpop.f32.mrf.mxu0
    %v356 = vadd.f32 %v148, %v355
    %v357 = vpop.f32.mrf.mxu0
    %v358 = vadd.f32 %v153, %v357
    %359 = vdwg.mxu0
    %v360 = vld [vmem:[%s11] sm:$0xf]
    %v361 = vld [vmem:[%s11 + $0x4] sm:$0xf]
    %v362 = vld [vmem:[%s11 + $0x8] sm:$0xf]
    %v363 = vld [vmem:[%s11 + $0xc] sm:$0xf]
    %v364 = vpack.c.bf16 %v226, %v224
    %v365 = vpack.c.bf16 %v265, %v263
    %v366 = vpack.c.bf16 %v304, %v302
    %v367 = vpack.c.bf16 %v343, %v341
    %v368 = vpack.c.bf16 %v236, %v234
    %v369 = vpack.c.bf16 %v275, %v273
    %v370 = vpack.c.bf16 %v314, %v312
    %v371 = vpack.c.bf16 %v353, %v351
    %v372 = vpack.c.bf16 %v231, %v229
    %v373 = vpack.c.bf16 %v270, %v268
    %v374 = vpack.c.bf16 %v309, %v307
    %v375 = vpack.c.bf16 %v348, %v346
    %v376 = vpack.c.bf16 %v241, %v239
    %v377 = vpack.c.bf16 %v280, %v278
    %v378 = vpack.c.bf16 %v319, %v317
    %v379 = vpack.c.bf16 %v358, %v356
    %v384 = vunpack.c.l.b16 %v360
    %v385 = vunpack.c.l.b16 %v361
    %v386 = vunpack.c.l.b16 %v362
    %v387 = vunpack.c.l.b16 %v363
    %v388 = vpack.c.b16 %v385, %v384
    %v389 = vpack.c.b16 %v387, %v386
    %v391 = vsel %vm185, %v388, 0
    %v394 = vsel %vm185, %v389, 0
    %396 = vmatpush.bf16.msra.mxu0 0
    %397 = vmatpush.bf16.msra.mxu0 0
    %398 = vmatpush.bf16.msra.mxu0 0
    %399 = vmatpush.bf16.msra.mxu0 0
    %400 = vmatpush.bf16.msra.mxu0 0
    %401 = vmatpush.bf16.msra.mxu0 0
    %402 = vmatpush.bf16.msra.mxu0 %v372
    %403 = vmatpush.bf16.msra.mxu0 %v364
    %404 = vmatmul.bf16.gmra.mxu0 %v391
    %v405 = vpop.f32.mrf.mxu0
    %v406 = vadd.f32 0.0, %v405
    %v407 = vpop.f32.mrf.mxu0
    %v408 = vadd.f32 0.0, %v407
    %409 = vmatmul.bf16.gmra.mxu0 %v394
    %v410 = vpop.f32.mrf.mxu0
    %v411 = vadd.f32 0.0, %v410
    %v412 = vpop.f32.mrf.mxu0
    %v413 = vadd.f32 0.0, %v412
    %414 = vdwg.mxu0
    %415 = vmatpush.bf16.msra.mxu0 0
    %416 = vmatpush.bf16.msra.mxu0 0
    %417 = vmatpush.bf16.msra.mxu0 0
    %418 = vmatpush.bf16.msra.mxu0 0
    %419 = vmatpush.bf16.msra.mxu0 0
    %420 = vmatpush.bf16.msra.mxu0 0
    %421 = vmatpush.bf16.msra.mxu0 %v373
    %422 = vmatpush.bf16.msra.mxu0 %v365
    %423 = vmatmul.bf16.gmra.mxu0 %v391
    %v424 = vpop.f32.mrf.mxu0
    %v425 = vadd.f32 0.0, %v424
    %v426 = vpop.f32.mrf.mxu0
    %v427 = vadd.f32 0.0, %v426
    %428 = vmatmul.bf16.gmra.mxu0 %v394
    %v429 = vpop.f32.mrf.mxu0
    %v430 = vadd.f32 0.0, %v429
    %v431 = vpop.f32.mrf.mxu0
    %v432 = vadd.f32 0.0, %v431
    %433 = vdwg.mxu0
    %434 = vmatpush.bf16.msra.mxu0 0
    %435 = vmatpush.bf16.msra.mxu0 0
    %436 = vmatpush.bf16.msra.mxu0 0
    %437 = vmatpush.bf16.msra.mxu0 0
    %438 = vmatpush.bf16.msra.mxu0 0
    %439 = vmatpush.bf16.msra.mxu0 0
    %440 = vmatpush.bf16.msra.mxu0 %v374
    %441 = vmatpush.bf16.msra.mxu0 %v366
    %442 = vmatmul.bf16.gmra.mxu0 %v391
    %v443 = vpop.f32.mrf.mxu0
    %v444 = vadd.f32 0.0, %v443
    %v445 = vpop.f32.mrf.mxu0
    %v446 = vadd.f32 0.0, %v445
    %447 = vmatmul.bf16.gmra.mxu0 %v394
    %v448 = vpop.f32.mrf.mxu0
    %v449 = vadd.f32 0.0, %v448
    %v450 = vpop.f32.mrf.mxu0
    %v451 = vadd.f32 0.0, %v450
    %452 = vdwg.mxu0
    %453 = vmatpush.bf16.msra.mxu0 0
    %454 = vmatpush.bf16.msra.mxu0 0
    %455 = vmatpush.bf16.msra.mxu0 0
    %456 = vmatpush.bf16.msra.mxu0 0
    %457 = vmatpush.bf16.msra.mxu0 0
    %458 = vmatpush.bf16.msra.mxu0 0
    %459 = vmatpush.bf16.msra.mxu0 %v375
    %460 = vmatpush.bf16.msra.mxu0 %v367
    %461 = vmatmul.bf16.gmra.mxu0 %v391
    %v462 = vpop.f32.mrf.mxu0
    %v463 = vadd.f32 0.0, %v462
    %v464 = vpop.f32.mrf.mxu0
    %v465 = vadd.f32 0.0, %v464
    %466 = vmatmul.bf16.gmra.mxu0 %v394
    %v467 = vpop.f32.mrf.mxu0
    %v468 = vadd.f32 0.0, %v467
    %v469 = vpop.f32.mrf.mxu0
    %v470 = vadd.f32 0.0, %v469
    %471 = vdwg.mxu0
    %472 = vmatpush.bf16.msra.mxu0 0
    %473 = vmatpush.bf16.msra.mxu0 0
    %474 = vmatpush.bf16.msra.mxu0 0
    %475 = vmatpush.bf16.msra.mxu0 0
    %476 = vmatpush.bf16.msra.mxu0 0
    %477 = vmatpush.bf16.msra.mxu0 0
    %478 = vmatpush.bf16.msra.mxu0 %v376
    %479 = vmatpush.bf16.msra.mxu0 %v368
    %480 = vmatmul.bf16.gmra.mxu0 %v391
    %v481 = vpop.f32.mrf.mxu0
    %v482 = vadd.f32 0.0, %v481
    %v483 = vpop.f32.mrf.mxu0
    %v484 = vadd.f32 0.0, %v483
    %485 = vmatmul.bf16.gmra.mxu0 %v394
    %v486 = vpop.f32.mrf.mxu0
    %v487 = vadd.f32 0.0, %v486
    %v488 = vpop.f32.mrf.mxu0
    %v489 = vadd.f32 0.0, %v488
    %490 = vdwg.mxu0
    %491 = vmatpush.bf16.msra.mxu0 0
    %492 = vmatpush.bf16.msra.mxu0 0
    %493 = vmatpush.bf16.msra.mxu0 0
    %494 = vmatpush.bf16.msra.mxu0 0
    %495 = vmatpush.bf16.msra.mxu0 0
    %496 = vmatpush.bf16.msra.mxu0 0
    %497 = vmatpush.bf16.msra.mxu0 %v377
    %498 = vmatpush.bf16.msra.mxu0 %v369
    %499 = vmatmul.bf16.gmra.mxu0 %v391
    %v500 = vpop.f32.mrf.mxu0
    %v501 = vadd.f32 0.0, %v500
    %v502 = vpop.f32.mrf.mxu0
    %v503 = vadd.f32 0.0, %v502
    %504 = vmatmul.bf16.gmra.mxu0 %v394
    %v505 = vpop.f32.mrf.mxu0
    %v506 = vadd.f32 0.0, %v505
    %v507 = vpop.f32.mrf.mxu0
    %v508 = vadd.f32 0.0, %v507
    %509 = vdwg.mxu0
    %510 = vmatpush.bf16.msra.mxu0 0
    %511 = vmatpush.bf16.msra.mxu0 0
    %512 = vmatpush.bf16.msra.mxu0 0
    %513 = vmatpush.bf16.msra.mxu0 0
    %514 = vmatpush.bf16.msra.mxu0 0
    %515 = vmatpush.bf16.msra.mxu0 0
    %516 = vmatpush.bf16.msra.mxu0 %v378
    %517 = vmatpush.bf16.msra.mxu0 %v370
    %518 = vmatmul.bf16.gmra.mxu0 %v391
    %v519 = vpop.f32.mrf.mxu0
    %v520 = vadd.f32 0.0, %v519
    %v521 = vpop.f32.mrf.mxu0
    %v522 = vadd.f32 0.0, %v521
    %523 = vmatmul.bf16.gmra.mxu0 %v394
    %v524 = vpop.f32.mrf.mxu0
    %v525 = vadd.f32 0.0, %v524
    %v526 = vpop.f32.mrf.mxu0
    %v527 = vadd.f32 0.0, %v526
    %528 = vdwg.mxu0
    %529 = vmatpush.bf16.msra.mxu0 0
    %530 = vmatpush.bf16.msra.mxu0 0
    %531 = vmatpush.bf16.msra.mxu0 0
    %532 = vmatpush.bf16.msra.mxu0 0
    %533 = vmatpush.bf16.msra.mxu0 0
    %534 = vmatpush.bf16.msra.mxu0 0
    %535 = vmatpush.bf16.msra.mxu0 %v379
    %536 = vmatpush.bf16.msra.mxu0 %v371
    %537 = vmatmul.bf16.gmra.mxu0 %v391
    %v538 = vpop.f32.mrf.mxu0
    %v539 = vadd.f32 0.0, %v538
    %v540 = vpop.f32.mrf.mxu0
    %v541 = vadd.f32 0.0, %v540
    %542 = vmatmul.bf16.gmra.mxu0 %v394
    %v543 = vpop.f32.mrf.mxu0
    %v544 = vadd.f32 0.0, %v543
    %v545 = vpop.f32.mrf.mxu0
    %v546 = vadd.f32 0.0, %v545
    %547 = vdwg.mxu0
    %v548 = vsub.f32 %v224, %v406
    %v549 = vsub.f32 %v263, %v425
    %v550 = vsub.f32 %v302, %v444
    %v551 = vsub.f32 %v341, %v463
    %v552 = vsub.f32 %v234, %v482
    %v553 = vsub.f32 %v273, %v501
    %v554 = vsub.f32 %v312, %v520
    %v555 = vsub.f32 %v351, %v539
    %v556 = vsub.f32 %v226, %v408
    %v557 = vsub.f32 %v265, %v427
    %v558 = vsub.f32 %v304, %v446
    %v559 = vsub.f32 %v343, %v465
    %v560 = vsub.f32 %v236, %v484
    %v561 = vsub.f32 %v275, %v503
    %v562 = vsub.f32 %v314, %v522
    %v563 = vsub.f32 %v353, %v541
    %v564 = vsub.f32 %v229, %v411
    %v565 = vsub.f32 %v268, %v430
    %v566 = vsub.f32 %v307, %v449
    %v567 = vsub.f32 %v346, %v468
    %v568 = vsub.f32 %v239, %v487
    %v569 = vsub.f32 %v278, %v506
    %v570 = vsub.f32 %v317, %v525
    %v571 = vsub.f32 %v356, %v544
    %v572 = vsub.f32 %v231, %v413
    %v573 = vsub.f32 %v270, %v432
    %v574 = vsub.f32 %v309, %v451
    %v575 = vsub.f32 %v348, %v470
    %v576 = vsub.f32 %v241, %v489
    %v577 = vsub.f32 %v280, %v508
    %v578 = vsub.f32 %v319, %v527
    %v579 = vsub.f32 %v358, %v546
    %v580 = vmul.f32 %v548, %v548
    %v581 = vmul.f32 %v549, %v549
    %v582 = vmul.f32 %v550, %v550
    %v583 = vmul.f32 %v551, %v551
    %v584 = vmul.f32 %v552, %v552
    %v585 = vmul.f32 %v553, %v553
    %v586 = vmul.f32 %v554, %v554
    %v587 = vmul.f32 %v555, %v555
    %v588 = vmul.f32 %v556, %v556
    %v589 = vmul.f32 %v557, %v557
    %v590 = vmul.f32 %v558, %v558
    %v591 = vmul.f32 %v559, %v559
    %v592 = vmul.f32 %v560, %v560
    %v593 = vmul.f32 %v561, %v561
    %v594 = vmul.f32 %v562, %v562
    %v595 = vmul.f32 %v563, %v563
    %v596 = vmul.f32 %v564, %v564
    %v597 = vmul.f32 %v565, %v565
    %v598 = vmul.f32 %v566, %v566
    %v599 = vmul.f32 %v567, %v567
    %v600 = vmul.f32 %v568, %v568
    %v601 = vmul.f32 %v569, %v569
    %v602 = vmul.f32 %v570, %v570
    %v603 = vmul.f32 %v571, %v571
    %v604 = vmul.f32 %v572, %v572
    %v605 = vmul.f32 %v573, %v573
    %v606 = vmul.f32 %v574, %v574
    %v607 = vmul.f32 %v575, %v575
    %v608 = vmul.f32 %v576, %v576
    %v609 = vmul.f32 %v577, %v577
    %v610 = vmul.f32 %v578, %v578
    %v611 = vmul.f32 %v579, %v579
    %v612 = vpack.c.bf16 %v588, %v580
    %v613 = vpack.c.bf16 %v589, %v581
    %v614 = vpack.c.bf16 %v590, %v582
    %v615 = vpack.c.bf16 %v591, %v583
    %v616 = vpack.c.bf16 %v592, %v584
    %v617 = vpack.c.bf16 %v593, %v585
    %v618 = vpack.c.bf16 %v594, %v586
    %v619 = vpack.c.bf16 %v595, %v587
    %v620 = vpack.c.bf16 %v604, %v596
    %v621 = vpack.c.bf16 %v605, %v597
    %v622 = vpack.c.bf16 %v606, %v598
    %v623 = vpack.c.bf16 %v607, %v599
    %v624 = vpack.c.bf16 %v608, %v600
    %v625 = vpack.c.bf16 %v609, %v601
    %v626 = vpack.c.bf16 %v610, %v602
    %v627 = vpack.c.bf16 %v611, %v603
    %628 = vmatpush.bf16.msra.mxu0 0
    %629 = vmatpush.bf16.msra.mxu0 0
    %630 = vmatpush.bf16.msra.mxu0 0
    %631 = vmatpush.bf16.msra.mxu0 0
    %632 = vmatpush.bf16.msra.mxu0 0
    %633 = vmatpush.bf16.msra.mxu0 0
    %634 = vmatpush.bf16.msra.mxu0 %v620
    %635 = vmatpush.bf16.msra.mxu0 %v612
    %636 = vmatmul.bf16.gmra.mxu0 %v391
    %v637 = vpop.f32.mrf.mxu0
    %v638 = vadd.f32 1e-05, %v637
    %v639 = vpop.f32.mrf.mxu0
    %v640 = vadd.f32 1e-05, %v639
    %641 = vmatmul.bf16.gmra.mxu0 %v394
    %v642 = vpop.f32.mrf.mxu0
    %v643 = vadd.f32 1e-05, %v642
    %v644 = vpop.f32.mrf.mxu0
    %v645 = vadd.f32 1e-05, %v644
    %646 = vdwg.mxu0
    %647 = vmatpush.bf16.msra.mxu0 0
    %648 = vmatpush.bf16.msra.mxu0 0
    %649 = vmatpush.bf16.msra.mxu0 0
    %650 = vmatpush.bf16.msra.mxu0 0
    %651 = vmatpush.bf16.msra.mxu0 0
    %652 = vmatpush.bf16.msra.mxu0 0
    %653 = vmatpush.bf16.msra.mxu0 %v621
    %654 = vmatpush.bf16.msra.mxu0 %v613
    %655 = vmatmul.bf16.gmra.mxu0 %v391
    %v656 = vpop.f32.mrf.mxu0
    %v657 = vadd.f32 1e-05, %v656
    %v658 = vpop.f32.mrf.mxu0
    %v659 = vadd.f32 1e-05, %v658
    %660 = vmatmul.bf16.gmra.mxu0 %v394
    %v661 = vpop.f32.mrf.mxu0
    %v662 = vadd.f32 1e-05, %v661
    %v663 = vpop.f32.mrf.mxu0
    %v664 = vadd.f32 1e-05, %v663
    %665 = vdwg.mxu0
    %666 = vmatpush.bf16.msra.mxu0 0
    %667 = vmatpush.bf16.msra.mxu0 0
    %668 = vmatpush.bf16.msra.mxu0 0
    %669 = vmatpush.bf16.msra.mxu0 0
    %670 = vmatpush.bf16.msra.mxu0 0
    %671 = vmatpush.bf16.msra.mxu0 0
    %672 = vmatpush.bf16.msra.mxu0 %v622
    %673 = vmatpush.bf16.msra.mxu0 %v614
    %674 = vmatmul.bf16.gmra.mxu0 %v391
    %v675 = vpop.f32.mrf.mxu0
    %v676 = vadd.f32 1e-05, %v675
    %v677 = vpop.f32.mrf.mxu0
    %v678 = vadd.f32 1e-05, %v677
    %679 = vmatmul.bf16.gmra.mxu0 %v394
    %v680 = vpop.f32.mrf.mxu0
    %v681 = vadd.f32 1e-05, %v680
    %v682 = vpop.f32.mrf.mxu0
    %v683 = vadd.f32 1e-05, %v682
    %684 = vdwg.mxu0
    %685 = vmatpush.bf16.msra.mxu0 0
    %686 = vmatpush.bf16.msra.mxu0 0
    %687 = vmatpush.bf16.msra.mxu0 0
    %688 = vmatpush.bf16.msra.mxu0 0
    %689 = vmatpush.bf16.msra.mxu0 0
    %690 = vmatpush.bf16.msra.mxu0 0
    %691 = vmatpush.bf16.msra.mxu0 %v623
    %692 = vmatpush.bf16.msra.mxu0 %v615
    %693 = vmatmul.bf16.gmra.mxu0 %v391
    %v694 = vpop.f32.mrf.mxu0
    %v695 = vadd.f32 1e-05, %v694
    %v696 = vpop.f32.mrf.mxu0
    %v697 = vadd.f32 1e-05, %v696
    %698 = vmatmul.bf16.gmra.mxu0 %v394
    %v699 = vpop.f32.mrf.mxu0
    %v700 = vadd.f32 1e-05, %v699
    %v701 = vpop.f32.mrf.mxu0
    %v702 = vadd.f32 1e-05, %v701
    %703 = vdwg.mxu0
    %704 = vmatpush.bf16.msra.mxu0 0
    %705 = vmatpush.bf16.msra.mxu0 0
    %706 = vmatpush.bf16.msra.mxu0 0
    %707 = vmatpush.bf16.msra.mxu0 0
    %708 = vmatpush.bf16.msra.mxu0 0
    %709 = vmatpush.bf16.msra.mxu0 0
    %710 = vmatpush.bf16.msra.mxu0 %v624
    %711 = vmatpush.bf16.msra.mxu0 %v616
    %712 = vmatmul.bf16.gmra.mxu0 %v391
    %v713 = vpop.f32.mrf.mxu0
    %v714 = vadd.f32 1e-05, %v713
    %v715 = vpop.f32.mrf.mxu0
    %v716 = vadd.f32 1e-05, %v715
    %717 = vmatmul.bf16.gmra.mxu0 %v394
    %v718 = vpop.f32.mrf.mxu0
    %v719 = vadd.f32 1e-05, %v718
    %v720 = vpop.f32.mrf.mxu0
    %v721 = vadd.f32 1e-05, %v720
    %722 = vdwg.mxu0
    %723 = vmatpush.bf16.msra.mxu0 0
    %724 = vmatpush.bf16.msra.mxu0 0
    %725 = vmatpush.bf16.msra.mxu0 0
    %726 = vmatpush.bf16.msra.mxu0 0
    %727 = vmatpush.bf16.msra.mxu0 0
    %728 = vmatpush.bf16.msra.mxu0 0
    %729 = vmatpush.bf16.msra.mxu0 %v625
    %730 = vmatpush.bf16.msra.mxu0 %v617
    %731 = vmatmul.bf16.gmra.mxu0 %v391
    %v732 = vpop.f32.mrf.mxu0
    %v733 = vadd.f32 1e-05, %v732
    %v734 = vpop.f32.mrf.mxu0
    %v735 = vadd.f32 1e-05, %v734
    %736 = vmatmul.bf16.gmra.mxu0 %v394
    %v737 = vpop.f32.mrf.mxu0
    %v738 = vadd.f32 1e-05, %v737
    %v739 = vpop.f32.mrf.mxu0
    %v740 = vadd.f32 1e-05, %v739
    %741 = vdwg.mxu0
    %742 = vmatpush.bf16.msra.mxu0 0
    %743 = vmatpush.bf16.msra.mxu0 0
    %744 = vmatpush.bf16.msra.mxu0 0
    %745 = vmatpush.bf16.msra.mxu0 0
    %746 = vmatpush.bf16.msra.mxu0 0
    %747 = vmatpush.bf16.msra.mxu0 0
    %748 = vmatpush.bf16.msra.mxu0 %v626
    %749 = vmatpush.bf16.msra.mxu0 %v618
    %750 = vmatmul.bf16.gmra.mxu0 %v391
    %v751 = vpop.f32.mrf.mxu0
    %v752 = vadd.f32 1e-05, %v751
    %v753 = vpop.f32.mrf.mxu0
    %v754 = vadd.f32 1e-05, %v753
    %755 = vmatmul.bf16.gmra.mxu0 %v394
    %v756 = vpop.f32.mrf.mxu0
    %v757 = vadd.f32 1e-05, %v756
    %v758 = vpop.f32.mrf.mxu0
    %v759 = vadd.f32 1e-05, %v758
    %760 = vdwg.mxu0
    %761 = vmatpush.bf16.msra.mxu0 0
    %762 = vmatpush.bf16.msra.mxu0 0
    %763 = vmatpush.bf16.msra.mxu0 0
    %764 = vmatpush.bf16.msra.mxu0 0
    %765 = vmatpush.bf16.msra.mxu0 0
    %766 = vmatpush.bf16.msra.mxu0 0
    %767 = vmatpush.bf16.msra.mxu0 %v627
    %768 = vmatpush.bf16.msra.mxu0 %v619
    %769 = vmatmul.bf16.gmra.mxu0 %v391
    %v770 = vpop.f32.mrf.mxu0
    %v771 = vadd.f32 1e-05, %v770
    %v772 = vpop.f32.mrf.mxu0
    %v773 = vadd.f32 1e-05, %v772
    %774 = vmatmul.bf16.gmra.mxu0 %v394
    %v775 = vpop.f32.mrf.mxu0
    %v776 = vadd.f32 1e-05, %v775
    %v777 = vpop.f32.mrf.mxu0
    %v778 = vadd.f32 1e-05, %v777
    %779 = vdwg.mxu0
    %v780 = vrsqrt.pop %v638
    %v781 = vmul.f32 %v780, %v638
    %v782 = vmul.f32 %v781, %v780
    %v783 = vmul.f32 0.5, %v782
    %v784 = vsub.f32 1.5, %v783
    %v785 = vmul.f32 %v780, %v784
    %vm786 = vweird.f32 %v638
    %vm787 = vweird.f32 %v780
    %vm788 = vmor %vm786, %vm787
    %v789 = vsel %vm788, %v780, %v785
    %v790 = vrsqrt.pop %v657
    %v791 = vmul.f32 %v790, %v657
    %v792 = vmul.f32 %v791, %v790
    %v793 = vmul.f32 0.5, %v792
    %v794 = vsub.f32 1.5, %v793
    %v795 = vmul.f32 %v790, %v794
    %vm796 = vweird.f32 %v657
    %vm797 = vweird.f32 %v790
    %vm798 = vmor %vm796, %vm797
    %v799 = vsel %vm798, %v790, %v795
    %v800 = vrsqrt.pop %v676
    %v801 = vmul.f32 %v800, %v676
    %v802 = vmul.f32 %v801, %v800
    %v803 = vmul.f32 0.5, %v802
    %v804 = vsub.f32 1.5, %v803
    %v805 = vmul.f32 %v800, %v804
    %vm806 = vweird.f32 %v676
    %vm807 = vweird.f32 %v800
    %vm808 = vmor %vm806, %vm807
    %v809 = vsel %vm808, %v800, %v805
    %v810 = vrsqrt.pop %v695
    %v811 = vmul.f32 %v810, %v695
    %v812 = vmul.f32 %v811, %v810
    %v813 = vmul.f32 0.5, %v812
    %v814 = vsub.f32 1.5, %v813
    %v815 = vmul.f32 %v810, %v814
    %vm816 = vweird.f32 %v695
    %vm817 = vweird.f32 %v810
    %vm818 = vmor %vm816, %vm817
    %v819 = vsel %vm818, %v810, %v815
    %v820 = vrsqrt.pop %v714
    %v821 = vmul.f32 %v820, %v714
    %v822 = vmul.f32 %v821, %v820
    %v823 = vmul.f32 0.5, %v822
    %v824 = vsub.f32 1.5, %v823
    %v825 = vmul.f32 %v820, %v824
    %vm826 = vweird.f32 %v714
    %vm827 = vweird.f32 %v820
    %vm828 = vmor %vm826, %vm827
    %v829 = vsel %vm828, %v820, %v825
    %v830 = vrsqrt.pop %v733
    %v831 = vmul.f32 %v830, %v733
    %v832 = vmul.f32 %v831, %v830
    %v833 = vmul.f32 0.5, %v832
    %v834 = vsub.f32 1.5, %v833
    %v835 = vmul.f32 %v830, %v834
    %vm836 = vweird.f32 %v733
    %vm837 = vweird.f32 %v830
    %vm838 = vmor %vm836, %vm837
    %v839 = vsel %vm838, %v830, %v835
    %v840 = vrsqrt.pop %v752
    %v841 = vmul.f32 %v840, %v752
    %v842 = vmul.f32 %v841, %v840
    %v843 = vmul.f32 0.5, %v842
    %v844 = vsub.f32 1.5, %v843
    %v845 = vmul.f32 %v840, %v844
    %vm846 = vweird.f32 %v752
    %vm847 = vweird.f32 %v840
    %vm848 = vmor %vm846, %vm847
    %v849 = vsel %vm848, %v840, %v845
    %v850 = vrsqrt.pop %v771
    %v851 = vmul.f32 %v850, %v771
    %v852 = vmul.f32 %v851, %v850
    %v853 = vmul.f32 0.5, %v852
    %v854 = vsub.f32 1.5, %v853
    %v855 = vmul.f32 %v850, %v854
    %vm856 = vweird.f32 %v771
    %vm857 = vweird.f32 %v850
    %vm858 = vmor %vm856, %vm857
    %v859 = vsel %vm858, %v850, %v855
    %v860 = vrsqrt.pop %v640
    %v861 = vmul.f32 %v860, %v640
    %v862 = vmul.f32 %v861, %v860
    %v863 = vmul.f32 0.5, %v862
    %v864 = vsub.f32 1.5, %v863
    %v865 = vmul.f32 %v860, %v864
    %vm866 = vweird.f32 %v640
    %vm867 = vweird.f32 %v860
    %vm868 = vmor %vm866, %vm867
    %v869 = vsel %vm868, %v860, %v865
    %v870 = vrsqrt.pop %v659
    %v871 = vmul.f32 %v870, %v659
    %v872 = vmul.f32 %v871, %v870
    %v873 = vmul.f32 0.5, %v872
    %v874 = vsub.f32 1.5, %v873
    %v875 = vmul.f32 %v870, %v874
    %vm876 = vweird.f32 %v659
    %vm877 = vweird.f32 %v870
    %vm878 = vmor %vm876, %vm877
    %v879 = vsel %vm878, %v870, %v875
    %v880 = vrsqrt.pop %v678
    %v881 = vmul.f32 %v880, %v678
    %v882 = vmul.f32 %v881, %v880
    %v883 = vmul.f32 0.5, %v882
    %v884 = vsub.f32 1.5, %v883
    %v885 = vmul.f32 %v880, %v884
    %vm886 = vweird.f32 %v678
    %vm887 = vweird.f32 %v880
    %vm888 = vmor %vm886, %vm887
    %v889 = vsel %vm888, %v880, %v885
    %v890 = vrsqrt.pop %v697
    %v891 = vmul.f32 %v890, %v697
    %v892 = vmul.f32 %v891, %v890
    %v893 = vmul.f32 0.5, %v892
    %v894 = vsub.f32 1.5, %v893
    %v895 = vmul.f32 %v890, %v894
    %vm896 = vweird.f32 %v697
    %vm897 = vweird.f32 %v890
    %vm898 = vmor %vm896, %vm897
    %v899 = vsel %vm898, %v890, %v895
    %v900 = vrsqrt.pop %v716
    %v901 = vmul.f32 %v900, %v716
    %v902 = vmul.f32 %v901, %v900
    %v903 = vmul.f32 0.5, %v902
    %v904 = vsub.f32 1.5, %v903
    %v905 = vmul.f32 %v900, %v904
    %vm906 = vweird.f32 %v716
    %vm907 = vweird.f32 %v900
    %vm908 = vmor %vm906, %vm907
    %v909 = vsel %vm908, %v900, %v905
    %v910 = vrsqrt.pop %v735
    %v911 = vmul.f32 %v910, %v735
    %v912 = vmul.f32 %v911, %v910
    %v913 = vmul.f32 0.5, %v912
    %v914 = vsub.f32 1.5, %v913
    %v915 = vmul.f32 %v910, %v914
    %vm916 = vweird.f32 %v735
    %vm917 = vweird.f32 %v910
    %vm918 = vmor %vm916, %vm917
    %v919 = vsel %vm918, %v910, %v915
    %v920 = vrsqrt.pop %v754
    %v921 = vmul.f32 %v920, %v754
    %v922 = vmul.f32 %v921, %v920
    %v923 = vmul.f32 0.5, %v922
    %v924 = vsub.f32 1.5, %v923
    %v925 = vmul.f32 %v920, %v924
    %vm926 = vweird.f32 %v754
    %vm927 = vweird.f32 %v920
    %vm928 = vmor %vm926, %vm927
    %v929 = vsel %vm928, %v920, %v925
    %v930 = vrsqrt.pop %v773
    %v931 = vmul.f32 %v930, %v773
    %v932 = vmul.f32 %v931, %v930
    %v933 = vmul.f32 0.5, %v932
    %v934 = vsub.f32 1.5, %v933
    %v935 = vmul.f32 %v930, %v934
    %vm936 = vweird.f32 %v773
    %vm937 = vweird.f32 %v930
    %vm938 = vmor %vm936, %vm937
    %v939 = vsel %vm938, %v930, %v935
    %v940 = vrsqrt.pop %v643
    %v941 = vmul.f32 %v940, %v643
    %v942 = vmul.f32 %v941, %v940
    %v943 = vmul.f32 0.5, %v942
    %v944 = vsub.f32 1.5, %v943
    %v945 = vmul.f32 %v940, %v944
    %vm946 = vweird.f32 %v643
    %vm947 = vweird.f32 %v940
    %vm948 = vmor %vm946, %vm947
    %v949 = vsel %vm948, %v940, %v945
    %v950 = vrsqrt.pop %v662
    %v951 = vmul.f32 %v950, %v662
    %v952 = vmul.f32 %v951, %v950
    %v953 = vmul.f32 0.5, %v952
    %v954 = vsub.f32 1.5, %v953
    %v955 = vmul.f32 %v950, %v954
    %vm956 = vweird.f32 %v662
    %vm957 = vweird.f32 %v950
    %vm958 = vmor %vm956, %vm957
    %v959 = vsel %vm958, %v950, %v955
    %v960 = vrsqrt.pop %v681
    %v961 = vmul.f32 %v960, %v681
    %v962 = vmul.f32 %v961, %v960
    %v963 = vmul.f32 0.5, %v962
    %v964 = vsub.f32 1.5, %v963
    %v965 = vmul.f32 %v960, %v964
    %vm966 = vweird.f32 %v681
    %vm967 = vweird.f32 %v960
    %vm968 = vmor %vm966, %vm967
    %v969 = vsel %vm968, %v960, %v965
    %v970 = vrsqrt.pop %v700
    %v971 = vmul.f32 %v970, %v700
    %v972 = vmul.f32 %v971, %v970
    %v973 = vmul.f32 0.5, %v972
    %v974 = vsub.f32 1.5, %v973
    %v975 = vmul.f32 %v970, %v974
    %vm976 = vweird.f32 %v700
    %vm977 = vweird.f32 %v970
    %vm978 = vmor %vm976, %vm977
    %v979 = vsel %vm978, %v970, %v975
    %v980 = vrsqrt.pop %v719
    %v981 = vmul.f32 %v980, %v719
    %v982 = vmul.f32 %v981, %v980
    %v983 = vmul.f32 0.5, %v982
    %v984 = vsub.f32 1.5, %v983
    %v985 = vmul.f32 %v980, %v984
    %vm986 = vweird.f32 %v719
    %vm987 = vweird.f32 %v980
    %vm988 = vmor %vm986, %vm987
    %v989 = vsel %vm988, %v980, %v985
    %v990 = vrsqrt.pop %v738
    %v991 = vmul.f32 %v990, %v738
    %v992 = vmul.f32 %v991, %v990
    %v993 = vmul.f32 0.5, %v992
    %v994 = vsub.f32 1.5, %v993
    %v995 = vmul.f32 %v990, %v994
    %vm996 = vweird.f32 %v738
    %vm997 = vweird.f32 %v990
    %vm998 = vmor %vm996, %vm997
    %v999 = vsel %vm998, %v990, %v995
    %v1000 = vrsqrt.pop %v757
    %v1001 = vmul.f32 %v1000, %v757
    %v1002 = vmul.f32 %v1001, %v1000
    %v1003 = vmul.f32 0.5, %v1002
    %v1004 = vsub.f32 1.5, %v1003
    %v1005 = vmul.f32 %v1000, %v1004
    %vm1006 = vweird.f32 %v757
    %vm1007 = vweird.f32 %v1000
    %vm1008 = vmor %vm1006, %vm1007
    %v1009 = vsel %vm1008, %v1000, %v1005
    %v1010 = vrsqrt.pop %v776
    %v1011 = vmul.f32 %v1010, %v776
    %v1012 = vmul.f32 %v1011, %v1010
    %v1013 = vmul.f32 0.5, %v1012
    %v1014 = vsub.f32 1.5, %v1013
    %v1015 = vmul.f32 %v1010, %v1014
    %vm1016 = vweird.f32 %v776
    %vm1017 = vweird.f32 %v1010
    %vm1018 = vmor %vm1016, %vm1017
    %v1019 = vsel %vm1018, %v1010, %v1015
    %v1020 = vrsqrt.pop %v645
    %v1021 = vmul.f32 %v1020, %v645
    %v1022 = vmul.f32 %v1021, %v1020
    %v1023 = vmul.f32 0.5, %v1022
    %v1024 = vsub.f32 1.5, %v1023
    %v1025 = vmul.f32 %v1020, %v1024
    %vm1026 = vweird.f32 %v645
    %vm1027 = vweird.f32 %v1020
    %vm1028 = vmor %vm1026, %vm1027
    %v1029 = vsel %vm1028, %v1020, %v1025
    %v1030 = vrsqrt.pop %v664
    %v1031 = vmul.f32 %v1030, %v664
    %v1032 = vmul.f32 %v1031, %v1030
    %v1033 = vmul.f32 0.5, %v1032
    %v1034 = vsub.f32 1.5, %v1033
    %v1035 = vmul.f32 %v1030, %v1034
    %vm1036 = vweird.f32 %v664
    %vm1037 = vweird.f32 %v1030
    %vm1038 = vmor %vm1036, %vm1037
    %v1039 = vsel %vm1038, %v1030, %v1035
    %v1040 = vrsqrt.pop %v683
    %v1041 = vmul.f32 %v1040, %v683
    %v1042 = vmul.f32 %v1041, %v1040
    %v1043 = vmul.f32 0.5, %v1042
    %v1044 = vsub.f32 1.5, %v1043
    %v1045 = vmul.f32 %v1040, %v1044
    %vm1046 = vweird.f32 %v683
    %vm1047 = vweird.f32 %v1040
    %vm1048 = vmor %vm1046, %vm1047
    %v1049 = vsel %vm1048, %v1040, %v1045
    %v1050 = vrsqrt.pop %v702
    %v1051 = vmul.f32 %v1050, %v702
    %v1052 = vmul.f32 %v1051, %v1050
    %v1053 = vmul.f32 0.5, %v1052
    %v1054 = vsub.f32 1.5, %v1053
    %v1055 = vmul.f32 %v1050, %v1054
    %vm1056 = vweird.f32 %v702
    %vm1057 = vweird.f32 %v1050
    %vm1058 = vmor %vm1056, %vm1057
    %v1059 = vsel %vm1058, %v1050, %v1055
    %v1060 = vrsqrt.pop %v721
    %v1061 = vmul.f32 %v1060, %v721
    %v1062 = vmul.f32 %v1061, %v1060
    %v1063 = vmul.f32 0.5, %v1062
    %v1064 = vsub.f32 1.5, %v1063
    %v1065 = vmul.f32 %v1060, %v1064
    %vm1066 = vweird.f32 %v721
    %vm1067 = vweird.f32 %v1060
    %vm1068 = vmor %vm1066, %vm1067
    %v1069 = vsel %vm1068, %v1060, %v1065
    %v1070 = vrsqrt.pop %v740
    %v1071 = vmul.f32 %v1070, %v740
    %v1072 = vmul.f32 %v1071, %v1070
    %v1073 = vmul.f32 0.5, %v1072
    %v1074 = vsub.f32 1.5, %v1073
    %v1075 = vmul.f32 %v1070, %v1074
    %vm1076 = vweird.f32 %v740
    %vm1077 = vweird.f32 %v1070
    %vm1078 = vmor %vm1076, %vm1077
    %v1079 = vsel %vm1078, %v1070, %v1075
    %v1080 = vrsqrt.pop %v759
    %v1081 = vmul.f32 %v1080, %v759
    %v1082 = vmul.f32 %v1081, %v1080
    %v1083 = vmul.f32 0.5, %v1082
    %v1084 = vsub.f32 1.5, %v1083
    %v1085 = vmul.f32 %v1080, %v1084
    %vm1086 = vweird.f32 %v759
    %vm1087 = vweird.f32 %v1080
    %vm1088 = vmor %vm1086, %vm1087
    %v1089 = vsel %vm1088, %v1080, %v1085
    %v1090 = vrsqrt.pop %v778
    %v1091 = vmul.f32 %v1090, %v778
    %v1092 = vmul.f32 %v1091, %v1090
    %v1093 = vmul.f32 0.5, %v1092
    %v1094 = vsub.f32 1.5, %v1093
    %v1095 = vmul.f32 %v1090, %v1094
    %vm1096 = vweird.f32 %v778
    %vm1097 = vweird.f32 %v1090
    %vm1098 = vmor %vm1096, %vm1097
    %v1099 = vsel %vm1098, %v1090, %v1095
    %v1100 = vmul.f32 %v548, %v789
    %v1101 = vmul.f32 %v549, %v799
    %v1102 = vmul.f32 %v550, %v809
    %v1103 = vmul.f32 %v551, %v819
    %v1104 = vmul.f32 %v552, %v829
    %v1105 = vmul.f32 %v553, %v839
    %v1106 = vmul.f32 %v554, %v849
    %v1107 = vmul.f32 %v555, %v859
    %v1108 = vmul.f32 %v556, %v869
    %v1109 = vmul.f32 %v557, %v879
    %v1110 = vmul.f32 %v558, %v889
    %v1111 = vmul.f32 %v559, %v899
    %v1112 = vmul.f32 %v560, %v909
    %v1113 = vmul.f32 %v561, %v919
    %v1114 = vmul.f32 %v562, %v929
    %v1115 = vmul.f32 %v563, %v939
    %v1116 = vmul.f32 %v564, %v949
    %v1117 = vmul.f32 %v565, %v959
    %v1118 = vmul.f32 %v566, %v969
    %v1119 = vmul.f32 %v567, %v979
    %v1120 = vmul.f32 %v568, %v989
    %v1121 = vmul.f32 %v569, %v999
    %v1122 = vmul.f32 %v570, %v1009
    %v1123 = vmul.f32 %v571, %v1019
    %v1124 = vmul.f32 %v572, %v1029
    %v1125 = vmul.f32 %v573, %v1039
    %v1126 = vmul.f32 %v574, %v1049
    %v1127 = vmul.f32 %v575, %v1059
    %v1128 = vmul.f32 %v576, %v1069
    %v1129 = vmul.f32 %v577, %v1079
    %v1130 = vmul.f32 %v578, %v1089
    %v1131 = vmul.f32 %v579, %v1099
    %v1132 = vld [vmem:[%s3] sm:$0xff]
    %v1133 = vld [vmem:[%s3 + $0x8] sm:$0xff]
    %v1134 = vld [vmem:[%s3 + $0x10] sm:$0xff]
    %v1135 = vld [vmem:[%s3 + $0x18] sm:$0xff]
    %1137 = vset.pattern.permute.xlu0 0
    %1138 = vperm.xlu0 %1137, %v1132
    %v1139 = vpop.permute.xlu0 %1138
    %1142 = vset.pattern.permute.xlu0 0
    %1143 = vperm.xlu0 %1142, %v1133
    %v1144 = vpop.permute.xlu0 %1143
    %1147 = vset.pattern.permute.xlu0 0
    %1148 = vperm.xlu0 %1147, %v1134
    %v1149 = vpop.permute.xlu0 %1148
    %1152 = vset.pattern.permute.xlu0 0
    %1153 = vperm.xlu0 %1152, %v1135
    %v1154 = vpop.permute.xlu0 %1153
    %v1156 = vmul.f32 %v1100, %v1139
    %v1157 = vmul.f32 %v1101, %v1139
    %v1158 = vmul.f32 %v1102, %v1139
    %v1159 = vmul.f32 %v1103, %v1139
    %v1160 = vmul.f32 %v1108, %v1144
    %v1161 = vmul.f32 %v1109, %v1144
    %v1162 = vmul.f32 %v1110, %v1144
    %v1163 = vmul.f32 %v1111, %v1144
    %v1164 = vmul.f32 %v1116, %v1149
    %v1165 = vmul.f32 %v1117, %v1149
    %v1166 = vmul.f32 %v1118, %v1149
    %v1167 = vmul.f32 %v1119, %v1149
    %v1168 = vmul.f32 %v1124, %v1154
    %v1169 = vmul.f32 %v1125, %v1154
    %v1170 = vmul.f32 %v1126, %v1154
    %v1171 = vmul.f32 %v1127, %v1154
    %v1172 = vld [vmem:[%s4] sm:$0xff]
    %v1173 = vld [vmem:[%s4 + $0x8] sm:$0xff]
    %v1174 = vld [vmem:[%s4 + $0x10] sm:$0xff]
    %v1175 = vld [vmem:[%s4 + $0x18] sm:$0xff]
    %1177 = vset.pattern.permute.xlu0 0
    %1178 = vperm.xlu0 %1177, %v1172
    %v1179 = vpop.permute.xlu0 %1178
    %1182 = vset.pattern.permute.xlu0 0
    %1183 = vperm.xlu0 %1182, %v1173
    %v1184 = vpop.permute.xlu0 %1183
    %1187 = vset.pattern.permute.xlu0 0
    %1188 = vperm.xlu0 %1187, %v1174
    %v1189 = vpop.permute.xlu0 %1188
    %1192 = vset.pattern.permute.xlu0 0
    %1193 = vperm.xlu0 %1192, %v1175
    %v1194 = vpop.permute.xlu0 %1193
    %v1196 = vadd.f32 %v1156, %v1179
    %v1197 = vadd.f32 %v1157, %v1179
    %v1198 = vadd.f32 %v1158, %v1179
    %v1199 = vadd.f32 %v1159, %v1179
    %v1200 = vadd.f32 %v1160, %v1184
    %v1201 = vadd.f32 %v1161, %v1184
    %v1202 = vadd.f32 %v1162, %v1184
    %v1203 = vadd.f32 %v1163, %v1184
    %v1204 = vadd.f32 %v1164, %v1189
    %v1205 = vadd.f32 %v1165, %v1189
    %v1206 = vadd.f32 %v1166, %v1189
    %v1207 = vadd.f32 %v1167, %v1189
    %v1208 = vadd.f32 %v1168, %v1194
    %v1209 = vadd.f32 %v1169, %v1194
    %v1210 = vadd.f32 %v1170, %v1194
    %v1211 = vadd.f32 %v1171, %v1194
    %v1212 = vpack.c.bf16 %v1197, %v1196
    %v1213 = vpack.c.bf16 %v1199, %v1198
    %v1214 = vpack.c.bf16 %v1201, %v1200
    %v1215 = vpack.c.bf16 %v1203, %v1202
    %v1216 = vpack.c.bf16 %v1205, %v1204
    %v1217 = vpack.c.bf16 %v1207, %v1206
    %v1218 = vpack.c.bf16 %v1209, %v1208
    %v1219 = vpack.c.bf16 %v1211, %v1210
    %v1220 = vld [vmem:[%s5] sm:$0xff]
    %v1221 = vld [vmem:[%s5 + $0x8] sm:$0xff]
    %v1222 = vld [vmem:[%s5 + $0x10] sm:$0xff]
    %v1223 = vld [vmem:[%s5 + $0x18] sm:$0xff]
    %1225 = vset.pattern.permute.xlu0 0
    %1226 = vperm.xlu0 %1225, %v1220
    %v1227 = vpop.permute.xlu0 %1226
    %1230 = vset.pattern.permute.xlu0 0
    %1231 = vperm.xlu0 %1230, %v1221
    %v1232 = vpop.permute.xlu0 %1231
    %1235 = vset.pattern.permute.xlu0 0
    %1236 = vperm.xlu0 %1235, %v1222
    %v1237 = vpop.permute.xlu0 %1236
    %1240 = vset.pattern.permute.xlu0 0
    %1241 = vperm.xlu0 %1240, %v1223
    %v1242 = vpop.permute.xlu0 %1241
    %v1244 = vmul.f32 %v1104, %v1227
    %v1245 = vmul.f32 %v1105, %v1227
    %v1246 = vmul.f32 %v1106, %v1227
    %v1247 = vmul.f32 %v1107, %v1227
    %v1248 = vmul.f32 %v1112, %v1232
    %v1249 = vmul.f32 %v1113, %v1232
    %v1250 = vmul.f32 %v1114, %v1232
    %v1251 = vmul.f32 %v1115, %v1232
    %v1252 = vmul.f32 %v1120, %v1237
    %v1253 = vmul.f32 %v1121, %v1237
    %v1254 = vmul.f32 %v1122, %v1237
    %v1255 = vmul.f32 %v1123, %v1237
    %v1256 = vmul.f32 %v1128, %v1242
    %v1257 = vmul.f32 %v1129, %v1242
    %v1258 = vmul.f32 %v1130, %v1242
    %v1259 = vmul.f32 %v1131, %v1242
    %v1260 = vld [vmem:[%s6] sm:$0xff]
    %v1261 = vld [vmem:[%s6 + $0x8] sm:$0xff]
    %v1262 = vld [vmem:[%s6 + $0x10] sm:$0xff]
    %v1263 = vld [vmem:[%s6 + $0x18] sm:$0xff]
    %1265 = vset.pattern.permute.xlu0 0
    %1266 = vperm.xlu0 %1265, %v1260
    %v1267 = vpop.permute.xlu0 %1266
    %1270 = vset.pattern.permute.xlu0 0
    %1271 = vperm.xlu0 %1270, %v1261
    %v1272 = vpop.permute.xlu0 %1271
    %1275 = vset.pattern.permute.xlu0 0
    %1276 = vperm.xlu0 %1275, %v1262
    %v1277 = vpop.permute.xlu0 %1276
    %1280 = vset.pattern.permute.xlu0 0
    %1281 = vperm.xlu0 %1280, %v1263
    %v1282 = vpop.permute.xlu0 %1281
    %v1284 = vadd.f32 %v1244, %v1267
    %v1285 = vadd.f32 %v1245, %v1267
    %v1286 = vadd.f32 %v1246, %v1267
    %v1287 = vadd.f32 %v1247, %v1267
    %v1288 = vadd.f32 %v1248, %v1272
    %v1289 = vadd.f32 %v1249, %v1272
    %v1290 = vadd.f32 %v1250, %v1272
    %v1291 = vadd.f32 %v1251, %v1272
    %v1292 = vadd.f32 %v1252, %v1277
    %v1293 = vadd.f32 %v1253, %v1277
    %v1294 = vadd.f32 %v1254, %v1277
    %v1295 = vadd.f32 %v1255, %v1277
    %v1296 = vadd.f32 %v1256, %v1282
    %v1297 = vadd.f32 %v1257, %v1282
    %v1298 = vadd.f32 %v1258, %v1282
    %v1299 = vadd.f32 %v1259, %v1282
    %v1300 = vpack.c.bf16 %v1285, %v1284
    %v1301 = vpack.c.bf16 %v1287, %v1286
    %v1302 = vpack.c.bf16 %v1289, %v1288
    %v1303 = vpack.c.bf16 %v1291, %v1290
    %v1304 = vpack.c.bf16 %v1293, %v1292
    %v1305 = vpack.c.bf16 %v1295, %v1294
    %v1306 = vpack.c.bf16 %v1297, %v1296
    %v1307 = vpack.c.bf16 %v1299, %v1298
    %v1308 = vpack.c.bf16 %v253, %v214
    %v1309 = vpack.c.bf16 %v331, %v292
    %v1310 = vpack.c.bf16 %v255, %v216
    %v1311 = vpack.c.bf16 %v333, %v294
    %v1312 = vpack.c.bf16 %v258, %v219
    %v1313 = vpack.c.bf16 %v336, %v297
    %v1314 = vpack.c.bf16 %v260, %v221
    %v1315 = vpack.c.bf16 %v338, %v299
    %v1316 = vld [vmem:[%s12] sm:$0xff]
    %v1317 = vld [vmem:[%s12 + $0x8] sm:$0xff]
    %v1318 = vld [vmem:[%s12 + $0x10] sm:$0xff]
    %v1319 = vld [vmem:[%s12 + $0x18] sm:$0xff]
    %v1324 = vunpack.c.l.b16 %v1300
    %v1325 = vunpack.c.h.b16 %v1300
    %v1326 = vunpack.c.l.b16 %v1302
    %v1327 = vunpack.c.h.b16 %v1302
    %v1328 = vunpack.c.l.b16 %v1304
    %v1329 = vunpack.c.h.b16 %v1304
    %v1330 = vunpack.c.l.b16 %v1306
    %v1331 = vunpack.c.h.b16 %v1306
    %v1332 = vpack.c.b16 %v1326, %v1324
    %v1333 = vpack.c.b16 %v1327, %v1325
    %v1334 = vpack.c.b16 %v1330, %v1328
    %v1335 = vpack.c.b16 %v1331, %v1329
    %v1344 = vunpack.c.l.b16 %v1212
    %v1345 = vunpack.c.h.b16 %v1212
    %v1346 = vunpack.c.l.b16 %v1214
    %v1347 = vunpack.c.h.b16 %v1214
    %v1348 = vunpack.c.l.b16 %v1216
    %v1349 = vunpack.c.h.b16 %v1216
    %v1350 = vunpack.c.l.b16 %v1218
    %v1351 = vunpack.c.h.b16 %v1218
    %v1352 = vpack.c.b16 %v1346, %v1344
    %v1353 = vpack.c.b16 %v1347, %v1345
    %v1354 = vpack.c.b16 %v1350, %v1348
    %v1355 = vpack.c.b16 %v1351, %v1349
    %1360 = vmatpush.bf16.xpose.msra.mxu0 0
    %1361 = vmatpush.bf16.xpose.msra.mxu0 0
    %1362 = vmatpush.bf16.xpose.msra.mxu0 0
    %1363 = vmatpush.bf16.xpose.msra.mxu0 0
    %1364 = vmatpush.bf16.xpose.msra.mxu0 0
    %1365 = vmatpush.bf16.xpose.msra.mxu0 0
    %1366 = vmatpush.bf16.xpose.msra.mxu0 %v1354
    %1367 = vmatpush.bf16.xpose.msra.mxu0 %v1352
    %1368 = vmatmul.bf16.gmra.mxu0 %v1332
    %v1369 = vpop.f32.mrf.mxu0
    %v1370 = vadd.f32 0.0, %v1369
    %v1371 = vpop.f32.mrf.mxu0
    %v1372 = vadd.f32 0.0, %v1371
    %1373 = vmatmul.bf16.gmra.mxu0 %v1334
    %v1374 = vpop.f32.mrf.mxu0
    %v1375 = vadd.f32 0.0, %v1374
    %v1376 = vpop.f32.mrf.mxu0
    %v1377 = vadd.f32 0.0, %v1376
    %1378 = vdwg.mxu0
    %1379 = vmatpush.bf16.xpose.msra.mxu0 0
    %1380 = vmatpush.bf16.xpose.msra.mxu0 0
    %1381 = vmatpush.bf16.xpose.msra.mxu0 0
    %1382 = vmatpush.bf16.xpose.msra.mxu0 0
    %1383 = vmatpush.bf16.xpose.msra.mxu0 0
    %1384 = vmatpush.bf16.xpose.msra.mxu0 0
    %1385 = vmatpush.bf16.xpose.msra.mxu0 %v1355
    %1386 = vmatpush.bf16.xpose.msra.mxu0 %v1353
    %1387 = vmatmul.bf16.gmra.mxu0 %v1333
    %v1388 = vpop.f32.mrf.mxu0
    %v1389 = vadd.f32 %v1370, %v1388
    %v1390 = vpop.f32.mrf.mxu0
    %v1391 = vadd.f32 %v1372, %v1390
    %1392 = vmatmul.bf16.gmra.mxu0 %v1335
    %v1393 = vpop.f32.mrf.mxu0
    %v1394 = vadd.f32 %v1375, %v1393
    %v1395 = vpop.f32.mrf.mxu0
    %v1396 = vadd.f32 %v1377, %v1395
    %1397 = vdwg.mxu0
    %v1398 = vmul.f32 %v1389, %v1316
    %v1399 = vmul.f32 %v1391, %v1317
    %v1400 = vmul.f32 %v1394, %v1318
    %v1401 = vmul.f32 %v1396, %v1319
    %v1402 = vpack.c.bf16 %v1399, %v1398
    %v1403 = vpack.c.bf16 %v1401, %v1400
    %v1408 = vunpack.c.l.b16 %v1308
    %v1409 = vunpack.c.h.b16 %v1308
    %v1410 = vunpack.c.l.b16 %v1310
    %v1411 = vunpack.c.h.b16 %v1310
    %v1412 = vunpack.c.l.b16 %v1312
    %v1413 = vunpack.c.h.b16 %v1312
    %v1414 = vunpack.c.l.b16 %v1314
    %v1415 = vunpack.c.h.b16 %v1314
    %v1416 = vpack.c.b16 %v1410, %v1408
    %v1417 = vpack.c.b16 %v1411, %v1409
    %v1418 = vpack.c.b16 %v1414, %v1412
    %v1419 = vpack.c.b16 %v1415, %v1413
    %v1425 = vsel %vm185, %v1402, 0
    %v1428 = vsel %vm185, %v1403, 0
    %1430 = vmatpush.bf16.msra.mxu0 0
    %1431 = vmatpush.bf16.msra.mxu0 0
    %1432 = vmatpush.bf16.msra.mxu0 0
    %1433 = vmatpush.bf16.msra.mxu0 0
    %1434 = vmatpush.bf16.msra.mxu0 0
    %1435 = vmatpush.bf16.msra.mxu0 0
    %1436 = vmatpush.bf16.msra.mxu0 %v1418
    %1437 = vmatpush.bf16.msra.mxu0 %v1416
    %1438 = vmatmul.bf16.gmra.mxu0 %v1425
    %v1439 = vpop.f32.mrf.mxu0
    %v1440 = vadd.f32 0.0, %v1439
    %v1441 = vpop.f32.mrf.mxu0
    %v1442 = vadd.f32 0.0, %v1441
    %1443 = vmatmul.bf16.gmra.mxu0 %v1428
    %v1444 = vpop.f32.mrf.mxu0
    %v1445 = vadd.f32 0.0, %v1444
    %v1446 = vpop.f32.mrf.mxu0
    %v1447 = vadd.f32 0.0, %v1446
    %1448 = vdwg.mxu0
    %1449 = vmatpush.bf16.msra.mxu0 0
    %1450 = vmatpush.bf16.msra.mxu0 0
    %1451 = vmatpush.bf16.msra.mxu0 0
    %1452 = vmatpush.bf16.msra.mxu0 0
    %1453 = vmatpush.bf16.msra.mxu0 0
    %1454 = vmatpush.bf16.msra.mxu0 0
    %1455 = vmatpush.bf16.msra.mxu0 %v1419
    %1456 = vmatpush.bf16.msra.mxu0 %v1417
    %1457 = vmatmul.bf16.gmra.mxu0 %v1425
    %v1458 = vpop.f32.mrf.mxu0
    %v1459 = vadd.f32 0.0, %v1458
    %v1460 = vpop.f32.mrf.mxu0
    %v1461 = vadd.f32 0.0, %v1460
    %1462 = vmatmul.bf16.gmra.mxu0 %v1428
    %v1463 = vpop.f32.mrf.mxu0
    %v1464 = vadd.f32 0.0, %v1463
    %v1465 = vpop.f32.mrf.mxu0
    %v1466 = vadd.f32 0.0, %v1465
    %1467 = vdwg.mxu0
    %v1472 = vunpack.c.l.b16 %v1301
    %v1473 = vunpack.c.h.b16 %v1301
    %v1474 = vunpack.c.l.b16 %v1303
    %v1475 = vunpack.c.h.b16 %v1303
    %v1476 = vunpack.c.l.b16 %v1305
    %v1477 = vunpack.c.h.b16 %v1305
    %v1478 = vunpack.c.l.b16 %v1307
    %v1479 = vunpack.c.h.b16 %v1307
    %v1480 = vpack.c.b16 %v1474, %v1472
    %v1481 = vpack.c.b16 %v1475, %v1473
    %v1482 = vpack.c.b16 %v1478, %v1476
    %v1483 = vpack.c.b16 %v1479, %v1477
    %v1492 = vunpack.c.l.b16 %v1213
    %v1493 = vunpack.c.h.b16 %v1213
    %v1494 = vunpack.c.l.b16 %v1215
    %v1495 = vunpack.c.h.b16 %v1215
    %v1496 = vunpack.c.l.b16 %v1217
    %v1497 = vunpack.c.h.b16 %v1217
    %v1498 = vunpack.c.l.b16 %v1219
    %v1499 = vunpack.c.h.b16 %v1219
    %v1500 = vpack.c.b16 %v1494, %v1492
    %v1501 = vpack.c.b16 %v1495, %v1493
    %v1502 = vpack.c.b16 %v1498, %v1496
    %v1503 = vpack.c.b16 %v1499, %v1497
    %1508 = vmatpush.bf16.xpose.msra.mxu0 0
    %1509 = vmatpush.bf16.xpose.msra.mxu0 0
    %1510 = vmatpush.bf16.xpose.msra.mxu0 0
    %1511 = vmatpush.bf16.xpose.msra.mxu0 0
    %1512 = vmatpush.bf16.xpose.msra.mxu0 0
    %1513 = vmatpush.bf16.xpose.msra.mxu0 0
    %1514 = vmatpush.bf16.xpose.msra.mxu0 %v1502
    %1515 = vmatpush.bf16.xpose.msra.mxu0 %v1500
    %1516 = vmatmul.bf16.gmra.mxu0 %v1480
    %v1517 = vpop.f32.mrf.mxu0
    %v1518 = vadd.f32 0.0, %v1517
    %v1519 = vpop.f32.mrf.mxu0
    %v1520 = vadd.f32 0.0, %v1519
    %1521 = vmatmul.bf16.gmra.mxu0 %v1482
    %v1522 = vpop.f32.mrf.mxu0
    %v1523 = vadd.f32 0.0, %v1522
    %v1524 = vpop.f32.mrf.mxu0
    %v1525 = vadd.f32 0.0, %v1524
    %1526 = vdwg.mxu0
    %1527 = vmatpush.bf16.xpose.msra.mxu0 0
    %1528 = vmatpush.bf16.xpose.msra.mxu0 0
    %1529 = vmatpush.bf16.xpose.msra.mxu0 0
    %1530 = vmatpush.bf16.xpose.msra.mxu0 0
    %1531 = vmatpush.bf16.xpose.msra.mxu0 0
    %1532 = vmatpush.bf16.xpose.msra.mxu0 0
    %1533 = vmatpush.bf16.xpose.msra.mxu0 %v1503
    %1534 = vmatpush.bf16.xpose.msra.mxu0 %v1501
    %1535 = vmatmul.bf16.gmra.mxu0 %v1481
    %v1536 = vpop.f32.mrf.mxu0
    %v1537 = vadd.f32 %v1518, %v1536
    %v1538 = vpop.f32.mrf.mxu0
    %v1539 = vadd.f32 %v1520, %v1538
    %1540 = vmatmul.bf16.gmra.mxu0 %v1483
    %v1541 = vpop.f32.mrf.mxu0
    %v1542 = vadd.f32 %v1523, %v1541
    %v1543 = vpop.f32.mrf.mxu0
    %v1544 = vadd.f32 %v1525, %v1543
    %1545 = vdwg.mxu0
    %v1546 = vmul.f32 %v1537, %v1316
    %v1547 = vmul.f32 %v1539, %v1317
    %v1548 = vmul.f32 %v1542, %v1318
    %v1549 = vmul.f32 %v1544, %v1319
    %v1550 = vpack.c.bf16 %v1547, %v1546
    %v1551 = vpack.c.bf16 %v1549, %v1548
    %v1556 = vunpack.c.l.b16 %v1309
    %v1557 = vunpack.c.h.b16 %v1309
    %v1558 = vunpack.c.l.b16 %v1311
    %v1559 = vunpack.c.h.b16 %v1311
    %v1560 = vunpack.c.l.b16 %v1313
    %v1561 = vunpack.c.h.b16 %v1313
    %v1562 = vunpack.c.l.b16 %v1315
    %v1563 = vunpack.c.h.b16 %v1315
    %v1564 = vpack.c.b16 %v1558, %v1556
    %v1565 = vpack.c.b16 %v1559, %v1557
    %v1566 = vpack.c.b16 %v1562, %v1560
    %v1567 = vpack.c.b16 %v1563, %v1561
    %v1573 = vsel %vm185, %v1550, 0
    %v1576 = vsel %vm185, %v1551, 0
    %1578 = vmatpush.bf16.msra.mxu0 0
    %1579 = vmatpush.bf16.msra.mxu0 0
    %1580 = vmatpush.bf16.msra.mxu0 0
    %1581 = vmatpush.bf16.msra.mxu0 0
    %1582 = vmatpush.bf16.msra.mxu0 0
    %1583 = vmatpush.bf16.msra.mxu0 0
    %1584 = vmatpush.bf16.msra.mxu0 %v1566
    %1585 = vmatpush.bf16.msra.mxu0 %v1564
    %1586 = vmatmul.bf16.gmra.mxu0 %v1573
    %v1587 = vpop.f32.mrf.mxu0
    %v1588 = vadd.f32 0.0, %v1587
    %v1589 = vpop.f32.mrf.mxu0
    %v1590 = vadd.f32 0.0, %v1589
    %1591 = vmatmul.bf16.gmra.mxu0 %v1576
    %v1592 = vpop.f32.mrf.mxu0
    %v1593 = vadd.f32 0.0, %v1592
    %v1594 = vpop.f32.mrf.mxu0
    %v1595 = vadd.f32 0.0, %v1594
    %1596 = vdwg.mxu0
    %1597 = vmatpush.bf16.msra.mxu0 0
    %1598 = vmatpush.bf16.msra.mxu0 0
    %1599 = vmatpush.bf16.msra.mxu0 0
    %1600 = vmatpush.bf16.msra.mxu0 0
    %1601 = vmatpush.bf16.msra.mxu0 0
    %1602 = vmatpush.bf16.msra.mxu0 0
    %1603 = vmatpush.bf16.msra.mxu0 %v1567
    %1604 = vmatpush.bf16.msra.mxu0 %v1565
    %1605 = vmatmul.bf16.gmra.mxu0 %v1573
    %v1606 = vpop.f32.mrf.mxu0
    %v1607 = vadd.f32 0.0, %v1606
    %v1608 = vpop.f32.mrf.mxu0
    %v1609 = vadd.f32 0.0, %v1608
    %1610 = vmatmul.bf16.gmra.mxu0 %v1576
    %v1611 = vpop.f32.mrf.mxu0
    %v1612 = vadd.f32 0.0, %v1611
    %v1613 = vpop.f32.mrf.mxu0
    %v1614 = vadd.f32 0.0, %v1613
    %1615 = vdwg.mxu0
    %v1616 = vadd.f32 %v1440, %v46
    %v1617 = vadd.f32 %v1459, %v47
    %v1618 = vadd.f32 %v1588, %v55
    %v1619 = vadd.f32 %v1607, %v56
    %v1620 = vadd.f32 %v1442, %v48
    %v1621 = vadd.f32 %v1461, %v49
    %v1622 = vadd.f32 %v1590, %v57
    %v1623 = vadd.f32 %v1609, %v58
    %v1624 = vadd.f32 %v1445, %v50
    %v1625 = vadd.f32 %v1464, %v51
    %v1626 = vadd.f32 %v1593, %v59
    %v1627 = vadd.f32 %v1612, %v60
    %v1628 = vadd.f32 %v1447, %v52
    %v1629 = vadd.f32 %v1466, %v53
    %v1630 = vadd.f32 %v1595, %v61
    %v1631 = vadd.f32 %v1614, %v62
    %v1632 = vld [vmem:[%s7] sm:$0xf]
    %v1633 = vld [vmem:[%s7 + $0x4] sm:$0xf]
    %v1634 = vld [vmem:[%s7 + $0x8] sm:$0xf]
    %v1635 = vld [vmem:[%s7 + $0xc] sm:$0xf]
    %v1636 = vpack.c.bf16 %v1620, %v1616
    %v1637 = vpack.c.bf16 %v1621, %v1617
    %v1638 = vpack.c.bf16 %v1622, %v1618
    %v1639 = vpack.c.bf16 %v1623, %v1619
    %v1640 = vpack.c.bf16 %v1628, %v1624
    %v1641 = vpack.c.bf16 %v1629, %v1625
    %v1642 = vpack.c.bf16 %v1630, %v1626
    %v1643 = vpack.c.bf16 %v1631, %v1627
    %v1644 = vld [vmem:[%s8] sm:$0xff]
    %v1645 = vld [vmem:[%s8 + $0x8] sm:$0xff]
    %v1646 = vld [vmem:[%s8 + $0x10] sm:$0xff]
    %v1647 = vld [vmem:[%s8 + $0x18] sm:$0xff]
    %1649 = vset.pattern.permute.xlu0 0
    %1650 = vperm.xlu0 %1649, %v1644
    %v1651 = vpop.permute.xlu0 %1650
    %1654 = vset.pattern.permute.xlu0 0
    %1655 = vperm.xlu0 %1654, %v1645
    %v1656 = vpop.permute.xlu0 %1655
    %1659 = vset.pattern.permute.xlu0 0
    %1660 = vperm.xlu0 %1659, %v1646
    %v1661 = vpop.permute.xlu0 %1660
    %1664 = vset.pattern.permute.xlu0 0
    %1665 = vperm.xlu0 %1664, %v1647
    %v1666 = vpop.permute.xlu0 %1665
    %v1672 = vunpack.c.l.b16 %v1632
    %v1673 = vunpack.c.l.b16 %v1633
    %v1674 = vunpack.c.l.b16 %v1634
    %v1675 = vunpack.c.l.b16 %v1635
    %v1676 = vpack.c.b16 %v1673, %v1672
    %v1677 = vpack.c.b16 %v1675, %v1674
    %v1679 = vsel %vm185, %v1676, 0
    %v1682 = vsel %vm185, %v1677, 0
    %1684 = vmatpush.bf16.msra.mxu0 0
    %1685 = vmatpush.bf16.msra.mxu0 0
    %1686 = vmatpush.bf16.msra.mxu0 0
    %1687 = vmatpush.bf16.msra.mxu0 0
    %1688 = vmatpush.bf16.msra.mxu0 0
    %1689 = vmatpush.bf16.msra.mxu0 0
    %1690 = vmatpush.bf16.msra.mxu0 %v1640
    %1691 = vmatpush.bf16.msra.mxu0 %v1636
    %1692 = vmatmul.bf16.gmra.mxu0 %v1679
    %v1693 = vpop.f32.mrf.mxu0
    %v1694 = vadd.f32 %v1651, %v1693
    %v1695 = vpop.f32.mrf.mxu0
    %v1696 = vadd.f32 %v1656, %v1695
    %1697 = vmatmul.bf16.gmra.mxu0 %v1682
    %v1698 = vpop.f32.mrf.mxu0
    %v1699 = vadd.f32 %v1661, %v1698
    %v1700 = vpop.f32.mrf.mxu0
    %v1701 = vadd.f32 %v1666, %v1700
    %1702 = vdwg.mxu0
    %1703 = vmatpush.bf16.msra.mxu0 0
    %1704 = vmatpush.bf16.msra.mxu0 0
    %1705 = vmatpush.bf16.msra.mxu0 0
    %1706 = vmatpush.bf16.msra.mxu0 0
    %1707 = vmatpush.bf16.msra.mxu0 0
    %1708 = vmatpush.bf16.msra.mxu0 0
    %1709 = vmatpush.bf16.msra.mxu0 %v1641
    %1710 = vmatpush.bf16.msra.mxu0 %v1637
    %1711 = vmatmul.bf16.gmra.mxu0 %v1679
    %v1712 = vpop.f32.mrf.mxu0
    %v1713 = vadd.f32 %v1651, %v1712
    %v1714 = vpop.f32.mrf.mxu0
    %v1715 = vadd.f32 %v1656, %v1714
    %1716 = vmatmul.bf16.gmra.mxu0 %v1682
    %v1717 = vpop.f32.mrf.mxu0
    %v1718 = vadd.f32 %v1661, %v1717
    %v1719 = vpop.f32.mrf.mxu0
    %v1720 = vadd.f32 %v1666, %v1719
    %1721 = vdwg.mxu0
    %1722 = vmatpush.bf16.msra.mxu0 0
    %1723 = vmatpush.bf16.msra.mxu0 0
    %1724 = vmatpush.bf16.msra.mxu0 0
    %1725 = vmatpush.bf16.msra.mxu0 0
    %1726 = vmatpush.bf16.msra.mxu0 0
    %1727 = vmatpush.bf16.msra.mxu0 0
    %1728 = vmatpush.bf16.msra.mxu0 %v1642
    %1729 = vmatpush.bf16.msra.mxu0 %v1638
    %1730 = vmatmul.bf16.gmra.mxu0 %v1679
    %v1731 = vpop.f32.mrf.mxu0
    %v1732 = vadd.f32 %v1651, %v1731
    %v1733 = vpop.f32.mrf.mxu0
    %v1734 = vadd.f32 %v1656, %v1733
    %1735 = vmatmul.bf16.gmra.mxu0 %v1682
    %v1736 = vpop.f32.mrf.mxu0
    %v1737 = vadd.f32 %v1661, %v1736
    %v1738 = vpop.f32.mrf.mxu0
    %v1739 = vadd.f32 %v1666, %v1738
    %1740 = vdwg.mxu0
    %1741 = vmatpush.bf16.msra.mxu0 0
    %1742 = vmatpush.bf16.msra.mxu0 0
    %1743 = vmatpush.bf16.msra.mxu0 0
    %1744 = vmatpush.bf16.msra.mxu0 0
    %1745 = vmatpush.bf16.msra.mxu0 0
    %1746 = vmatpush.bf16.msra.mxu0 0
    %1747 = vmatpush.bf16.msra.mxu0 %v1643
    %1748 = vmatpush.bf16.msra.mxu0 %v1639
    %1749 = vmatmul.bf16.gmra.mxu0 %v1679
    %v1750 = vpop.f32.mrf.mxu0
    %v1751 = vadd.f32 %v1651, %v1750
    %v1752 = vpop.f32.mrf.mxu0
    %v1753 = vadd.f32 %v1656, %v1752
    %1754 = vmatmul.bf16.gmra.mxu0 %v1682
    %v1755 = vpop.f32.mrf.mxu0
    %v1756 = vadd.f32 %v1661, %v1755
    %v1757 = vpop.f32.mrf.mxu0
    %v1758 = vadd.f32 %v1666, %v1757
    %1759 = vdwg.mxu0
    %v1760 = vmul.f32 %v1694, 0.5
    %v1761 = vmul.f32 %v1713, 0.5
    %v1762 = vmul.f32 %v1732, 0.5
    %v1763 = vmul.f32 %v1751, 0.5
    %v1764 = vmul.f32 %v1696, 0.5
    %v1765 = vmul.f32 %v1715, 0.5
    %v1766 = vmul.f32 %v1734, 0.5
    %v1767 = vmul.f32 %v1753, 0.5
    %v1768 = vmul.f32 %v1699, 0.5
    %v1769 = vmul.f32 %v1718, 0.5
    %v1770 = vmul.f32 %v1737, 0.5
    %v1771 = vmul.f32 %v1756, 0.5
    %v1772 = vmul.f32 %v1701, 0.5
    %v1773 = vmul.f32 %v1720, 0.5
    %v1774 = vmul.f32 %v1739, 0.5
    %v1775 = vmul.f32 %v1758, 0.5
    %v1776 = vmul.f32 %v1694, 0.044715
    %v1777 = vmul.f32 %v1713, 0.044715
    %v1778 = vmul.f32 %v1732, 0.044715
    %v1779 = vmul.f32 %v1751, 0.044715
    %v1780 = vmul.f32 %v1696, 0.044715
    %v1781 = vmul.f32 %v1715, 0.044715
    %v1782 = vmul.f32 %v1734, 0.044715
    %v1783 = vmul.f32 %v1753, 0.044715
    %v1784 = vmul.f32 %v1699, 0.044715
    %v1785 = vmul.f32 %v1718, 0.044715
    %v1786 = vmul.f32 %v1737, 0.044715
    %v1787 = vmul.f32 %v1756, 0.044715
    %v1788 = vmul.f32 %v1701, 0.044715
    %v1789 = vmul.f32 %v1720, 0.044715
    %v1790 = vmul.f32 %v1739, 0.044715
    %v1791 = vmul.f32 %v1758, 0.044715
    %v1792 = vmul.f32 %v1776, %v1694
    %v1793 = vmul.f32 %v1777, %v1713
    %v1794 = vmul.f32 %v1778, %v1732
    %v1795 = vmul.f32 %v1779, %v1751
    %v1796 = vmul.f32 %v1780, %v1696
    %v1797 = vmul.f32 %v1781, %v1715
    %v1798 = vmul.f32 %v1782, %v1734
    %v1799 = vmul.f32 %v1783, %v1753
    %v1800 = vmul.f32 %v1784, %v1699
    %v1801 = vmul.f32 %v1785, %v1718
    %v1802 = vmul.f32 %v1786, %v1737
    %v1803 = vmul.f32 %v1787, %v1756
    %v1804 = vmul.f32 %v1788, %v1701
    %v1805 = vmul.f32 %v1789, %v1720
    %v1806 = vmul.f32 %v1790, %v1739
    %v1807 = vmul.f32 %v1791, %v1758
    %v1808 = vmul.f32 %v1792, %v1694
    %v1809 = vmul.f32 %v1793, %v1713
    %v1810 = vmul.f32 %v1794, %v1732
    %v1811 = vmul.f32 %v1795, %v1751
    %v1812 = vmul.f32 %v1796, %v1696
    %v1813 = vmul.f32 %v1797, %v1715
    %v1814 = vmul.f32 %v1798, %v1734
    %v1815 = vmul.f32 %v1799, %v1753
    %v1816 = vmul.f32 %v1800, %v1699
    %v1817 = vmul.f32 %v1801, %v1718
    %v1818 = vmul.f32 %v1802, %v1737
    %v1819 = vmul.f32 %v1803, %v1756
    %v1820 = vmul.f32 %v1804, %v1701
    %v1821 = vmul.f32 %v1805, %v1720
    %v1822 = vmul.f32 %v1806, %v1739
    %v1823 = vmul.f32 %v1807, %v1758
    %v1824 = vadd.f32 %v1694, %v1808
    %v1825 = vadd.f32 %v1713, %v1809
    %v1826 = vadd.f32 %v1732, %v1810
    %v1827 = vadd.f32 %v1751, %v1811
    %v1828 = vadd.f32 %v1696, %v1812
    %v1829 = vadd.f32 %v1715, %v1813
    %v1830 = vadd.f32 %v1734, %v1814
    %v1831 = vadd.f32 %v1753, %v1815
    %v1832 = vadd.f32 %v1699, %v1816
    %v1833 = vadd.f32 %v1718, %v1817
    %v1834 = vadd.f32 %v1737, %v1818
    %v1835 = vadd.f32 %v1756, %v1819
    %v1836 = vadd.f32 %v1701, %v1820
    %v1837 = vadd.f32 %v1720, %v1821
    %v1838 = vadd.f32 %v1739, %v1822
    %v1839 = vadd.f32 %v1758, %v1823
    %v1840 = vmul.f32 %v1824, 0.7978846
    %v1841 = vmul.f32 %v1825, 0.7978846
    %v1842 = vmul.f32 %v1826, 0.7978846
    %v1843 = vmul.f32 %v1827, 0.7978846
    %v1844 = vmul.f32 %v1828, 0.7978846
    %v1845 = vmul.f32 %v1829, 0.7978846
    %v1846 = vmul.f32 %v1830, 0.7978846
    %v1847 = vmul.f32 %v1831, 0.7978846
    %v1848 = vmul.f32 %v1832, 0.7978846
    %v1849 = vmul.f32 %v1833, 0.7978846
    %v1850 = vmul.f32 %v1834, 0.7978846
    %v1851 = vmul.f32 %v1835, 0.7978846
    %v1852 = vmul.f32 %v1836, 0.7978846
    %v1853 = vmul.f32 %v1837, 0.7978846
    %v1854 = vmul.f32 %v1838, 0.7978846
    %v1855 = vmul.f32 %v1839, 0.7978846
    %v1856 = vtanh.pop %v1840
    %v1857 = vtanh.pop %v1841
    %v1858 = vtanh.pop %v1842
    %v1859 = vtanh.pop %v1843
    %v1860 = vtanh.pop %v1844
    %v1861 = vtanh.pop %v1845
    %v1862 = vtanh.pop %v1846
    %v1863 = vtanh.pop %v1847
    %v1864 = vtanh.pop %v1848
    %v1865 = vtanh.pop %v1849
    %v1866 = vtanh.pop %v1850
    %v1867 = vtanh.pop %v1851
    %v1868 = vtanh.pop %v1852
    %v1869 = vtanh.pop %v1853
    %v1870 = vtanh.pop %v1854
    %v1871 = vtanh.pop %v1855
    %v1872 = vadd.f32 %v1856, 1.0
    %v1873 = vadd.f32 %v1857, 1.0
    %v1874 = vadd.f32 %v1858, 1.0
    %v1875 = vadd.f32 %v1859, 1.0
    %v1876 = vadd.f32 %v1860, 1.0
    %v1877 = vadd.f32 %v1861, 1.0
    %v1878 = vadd.f32 %v1862, 1.0
    %v1879 = vadd.f32 %v1863, 1.0
    %v1880 = vadd.f32 %v1864, 1.0
    %v1881 = vadd.f32 %v1865, 1.0
    %v1882 = vadd.f32 %v1866, 1.0
    %v1883 = vadd.f32 %v1867, 1.0
    %v1884 = vadd.f32 %v1868, 1.0
    %v1885 = vadd.f32 %v1869, 1.0
    %v1886 = vadd.f32 %v1870, 1.0
    %v1887 = vadd.f32 %v1871, 1.0
    %v1888 = vmul.f32 %v1760, %v1872
    %v1889 = vmul.f32 %v1761, %v1873
    %v1890 = vmul.f32 %v1762, %v1874
    %v1891 = vmul.f32 %v1763, %v1875
    %v1892 = vmul.f32 %v1764, %v1876
    %v1893 = vmul.f32 %v1765, %v1877
    %v1894 = vmul.f32 %v1766, %v1878
    %v1895 = vmul.f32 %v1767, %v1879
    %v1896 = vmul.f32 %v1768, %v1880
    %v1897 = vmul.f32 %v1769, %v1881
    %v1898 = vmul.f32 %v1770, %v1882
    %v1899 = vmul.f32 %v1771, %v1883
    %v1900 = vmul.f32 %v1772, %v1884
    %v1901 = vmul.f32 %v1773, %v1885
    %v1902 = vmul.f32 %v1774, %v1886
    %v1903 = vmul.f32 %v1775, %v1887
    %v1904 = vld [vmem:[%s9] sm:$0xf]
    %v1905 = vld [vmem:[%s9 + $0x4] sm:$0xf]
    %v1906 = vld [vmem:[%s9 + $0x8] sm:$0xf]
    %v1907 = vld [vmem:[%s9 + $0xc] sm:$0xf]
    %v1908 = vpack.c.bf16 %v1892, %v1888
    %v1909 = vpack.c.bf16 %v1893, %v1889
    %v1910 = vpack.c.bf16 %v1894, %v1890
    %v1911 = vpack.c.bf16 %v1895, %v1891
    %v1912 = vpack.c.bf16 %v1900, %v1896
    %v1913 = vpack.c.bf16 %v1901, %v1897
    %v1914 = vpack.c.bf16 %v1902, %v1898
    %v1915 = vpack.c.bf16 %v1903, %v1899
    %v1916 = vld [vmem:[%s10] sm:$0xff]
    %v1917 = vld [vmem:[%s10 + $0x8] sm:$0xff]
    %v1918 = vld [vmem:[%s10 + $0x10] sm:$0xff]
    %v1919 = vld [vmem:[%s10 + $0x18] sm:$0xff]
    %1921 = vset.pattern.permute.xlu0 0
    %1922 = vperm.xlu0 %1921, %v1916
    %v1923 = vpop.permute.xlu0 %1922
    %1926 = vset.pattern.permute.xlu0 0
    %1927 = vperm.xlu0 %1926, %v1917
    %v1928 = vpop.permute.xlu0 %1927
    %1931 = vset.pattern.permute.xlu0 0
    %1932 = vperm.xlu0 %1931, %v1918
    %v1933 = vpop.permute.xlu0 %1932
    %1936 = vset.pattern.permute.xlu0 0
    %1937 = vperm.xlu0 %1936, %v1919
    %v1938 = vpop.permute.xlu0 %1937
    %v1944 = vunpack.c.l.b16 %v1904
    %v1945 = vunpack.c.l.b16 %v1905
    %v1946 = vunpack.c.l.b16 %v1906
    %v1947 = vunpack.c.l.b16 %v1907
    %v1948 = vpack.c.b16 %v1945, %v1944
    %v1949 = vpack.c.b16 %v1947, %v1946
    %v1951 = vsel %vm185, %v1948, 0
    %v1954 = vsel %vm185, %v1949, 0
    %1956 = vmatpush.bf16.msra.mxu0 0
    %1957 = vmatpush.bf16.msra.mxu0 0
    %1958 = vmatpush.bf16.msra.mxu0 0
    %1959 = vmatpush.bf16.msra.mxu0 0
    %1960 = vmatpush.bf16.msra.mxu0 0
    %1961 = vmatpush.bf16.msra.mxu0 0
    %1962 = vmatpush.bf16.msra.mxu0 %v1912
    %1963 = vmatpush.bf16.msra.mxu0 %v1908
    %1964 = vmatmul.bf16.gmra.mxu0 %v1951
    %v1965 = vpop.f32.mrf.mxu0
    %v1966 = vadd.f32 %v1923, %v1965
    %v1967 = vpop.f32.mrf.mxu0
    %v1968 = vadd.f32 %v1928, %v1967
    %1969 = vmatmul.bf16.gmra.mxu0 %v1954
    %v1970 = vpop.f32.mrf.mxu0
    %v1971 = vadd.f32 %v1933, %v1970
    %v1972 = vpop.f32.mrf.mxu0
    %v1973 = vadd.f32 %v1938, %v1972
    %1974 = vdwg.mxu0
    %1975 = vmatpush.bf16.msra.mxu0 0
    %1976 = vmatpush.bf16.msra.mxu0 0
    %1977 = vmatpush.bf16.msra.mxu0 0
    %1978 = vmatpush.bf16.msra.mxu0 0
    %1979 = vmatpush.bf16.msra.mxu0 0
    %1980 = vmatpush.bf16.msra.mxu0 0
    %1981 = vmatpush.bf16.msra.mxu0 %v1913
    %1982 = vmatpush.bf16.msra.mxu0 %v1909
    %1983 = vmatmul.bf16.gmra.mxu0 %v1951
    %v1984 = vpop.f32.mrf.mxu0
    %v1985 = vadd.f32 %v1923, %v1984
    %v1986 = vpop.f32.mrf.mxu0
    %v1987 = vadd.f32 %v1928, %v1986
    %1988 = vmatmul.bf16.gmra.mxu0 %v1954
    %v1989 = vpop.f32.mrf.mxu0
    %v1990 = vadd.f32 %v1933, %v1989
    %v1991 = vpop.f32.mrf.mxu0
    %v1992 = vadd.f32 %v1938, %v1991
    %1993 = vdwg.mxu0
    %1994 = vmatpush.bf16.msra.mxu0 0
    %1995 = vmatpush.bf16.msra.mxu0 0
    %1996 = vmatpush.bf16.msra.mxu0 0
    %1997 = vmatpush.bf16.msra.mxu0 0
    %1998 = vmatpush.bf16.msra.mxu0 0
    %1999 = vmatpush.bf16.msra.mxu0 0
    %2000 = vmatpush.bf16.msra.mxu0 %v1914
    %2001 = vmatpush.bf16.msra.mxu0 %v1910
    %2002 = vmatmul.bf16.gmra.mxu0 %v1951
    %v2003 = vpop.f32.mrf.mxu0
    %v2004 = vadd.f32 %v1923, %v2003
    %v2005 = vpop.f32.mrf.mxu0
    %v2006 = vadd.f32 %v1928, %v2005
    %2007 = vmatmul.bf16.gmra.mxu0 %v1954
    %v2008 = vpop.f32.mrf.mxu0
    %v2009 = vadd.f32 %v1933, %v2008
    %v2010 = vpop.f32.mrf.mxu0
    %v2011 = vadd.f32 %v1938, %v2010
    %2012 = vdwg.mxu0
    %2013 = vmatpush.bf16.msra.mxu0 0
    %2014 = vmatpush.bf16.msra.mxu0 0
    %2015 = vmatpush.bf16.msra.mxu0 0
    %2016 = vmatpush.bf16.msra.mxu0 0
    %2017 = vmatpush.bf16.msra.mxu0 0
    %2018 = vmatpush.bf16.msra.mxu0 0
    %2019 = vmatpush.bf16.msra.mxu0 %v1915
    %2020 = vmatpush.bf16.msra.mxu0 %v1911
    %2021 = vmatmul.bf16.gmra.mxu0 %v1951
    %v2022 = vpop.f32.mrf.mxu0
    %v2023 = vadd.f32 %v1923, %v2022
    %v2024 = vpop.f32.mrf.mxu0
    %v2025 = vadd.f32 %v1928, %v2024
    %2026 = vmatmul.bf16.gmra.mxu0 %v1954
    %v2027 = vpop.f32.mrf.mxu0
    %v2028 = vadd.f32 %v1933, %v2027
    %v2029 = vpop.f32.mrf.mxu0
    %v2030 = vadd.f32 %v1938, %v2029
    %2031 = vdwg.mxu0
    %v2032 = vadd.f32 %v1966, %v46
    %v2033 = vadd.f32 %v1985, %v47
    %v2034 = vadd.f32 %v2004, %v55
    %v2035 = vadd.f32 %v2023, %v56
    %v2036 = vadd.f32 %v1968, %v48
    %v2037 = vadd.f32 %v1987, %v49
    %v2038 = vadd.f32 %v2006, %v57
    %v2039 = vadd.f32 %v2025, %v58
    %v2040 = vadd.f32 %v1971, %v50
    %v2041 = vadd.f32 %v1990, %v51
    %v2042 = vadd.f32 %v2009, %v59
    %v2043 = vadd.f32 %v2028, %v60
    %v2044 = vadd.f32 %v1973, %v52
    %v2045 = vadd.f32 %v1992, %v53
    %v2046 = vadd.f32 %v2011, %v61
    %v2047 = vadd.f32 %v2030, %v62
    %2048 = vst [vmem:[#allocation2] sm:$0xff] %v2032
    %2049 = vst [vmem:[#allocation2 + $0x8] sm:$0xff] %v2033
    %2050 = vst [vmem:[#allocation2 + $0x10] sm:$0xff] %v2036
    %2051 = vst [vmem:[#allocation2 + $0x18] sm:$0xff] %v2037
    %2052 = vst [vmem:[#allocation2 + $0x20] sm:$0xff] %v2040
    %2053 = vst [vmem:[#allocation2 + $0x28] sm:$0xff] %v2041
    %2054 = vst [vmem:[#allocation2 + $0x30] sm:$0xff] %v2044
    %2055 = vst [vmem:[#allocation2 + $0x38] sm:$0xff] %v2045
    %s2056 = scalar_lea.vmem [#allocation2], 64
    %2057 = vst [vmem:[%s2056] sm:$0xff] %v2034
    %2058 = vst [vmem:[%s2056 + $0x8] sm:$0xff] %v2035
    %2059 = vst [vmem:[%s2056 + $0x10] sm:$0xff] %v2038
    %2060 = vst [vmem:[%s2056 + $0x18] sm:$0xff] %v2039
    %2061 = vst [vmem:[%s2056 + $0x20] sm:$0xff] %v2042
    %2062 = vst [vmem:[%s2056 + $0x28] sm:$0xff] %v2043
    %2063 = vst [vmem:[%s2056 + $0x30] sm:$0xff] %v2046
    %2064 = vst [vmem:[%s2056 + $0x38] sm:$0xff] %v2047
    // Predicated region
    $region54: #{tpu_custom_call.1} parent=1 // pred_check
      _
    $region55: #{tpu_custom_call.1} parent=1 // pred_check_branch
      %2066 = sbr.rel (0) target = $region57
    $region56: #{tpu_custom_call.1} parent=1 // pred_region
      %2068 = vsyncadd [#allocation3], 0
      %s2069 = sshll.u32 [#allocation2], 4
      %s2070 = int_to_ptr.vmem [resolvable:$true] %s2069
      %s2071 = sshll.u32 %s13, 4
      %s2072 = int_to_ptr.hbm [resolvable:$true] %s2071
      %2077 = dma.vmem_to_hbm [thread:$0]  %s2070, 2048, %s2072, [#allocation3], 256, 256, 16
    $region57: #{tpu_custom_call.1} parent=1 // pred_fallthru
      _
    // Predicated region
    $region58: #{tpu_custom_call.1} parent=1 // pred_check
      _
    $region59: #{tpu_custom_call.1} parent=1 // pred_check_branch
      %2079 = sbr.rel (0) target = $region61
    $region60: #{tpu_custom_call.1} parent=1 // pred_region
      %2081 = dma.done [#allocation3], 2048
    $region61: #{tpu_custom_call.1} parent=1 // pred_fallthru
      _
    %2082 = vsyncpa [#allocation3], 1

</llo_original>
